<compile_context>
chip_gen: v7x
topology: tpu7x:2x2x1
jax: 0.10.0
libtpu: 0.0.40
codegen_flags: <defaults>
</compile_context>

<pallas_src>
import functools
import math

import jax
import jax.numpy as jnp
from jax.experimental import pallas as pl
from jax.experimental.pallas import tpu as pltpu

# ---- model hyper-parameters (small, consistent with the module's args) ----
OBS_SIZE = 50
VOCAB_PAD = 128        # embedding table padded to a full 128-lane contraction
D_MODEL = 128
NHEAD = 4
HEAD_DIM = D_MODEL // NHEAD
DIM_FF = 128           # packing scheme below assumes DIM_FF == D_MODEL
NUM_LAYERS = 2
D_OUT = 8
OUT_PAD = 128          # lane-dense padded output width
SEQ = 8
BATCH = 2
LN_EPS = 1e-5


def _layer_norm(x, w, b, eps):
    # f32 VPU math throughout (keep LN in f32 even with bf16 matmul weights).
    inv_d = 1.0 / x.shape[-1]
    mu = jnp.sum(x, axis=-1, keepdims=True) * inv_d
    xc = x - mu
    var = jnp.sum(xc * xc, axis=-1, keepdims=True) * inv_d
    return xc * jax.lax.rsqrt(var + eps) * w + b


# ---------------------------------------------------------------------------
# Single fused kernel: embedding -> 2 encoder layers -> norm/pool/head -> tanh
# Everything (weights + activations) lives in VMEM; grid is a single program.
# ---------------------------------------------------------------------------
def fused_transformer_kernel(tok_ref, wmat_ref, wio_ref, bvec_ref, fvec_ref,
                             o_ref, *, batch, seq, nhead, head_dim, num_layers,
                             dim_ff, vocab_pad, out_pad, eps):
    f32, bf16 = jnp.float32, jnp.bfloat16
    d = nhead * head_dim
    bs = batch * seq

    # --- embedding lookup: unmasked 128-wide one-hot @ padded table (MXU) ---
    ids = tok_ref[...]                                          # (bs, 1) int32
    onehot = (ids == jax.lax.broadcasted_iota(jnp.int32, (bs, vocab_pad), 1))
    onehot = onehot.astype(f32).astype(bf16)                    # (bs, 128) bf16
    x = jnp.dot(onehot, wio_ref[0], preferred_element_type=f32)  # (bs, d) f32

    # --- per-head full-lane float masks (built once, reused by both layers) ---
    lane = jax.lax.broadcasted_iota(jnp.int32, (1, 1, d), 2)
    head_masks = [((lane >= h * head_dim) & (lane < (h + 1) * head_dim)).astype(f32)
                  for h in range(nhead)]

    for l in range(num_layers):                                 # static layer loop
        # static, 128-lane-aligned slices out of the packed parameter slabs
        wqkv = wmat_ref[l, :, 0:3 * d]                          # (d, 3d) bf16 (q cols pre-scaled)
        wo = wmat_ref[l, :, 3 * d:4 * d]                        # (d, d)  bf16
        w1 = wmat_ref[l, :, 4 * d:4 * d + dim_ff]               # (d, ff) bf16
        w2 = wmat_ref[l, :, 4 * d + dim_ff:4 * d + 2 * dim_ff]  # (ff, d) bf16 (ff == d)
        bqkv = bvec_ref[l, :, 0:3 * d]                          # (1, 3d) f32
        bo = bvec_ref[l, :, 3 * d:4 * d]
        b1 = bvec_ref[l, :, 4 * d:4 * d + dim_ff]
        b2 = bvec_ref[l, :, 4 * d + dim_ff:4 * d + dim_ff + d]
        off = 4 * d + dim_ff + d
        ln1w = bvec_ref[l, :, off:off + d]
        ln1b = bvec_ref[l, :, off + d:off + 2 * d]
        ln2w = bvec_ref[l, :, off + 2 * d:off + 3 * d]
        ln2b = bvec_ref[l, :, off + 3 * d:off + 4 * d]

        # --- self attention (nn.MultiheadAttention, need_weights=False) ---
        qkv = jnp.dot(x.astype(bf16), wqkv, preferred_element_type=f32) + bqkv
        qkv3 = qkv.reshape(batch, seq, 3 * d)                   # (B, S, 3D)
        q3 = qkv3[:, :, 0:d]        # already scaled by 1/sqrt(head_dim) (folded into wqkv/bqkv)
        k3 = qkv3[:, :, d:2 * d]
        v3 = qkv3[:, :, 2 * d:3 * d]

        ctx = jnp.zeros((batch, seq, d), f32)
        for h in range(nhead):                                  # static head loop, no lane slicing
            m = head_masks[h]
            # qh masked -> contraction over full D equals the per-head score.
            s = jnp.einsum('bqd,bkd->bqk', q3 * m, k3,
                           preferred_element_type=f32)          # (B, S, S)
            s = s - jnp.max(s, axis=-1, keepdims=True)
            p = jnp.exp(s)
            p = p / jnp.sum(p, axis=-1, keepdims=True)          # exact softmax
            # v masked -> head-h context lands only in head-h lanes; sum is the concat.
            ctx = ctx + jnp.einsum('bqk,bkd->bqd', p, v3 * m,
                                   preferred_element_type=f32)  # (B, S, D)
        attn = ctx.reshape(bs, d)                               # (BS, D)
        sa = jnp.dot(attn.astype(bf16), wo, preferred_element_type=f32) + bo

        # --- post-norm residual blocks (f32) ---
        y = _layer_norm(x + sa, ln1w, ln1b, eps)
        hdn = jnp.maximum(
            jnp.dot(y.astype(bf16), w1, preferred_element_type=f32) + b1, 0.0)
        ffo = jnp.dot(hdn.astype(bf16), w2, preferred_element_type=f32) + b2
        x = _layer_norm(y + ffo, ln2w, ln2b, eps)

    # --- final encoder norm -> mean pool over seq -> mlp head -> tanh ---
    encw = fvec_ref[:, 0:d]
    encb = fvec_ref[:, d:2 * d]
    hlnw = fvec_ref[:, 2 * d:3 * d]
    hlnb = fvec_ref[:, 3 * d:4 * d]
    bhead = fvec_ref[:, 4 * d:4 * d + out_pad]

    x = _layer_norm(x, encw, encb, eps)                         # (BS, D)
    pooled = jnp.sum(x.reshape(batch, seq, d), axis=1) * (1.0 / seq)   # (B, D)
    hfeat = _layer_norm(pooled, hlnw, hlnb, eps)
    out = jnp.dot(hfeat.astype(bf16), wio_ref[1], preferred_element_type=f32) + bhead
    o_ref[...] = jnp.tanh(out)                                  # lane-dense (B, 128)


def transformer_syn_forward(tokens, params):
    B, S = tokens.shape
    tok2d = tokens.reshape(B * S, 1).astype(jnp.int32)
    args = (tok2d, params["wmat"], params["wio"], params["bvec"], params["fvec"])

    def full_spec(a):
        return pl.BlockSpec(a.shape, lambda i, n=a.ndim: (0,) * n)

    kernel = functools.partial(
        fused_transformer_kernel,
        batch=B, seq=S, nhead=NHEAD, head_dim=HEAD_DIM, num_layers=NUM_LAYERS,
        dim_ff=DIM_FF, vocab_pad=VOCAB_PAD, out_pad=OUT_PAD, eps=LN_EPS)

    out_pad = pl.pallas_call(
        kernel,
        out_shape=jax.ShapeDtypeStruct((B, OUT_PAD), jnp.float32),
        grid_spec=pltpu.PrefetchScalarGridSpec(
            num_scalar_prefetch=0,
            grid=(1,),
            in_specs=[full_spec(a) for a in args],
            out_specs=pl.BlockSpec((B, OUT_PAD), lambda i: (0, 0)),
        ),
        compiler_params=pltpu.CompilerParams(
            dimension_semantics=("arbitrary",),
            vmem_limit_bytes=16 * 1024 * 1024),
    )(*args)
    return out_pad[:, :D_OUT]


# ---------------------------------------------------------------------------
# Parameter init (deterministic, xavier-uniform for >1-dim weights like
# TransformerEncoderModel._reset_parameters; N(0,1) embedding like nn.Embedding).
# Parameters are packed into slabs:
#   wmat : (L, D, 3D + D + FF + D)  bf16   per-layer MXU weights (q cols pre-scaled)
#   wio  : (2, 128, 128)            bf16   [0]=padded embedding table, [1]=padded head weight
#   bvec : (L, 1, 1280)             f32    [bqkv | bo | b1 | b2 | ln1w | ln1b | ln2w | ln2b]
#   fvec : (1, 640)                 f32    [enc_nw | enc_nb | head_lnw | head_lnb | head_bias]
# ---------------------------------------------------------------------------
def init_params(key):
    assert DIM_FF == D_MODEL and VOCAB_PAD == D_MODEL and OUT_PAD == D_MODEL, \
        "packing scheme assumes square 128-wide slabs"
    keys = iter(jax.random.split(key, 16))

    def xavier(shape):  # shape in PyTorch (out, in) convention
        fan_out, fan_in = shape
        a = math.sqrt(6.0 / (fan_in + fan_out))
        return jax.random.uniform(next(keys), shape, jnp.float32, -a, a)

    scale = 1.0 / math.sqrt(HEAD_DIM)

    wmat_layers, bvec_layers = [], []
    for _ in range(NUM_LAYERS):
        wqkv = xavier((3 * D_MODEL, D_MODEL)).T            # self_attn.in_proj_weight -> (D, 3D)
        wqkv = wqkv.at[:, :D_MODEL].multiply(scale)        # fold 1/sqrt(hd) into Q columns
        wo = xavier((D_MODEL, D_MODEL)).T                  # self_attn.out_proj.weight -> (D, D)
        w1 = xavier((DIM_FF, D_MODEL)).T                   # linear1.weight -> (D, FF)
        w2 = xavier((D_MODEL, DIM_FF)).T                   # linear2.weight -> (FF, D)
        wmat_layers.append(jnp.concatenate([wqkv, wo, w1, w2], axis=1))

        bqkv = jnp.zeros((3 * D_MODEL,), jnp.float32).at[:D_MODEL].multiply(scale)
        bvec_layers.append(jnp.concatenate([
            bqkv,
            jnp.zeros((D_MODEL,), jnp.float32),            # out_proj bias
            jnp.zeros((DIM_FF,), jnp.float32),             # linear1 bias
            jnp.zeros((D_MODEL,), jnp.float32),            # linear2 bias
            jnp.ones((D_MODEL,), jnp.float32),             # norm1 weight
            jnp.zeros((D_MODEL,), jnp.float32),            # norm1 bias
            jnp.ones((D_MODEL,), jnp.float32),             # norm2 weight
            jnp.zeros((D_MODEL,), jnp.float32),            # norm2 bias
        ]).reshape(1, -1))

    wmat = jnp.stack(wmat_layers).astype(jnp.bfloat16)     # (L, D, 768) bf16
    bvec = jnp.stack(bvec_layers).astype(jnp.float32)      # (L, 1, 1280) f32

    emb = jax.random.normal(next(keys), (OBS_SIZE, D_MODEL), jnp.float32)   # nn.Embedding N(0,1)
    emb_pad = jnp.zeros((VOCAB_PAD, D_MODEL), jnp.float32).at[:OBS_SIZE].set(emb)
    whead = xavier((D_OUT, D_MODEL)).T                                       # (D, D_OUT)
    whead_pad = jnp.zeros((D_MODEL, OUT_PAD), jnp.float32).at[:, :D_OUT].set(whead)
    wio = jnp.stack([emb_pad, whead_pad]).astype(jnp.bfloat16)               # (2, 128, 128) bf16

    fvec = jnp.concatenate([
        jnp.ones((D_MODEL,), jnp.float32), jnp.zeros((D_MODEL,), jnp.float32),   # encoder final LN
        jnp.ones((D_MODEL,), jnp.float32), jnp.zeros((D_MODEL,), jnp.float32),   # mlp_head LN
        jnp.zeros((OUT_PAD,), jnp.float32),                                      # head bias (padded)
    ]).reshape(1, -1)                                                            # (1, 640) f32

    return {"wmat": wmat, "wio": wio, "bvec": bvec, "fvec": fvec}


if __name__ == "__main__":
    key = jax.random.PRNGKey(0)
    params = init_params(key)
    tokens = jax.random.randint(jax.random.fold_in(key, 123),
                                (BATCH, SEQ), 0, OBS_SIZE, dtype=jnp.int32)
    out = jax.jit(transformer_syn_forward)(tokens, params)
    out = jax.block_until_ready(out)
    assert out.shape == (BATCH, D_OUT)
    assert bool(jnp.all(jnp.isfinite(out)))
    print("KERNEL_OK")
</pallas_src>

<mosaic_0001>
module attributes {stable_mosaic.version = 11 : i64} {
  func.func @fused_transformer_kernel(%arg0: i32, %arg1: memref<16x1xi32, #tpu.memory_space<vmem>>, %arg2: memref<2x128x768xbf16, #tpu.memory_space<vmem>>, %arg3: memref<2x128x128xbf16, #tpu.memory_space<vmem>>, %arg4: memref<2x1x1280xf32, #tpu.memory_space<vmem>>, %arg5: memref<1x640xf32, #tpu.memory_space<vmem>>, %arg6: memref<2x128xf32, #tpu.memory_space<vmem>>) attributes {dimension_semantics = [#tpu.dimension_semantics<arbitrary>], iteration_bounds = array<i64: 1>, scalar_prefetch = 0 : i64, scratch_operands = 0 : i64, tpu.core_type = #tpu.core_type<tc>, window_params = [{pipeline_mode = #tpu.pipeline_mode<synchronous>, transform_indices = @transform_0, window_bounds = array<i64: 16, 1>}, {pipeline_mode = #tpu.pipeline_mode<synchronous>, transform_indices = @transform_1, window_bounds = array<i64: 2, 128, 768>}, {pipeline_mode = #tpu.pipeline_mode<synchronous>, transform_indices = @transform_2, window_bounds = array<i64: 2, 128, 128>}, {pipeline_mode = #tpu.pipeline_mode<synchronous>, transform_indices = @transform_3, window_bounds = array<i64: 2, 1, 1280>}, {pipeline_mode = #tpu.pipeline_mode<synchronous>, transform_indices = @transform_4, window_bounds = array<i64: 1, 640>}, {pipeline_mode = #tpu.pipeline_mode<synchronous>, transform_indices = @transform_5, window_bounds = array<i64: 2, 128>}]} {
    %c0 = arith.constant 0 : index
    %c0_0 = arith.constant 0 : index
    %0 = vector.load %arg1[%c0, %c0_0] : memref<16x1xi32, #tpu.memory_space<vmem>>, vector<16x1xi32>
    %1 = tpu.iota {dimensions = array<i32: 1>} : vector<16x128xi32>
    %2 = vector.broadcast %0 : vector<16x1xi32> to vector<16x128xi32>
    %3 = arith.cmpi eq, %2, %1 : vector<16x128xi32>
    %4 = arith.extui %3 : vector<16x128xi1> to vector<16x128xi32>
    %5 = arith.sitofp %4 : vector<16x128xi32> to vector<16x128xf32>
    %6 = arith.truncf %5 : vector<16x128xf32> to vector<16x128xbf16>
    %c0_1 = arith.constant 0 : index
    %c0_2 = arith.constant 0 : index
    %c0_3 = arith.constant 0 : index
    %7 = vector.load %arg3[%c0_1, %c0_2, %c0_3] : memref<2x128x128xbf16, #tpu.memory_space<vmem>>, vector<1x128x128xbf16>
    %8 = vector.shape_cast %7 : vector<1x128x128xbf16> to vector<128x128xbf16>
    %cst = arith.constant dense<0.000000e+00> : vector<16x128xf32>
    %9 = tpu.matmul %6, %8, %cst {dimension_numbers = #tpu.dot_dimension_numbers<[1], [0], [0], [1], [0, 0, 1, 1], [], []>} : vector<16x128xbf16>, vector<128x128xbf16>, vector<16x128xf32> -> vector<16x128xf32>
    %10 = tpu.iota {dimensions = array<i32: 2>} : vector<1x1x128xi32>
    %c0_i32 = arith.constant 0 : i32
    %11 = vector.broadcast %c0_i32 : i32 to vector<1x1x128xi32>
    %12 = arith.cmpi sge, %10, %11 : vector<1x1x128xi32>
    %c32_i32 = arith.constant 32 : i32
    %13 = vector.broadcast %c32_i32 : i32 to vector<1x1x128xi32>
    %14 = arith.cmpi slt, %10, %13 : vector<1x1x128xi32>
    %15 = arith.andi %12, %14 : vector<1x1x128xi1>
    %16 = arith.extui %15 : vector<1x1x128xi1> to vector<1x1x128xi32>
    %17 = arith.sitofp %16 : vector<1x1x128xi32> to vector<1x1x128xf32>
    %c32_i32_4 = arith.constant 32 : i32
    %18 = vector.broadcast %c32_i32_4 : i32 to vector<1x1x128xi32>
    %19 = arith.cmpi sge, %10, %18 : vector<1x1x128xi32>
    %c64_i32 = arith.constant 64 : i32
    %20 = vector.broadcast %c64_i32 : i32 to vector<1x1x128xi32>
    %21 = arith.cmpi slt, %10, %20 : vector<1x1x128xi32>
    %22 = arith.andi %19, %21 : vector<1x1x128xi1>
    %23 = arith.extui %22 : vector<1x1x128xi1> to vector<1x1x128xi32>
    %24 = arith.sitofp %23 : vector<1x1x128xi32> to vector<1x1x128xf32>
    %c64_i32_5 = arith.constant 64 : i32
    %25 = vector.broadcast %c64_i32_5 : i32 to vector<1x1x128xi32>
    %26 = arith.cmpi sge, %10, %25 : vector<1x1x128xi32>
    %c96_i32 = arith.constant 96 : i32
    %27 = vector.broadcast %c96_i32 : i32 to vector<1x1x128xi32>
    %28 = arith.cmpi slt, %10, %27 : vector<1x1x128xi32>
    %29 = arith.andi %26, %28 : vector<1x1x128xi1>
    %30 = arith.extui %29 : vector<1x1x128xi1> to vector<1x1x128xi32>
    %31 = arith.sitofp %30 : vector<1x1x128xi32> to vector<1x1x128xf32>
    %c96_i32_6 = arith.constant 96 : i32
    %32 = vector.broadcast %c96_i32_6 : i32 to vector<1x1x128xi32>
    %33 = arith.cmpi sge, %10, %32 : vector<1x1x128xi32>
    %c128_i32 = arith.constant 128 : i32
    %34 = vector.broadcast %c128_i32 : i32 to vector<1x1x128xi32>
    %35 = arith.cmpi slt, %10, %34 : vector<1x1x128xi32>
    %36 = arith.andi %33, %35 : vector<1x1x128xi1>
    %37 = arith.extui %36 : vector<1x1x128xi1> to vector<1x1x128xi32>
    %38 = arith.sitofp %37 : vector<1x1x128xi32> to vector<1x1x128xf32>
    %c0_7 = arith.constant 0 : index
    %c0_8 = arith.constant 0 : index
    %c0_9 = arith.constant 0 : index
    %39 = vector.load %arg2[%c0_7, %c0_8, %c0_9] : memref<2x128x768xbf16, #tpu.memory_space<vmem>>, vector<1x128x384xbf16>
    %40 = vector.shape_cast %39 : vector<1x128x384xbf16> to vector<128x384xbf16>
    %c0_10 = arith.constant 0 : index
    %c0_11 = arith.constant 0 : index
    %c384 = arith.constant 384 : index
    %41 = vector.load %arg2[%c0_10, %c0_11, %c384] : memref<2x128x768xbf16, #tpu.memory_space<vmem>>, vector<1x128x128xbf16>
    %42 = vector.shape_cast %41 : vector<1x128x128xbf16> to vector<128x128xbf16>
    %c0_12 = arith.constant 0 : index
    %c0_13 = arith.constant 0 : index
    %c512 = arith.constant 512 : index
    %43 = vector.load %arg2[%c0_12, %c0_13, %c512] : memref<2x128x768xbf16, #tpu.memory_space<vmem>>, vector<1x128x128xbf16>
    %44 = vector.shape_cast %43 : vector<1x128x128xbf16> to vector<128x128xbf16>
    %c0_14 = arith.constant 0 : index
    %c0_15 = arith.constant 0 : index
    %c640 = arith.constant 640 : index
    %45 = vector.load %arg2[%c0_14, %c0_15, %c640] : memref<2x128x768xbf16, #tpu.memory_space<vmem>>, vector<1x128x128xbf16>
    %46 = vector.shape_cast %45 : vector<1x128x128xbf16> to vector<128x128xbf16>
    %c0_16 = arith.constant 0 : index
    %c0_17 = arith.constant 0 : index
    %c0_18 = arith.constant 0 : index
    %47 = vector.load %arg4[%c0_16, %c0_17, %c0_18] : memref<2x1x1280xf32, #tpu.memory_space<vmem>>, vector<1x1x384xf32>
    %48 = vector.shape_cast %47 : vector<1x1x384xf32> to vector<1x384xf32>
    %c0_19 = arith.constant 0 : index
    %c0_20 = arith.constant 0 : index
    %c384_21 = arith.constant 384 : index
    %49 = vector.load %arg4[%c0_19, %c0_20, %c384_21] : memref<2x1x1280xf32, #tpu.memory_space<vmem>>, vector<1x1x128xf32>
    %50 = vector.shape_cast %49 : vector<1x1x128xf32> to vector<1x128xf32>
    %c0_22 = arith.constant 0 : index
    %c0_23 = arith.constant 0 : index
    %c512_24 = arith.constant 512 : index
    %51 = vector.load %arg4[%c0_22, %c0_23, %c512_24] : memref<2x1x1280xf32, #tpu.memory_space<vmem>>, vector<1x1x128xf32>
    %52 = vector.shape_cast %51 : vector<1x1x128xf32> to vector<1x128xf32>
    %c0_25 = arith.constant 0 : index
    %c0_26 = arith.constant 0 : index
    %c640_27 = arith.constant 640 : index
    %53 = vector.load %arg4[%c0_25, %c0_26, %c640_27] : memref<2x1x1280xf32, #tpu.memory_space<vmem>>, vector<1x1x128xf32>
    %54 = vector.shape_cast %53 : vector<1x1x128xf32> to vector<1x128xf32>
    %c0_28 = arith.constant 0 : index
    %c0_29 = arith.constant 0 : index
    %c768 = arith.constant 768 : index
    %55 = vector.load %arg4[%c0_28, %c0_29, %c768] : memref<2x1x1280xf32, #tpu.memory_space<vmem>>, vector<1x1x128xf32>
    %56 = vector.shape_cast %55 : vector<1x1x128xf32> to vector<1x128xf32>
    %c0_30 = arith.constant 0 : index
    %c0_31 = arith.constant 0 : index
    %c896 = arith.constant 896 : index
    %57 = vector.load %arg4[%c0_30, %c0_31, %c896] : memref<2x1x1280xf32, #tpu.memory_space<vmem>>, vector<1x1x128xf32>
    %58 = vector.shape_cast %57 : vector<1x1x128xf32> to vector<1x128xf32>
    %c0_32 = arith.constant 0 : index
    %c0_33 = arith.constant 0 : index
    %c1024 = arith.constant 1024 : index
    %59 = vector.load %arg4[%c0_32, %c0_33, %c1024] : memref<2x1x1280xf32, #tpu.memory_space<vmem>>, vector<1x1x128xf32>
    %60 = vector.shape_cast %59 : vector<1x1x128xf32> to vector<1x128xf32>
    %c0_34 = arith.constant 0 : index
    %c0_35 = arith.constant 0 : index
    %c1152 = arith.constant 1152 : index
    %61 = vector.load %arg4[%c0_34, %c0_35, %c1152] : memref<2x1x1280xf32, #tpu.memory_space<vmem>>, vector<1x1x128xf32>
    %62 = vector.shape_cast %61 : vector<1x1x128xf32> to vector<1x128xf32>
    %63 = arith.truncf %9 : vector<16x128xf32> to vector<16x128xbf16>
    %cst_36 = arith.constant dense<0.000000e+00> : vector<16x384xf32>
    %64 = tpu.matmul %63, %40, %cst_36 {dimension_numbers = #tpu.dot_dimension_numbers<[1], [0], [0], [1], [0, 0, 1, 1], [], []>} : vector<16x128xbf16>, vector<128x384xbf16>, vector<16x384xf32> -> vector<16x384xf32>
    %65 = vector.broadcast %48 : vector<1x384xf32> to vector<16x384xf32>
    %66 = arith.addf %64, %65 : vector<16x384xf32>
    %67 = vector.shape_cast %66 : vector<16x384xf32> to vector<2x8x384xf32>
    %68 = vector.extract_strided_slice %67 {offsets = [0, 0, 0], sizes = [2, 8, 128], strides = [1, 1, 1]} : vector<2x8x384xf32> to vector<2x8x128xf32>
    %69 = vector.extract_strided_slice %67 {offsets = [0, 0, 128], sizes = [2, 8, 128], strides = [1, 1, 1]} : vector<2x8x384xf32> to vector<2x8x128xf32>
    %70 = vector.extract_strided_slice %67 {offsets = [0, 0, 256], sizes = [2, 8, 128], strides = [1, 1, 1]} : vector<2x8x384xf32> to vector<2x8x128xf32>
    %cst_37 = arith.constant 0.000000e+00 : f32
    %71 = vector.broadcast %cst_37 : f32 to vector<2x8x128xf32>
    %72 = vector.broadcast %17 : vector<1x1x128xf32> to vector<2x8x128xf32>
    %73 = arith.mulf %68, %72 : vector<2x8x128xf32>
    "tpu.trace_start"() <{level = 10 : i32, message = "bqd,bkd->bqk"}> : () -> ()
    %cst_38 = arith.constant dense<0.000000e+00> : vector<2x8x8xf32>
    %74 = tpu.matmul %73, %69, %cst_38 {dimension_numbers = #tpu.dot_dimension_numbers<[2], [2], [1], [1], [0, 0, 0, 1, 1, 1], [0], [0]>} : vector<2x8x128xf32>, vector<2x8x128xf32>, vector<2x8x8xf32> -> vector<2x8x8xf32>
    "tpu.trace_stop"() : () -> ()
    %cst_39 = arith.constant dense<0xFF800000> : vector<2x8xf32>
    %75 = vector.multi_reduction <maximumf>, %74, %cst_39 [2] : vector<2x8x8xf32> to vector<2x8xf32>
    %76 = vector.shape_cast %75 : vector<2x8xf32> to vector<2x8x1xf32>
    %77 = vector.broadcast %76 : vector<2x8x1xf32> to vector<2x8x8xf32>
    %78 = arith.subf %74, %77 : vector<2x8x8xf32>
    %79 = math.exp %78 : vector<2x8x8xf32>
    %cst_40 = arith.constant dense<0.000000e+00> : vector<2x8xf32>
    %80 = vector.multi_reduction <add>, %79, %cst_40 [2] : vector<2x8x8xf32> to vector<2x8xf32>
    %81 = vector.shape_cast %80 : vector<2x8xf32> to vector<2x8x1xf32>
    %82 = vector.broadcast %81 : vector<2x8x1xf32> to vector<2x8x8xf32>
    %83 = arith.divf %79, %82 : vector<2x8x8xf32>
    %84 = vector.broadcast %17 : vector<1x1x128xf32> to vector<2x8x128xf32>
    %85 = arith.mulf %70, %84 : vector<2x8x128xf32>
    "tpu.trace_start"() <{level = 10 : i32, message = "bqk,bkd->bqd"}> : () -> ()
    %cst_41 = arith.constant dense<0.000000e+00> : vector<2x8x128xf32>
    %86 = tpu.matmul %83, %85, %cst_41 {dimension_numbers = #tpu.dot_dimension_numbers<[2], [1], [1], [2], [0, 0, 0, 1, 1, 2], [0], [0]>} : vector<2x8x8xf32>, vector<2x8x128xf32>, vector<2x8x128xf32> -> vector<2x8x128xf32>
    "tpu.trace_stop"() : () -> ()
    %87 = arith.addf %71, %86 : vector<2x8x128xf32>
    %88 = vector.broadcast %24 : vector<1x1x128xf32> to vector<2x8x128xf32>
    %89 = arith.mulf %68, %88 : vector<2x8x128xf32>
    "tpu.trace_start"() <{level = 10 : i32, message = "bqd,bkd->bqk"}> : () -> ()
    %cst_42 = arith.constant dense<0.000000e+00> : vector<2x8x8xf32>
    %90 = tpu.matmul %89, %69, %cst_42 {dimension_numbers = #tpu.dot_dimension_numbers<[2], [2], [1], [1], [0, 0, 0, 1, 1, 1], [0], [0]>} : vector<2x8x128xf32>, vector<2x8x128xf32>, vector<2x8x8xf32> -> vector<2x8x8xf32>
    "tpu.trace_stop"() : () -> ()
    %cst_43 = arith.constant dense<0xFF800000> : vector<2x8xf32>
    %91 = vector.multi_reduction <maximumf>, %90, %cst_43 [2] : vector<2x8x8xf32> to vector<2x8xf32>
    %92 = vector.shape_cast %91 : vector<2x8xf32> to vector<2x8x1xf32>
    %93 = vector.broadcast %92 : vector<2x8x1xf32> to vector<2x8x8xf32>
    %94 = arith.subf %90, %93 : vector<2x8x8xf32>
    %95 = math.exp %94 : vector<2x8x8xf32>
    %cst_44 = arith.constant dense<0.000000e+00> : vector<2x8xf32>
    %96 = vector.multi_reduction <add>, %95, %cst_44 [2] : vector<2x8x8xf32> to vector<2x8xf32>
    %97 = vector.shape_cast %96 : vector<2x8xf32> to vector<2x8x1xf32>
    %98 = vector.broadcast %97 : vector<2x8x1xf32> to vector<2x8x8xf32>
    %99 = arith.divf %95, %98 : vector<2x8x8xf32>
    %100 = vector.broadcast %24 : vector<1x1x128xf32> to vector<2x8x128xf32>
    %101 = arith.mulf %70, %100 : vector<2x8x128xf32>
    "tpu.trace_start"() <{level = 10 : i32, message = "bqk,bkd->bqd"}> : () -> ()
    %cst_45 = arith.constant dense<0.000000e+00> : vector<2x8x128xf32>
    %102 = tpu.matmul %99, %101, %cst_45 {dimension_numbers = #tpu.dot_dimension_numbers<[2], [1], [1], [2], [0, 0, 0, 1, 1, 2], [0], [0]>} : vector<2x8x8xf32>, vector<2x8x128xf32>, vector<2x8x128xf32> -> vector<2x8x128xf32>
    "tpu.trace_stop"() : () -> ()
    %103 = arith.addf %87, %102 : vector<2x8x128xf32>
    %104 = vector.broadcast %31 : vector<1x1x128xf32> to vector<2x8x128xf32>
    %105 = arith.mulf %68, %104 : vector<2x8x128xf32>
    "tpu.trace_start"() <{level = 10 : i32, message = "bqd,bkd->bqk"}> : () -> ()
    %cst_46 = arith.constant dense<0.000000e+00> : vector<2x8x8xf32>
    %106 = tpu.matmul %105, %69, %cst_46 {dimension_numbers = #tpu.dot_dimension_numbers<[2], [2], [1], [1], [0, 0, 0, 1, 1, 1], [0], [0]>} : vector<2x8x128xf32>, vector<2x8x128xf32>, vector<2x8x8xf32> -> vector<2x8x8xf32>
    "tpu.trace_stop"() : () -> ()
    %cst_47 = arith.constant dense<0xFF800000> : vector<2x8xf32>
    %107 = vector.multi_reduction <maximumf>, %106, %cst_47 [2] : vector<2x8x8xf32> to vector<2x8xf32>
    %108 = vector.shape_cast %107 : vector<2x8xf32> to vector<2x8x1xf32>
    %109 = vector.broadcast %108 : vector<2x8x1xf32> to vector<2x8x8xf32>
    %110 = arith.subf %106, %109 : vector<2x8x8xf32>
    %111 = math.exp %110 : vector<2x8x8xf32>
    %cst_48 = arith.constant dense<0.000000e+00> : vector<2x8xf32>
    %112 = vector.multi_reduction <add>, %111, %cst_48 [2] : vector<2x8x8xf32> to vector<2x8xf32>
    %113 = vector.shape_cast %112 : vector<2x8xf32> to vector<2x8x1xf32>
    %114 = vector.broadcast %113 : vector<2x8x1xf32> to vector<2x8x8xf32>
    %115 = arith.divf %111, %114 : vector<2x8x8xf32>
    %116 = vector.broadcast %31 : vector<1x1x128xf32> to vector<2x8x128xf32>
    %117 = arith.mulf %70, %116 : vector<2x8x128xf32>
    "tpu.trace_start"() <{level = 10 : i32, message = "bqk,bkd->bqd"}> : () -> ()
    %cst_49 = arith.constant dense<0.000000e+00> : vector<2x8x128xf32>
    %118 = tpu.matmul %115, %117, %cst_49 {dimension_numbers = #tpu.dot_dimension_numbers<[2], [1], [1], [2], [0, 0, 0, 1, 1, 2], [0], [0]>} : vector<2x8x8xf32>, vector<2x8x128xf32>, vector<2x8x128xf32> -> vector<2x8x128xf32>
    "tpu.trace_stop"() : () -> ()
    %119 = arith.addf %103, %118 : vector<2x8x128xf32>
    %120 = vector.broadcast %38 : vector<1x1x128xf32> to vector<2x8x128xf32>
    %121 = arith.mulf %68, %120 : vector<2x8x128xf32>
    "tpu.trace_start"() <{level = 10 : i32, message = "bqd,bkd->bqk"}> : () -> ()
    %cst_50 = arith.constant dense<0.000000e+00> : vector<2x8x8xf32>
    %122 = tpu.matmul %121, %69, %cst_50 {dimension_numbers = #tpu.dot_dimension_numbers<[2], [2], [1], [1], [0, 0, 0, 1, 1, 1], [0], [0]>} : vector<2x8x128xf32>, vector<2x8x128xf32>, vector<2x8x8xf32> -> vector<2x8x8xf32>
    "tpu.trace_stop"() : () -> ()
    %cst_51 = arith.constant dense<0xFF800000> : vector<2x8xf32>
    %123 = vector.multi_reduction <maximumf>, %122, %cst_51 [2] : vector<2x8x8xf32> to vector<2x8xf32>
    %124 = vector.shape_cast %123 : vector<2x8xf32> to vector<2x8x1xf32>
    %125 = vector.broadcast %124 : vector<2x8x1xf32> to vector<2x8x8xf32>
    %126 = arith.subf %122, %125 : vector<2x8x8xf32>
    %127 = math.exp %126 : vector<2x8x8xf32>
    %cst_52 = arith.constant dense<0.000000e+00> : vector<2x8xf32>
    %128 = vector.multi_reduction <add>, %127, %cst_52 [2] : vector<2x8x8xf32> to vector<2x8xf32>
    %129 = vector.shape_cast %128 : vector<2x8xf32> to vector<2x8x1xf32>
    %130 = vector.broadcast %129 : vector<2x8x1xf32> to vector<2x8x8xf32>
    %131 = arith.divf %127, %130 : vector<2x8x8xf32>
    %132 = vector.broadcast %38 : vector<1x1x128xf32> to vector<2x8x128xf32>
    %133 = arith.mulf %70, %132 : vector<2x8x128xf32>
    "tpu.trace_start"() <{level = 10 : i32, message = "bqk,bkd->bqd"}> : () -> ()
    %cst_53 = arith.constant dense<0.000000e+00> : vector<2x8x128xf32>
    %134 = tpu.matmul %131, %133, %cst_53 {dimension_numbers = #tpu.dot_dimension_numbers<[2], [1], [1], [2], [0, 0, 0, 1, 1, 2], [0], [0]>} : vector<2x8x8xf32>, vector<2x8x128xf32>, vector<2x8x128xf32> -> vector<2x8x128xf32>
    "tpu.trace_stop"() : () -> ()
    %135 = arith.addf %119, %134 : vector<2x8x128xf32>
    %136 = vector.shape_cast %135 : vector<2x8x128xf32> to vector<16x128xf32>
    %137 = arith.truncf %136 : vector<16x128xf32> to vector<16x128xbf16>
    %cst_54 = arith.constant dense<0.000000e+00> : vector<16x128xf32>
    %138 = tpu.matmul %137, %42, %cst_54 {dimension_numbers = #tpu.dot_dimension_numbers<[1], [0], [0], [1], [0, 0, 1, 1], [], []>} : vector<16x128xbf16>, vector<128x128xbf16>, vector<16x128xf32> -> vector<16x128xf32>
    %139 = vector.broadcast %50 : vector<1x128xf32> to vector<16x128xf32>
    %140 = arith.addf %138, %139 : vector<16x128xf32>
    %141 = arith.addf %9, %140 : vector<16x128xf32>
    %cst_55 = arith.constant dense<0.000000e+00> : vector<16xf32>
    %142 = vector.multi_reduction <add>, %141, %cst_55 [1] : vector<16x128xf32> to vector<16xf32>
    %143 = vector.shape_cast %142 : vector<16xf32> to vector<16x1xf32>
    %cst_56 = arith.constant 7.812500e-03 : f32
    %144 = vector.broadcast %cst_56 : f32 to vector<16x1xf32>
    %145 = arith.mulf %143, %144 : vector<16x1xf32>
    %146 = vector.broadcast %145 : vector<16x1xf32> to vector<16x128xf32>
    %147 = arith.subf %141, %146 : vector<16x128xf32>
    %148 = arith.mulf %147, %147 : vector<16x128xf32>
    %cst_57 = arith.constant dense<0.000000e+00> : vector<16xf32>
    %149 = vector.multi_reduction <add>, %148, %cst_57 [1] : vector<16x128xf32> to vector<16xf32>
    %150 = vector.shape_cast %149 : vector<16xf32> to vector<16x1xf32>
    %cst_58 = arith.constant 7.812500e-03 : f32
    %151 = vector.broadcast %cst_58 : f32 to vector<16x1xf32>
    %152 = arith.mulf %150, %151 : vector<16x1xf32>
    %cst_59 = arith.constant 9.99999974E-6 : f32
    %153 = vector.broadcast %cst_59 : f32 to vector<16x1xf32>
    %154 = arith.addf %152, %153 : vector<16x1xf32>
    %155 = math.rsqrt %154 : vector<16x1xf32>
    %156 = vector.broadcast %155 : vector<16x1xf32> to vector<16x128xf32>
    %157 = arith.mulf %147, %156 : vector<16x128xf32>
    %158 = vector.broadcast %56 : vector<1x128xf32> to vector<16x128xf32>
    %159 = arith.mulf %157, %158 : vector<16x128xf32>
    %160 = vector.broadcast %58 : vector<1x128xf32> to vector<16x128xf32>
    %161 = arith.addf %159, %160 : vector<16x128xf32>
    %162 = arith.truncf %161 : vector<16x128xf32> to vector<16x128xbf16>
    %cst_60 = arith.constant dense<0.000000e+00> : vector<16x128xf32>
    %163 = tpu.matmul %162, %44, %cst_60 {dimension_numbers = #tpu.dot_dimension_numbers<[1], [0], [0], [1], [0, 0, 1, 1], [], []>} : vector<16x128xbf16>, vector<128x128xbf16>, vector<16x128xf32> -> vector<16x128xf32>
    %164 = vector.broadcast %52 : vector<1x128xf32> to vector<16x128xf32>
    %165 = arith.addf %163, %164 : vector<16x128xf32>
    %cst_61 = arith.constant 0.000000e+00 : f32
    %166 = vector.broadcast %cst_61 : f32 to vector<16x128xf32>
    %167 = arith.maximumf %165, %166 : vector<16x128xf32>
    %168 = arith.truncf %167 : vector<16x128xf32> to vector<16x128xbf16>
    %cst_62 = arith.constant dense<0.000000e+00> : vector<16x128xf32>
    %169 = tpu.matmul %168, %46, %cst_62 {dimension_numbers = #tpu.dot_dimension_numbers<[1], [0], [0], [1], [0, 0, 1, 1], [], []>} : vector<16x128xbf16>, vector<128x128xbf16>, vector<16x128xf32> -> vector<16x128xf32>
    %170 = vector.broadcast %54 : vector<1x128xf32> to vector<16x128xf32>
    %171 = arith.addf %169, %170 : vector<16x128xf32>
    %172 = arith.addf %161, %171 : vector<16x128xf32>
    %cst_63 = arith.constant dense<0.000000e+00> : vector<16xf32>
    %173 = vector.multi_reduction <add>, %172, %cst_63 [1] : vector<16x128xf32> to vector<16xf32>
    %174 = vector.shape_cast %173 : vector<16xf32> to vector<16x1xf32>
    %cst_64 = arith.constant 7.812500e-03 : f32
    %175 = vector.broadcast %cst_64 : f32 to vector<16x1xf32>
    %176 = arith.mulf %174, %175 : vector<16x1xf32>
    %177 = vector.broadcast %176 : vector<16x1xf32> to vector<16x128xf32>
    %178 = arith.subf %172, %177 : vector<16x128xf32>
    %179 = arith.mulf %178, %178 : vector<16x128xf32>
    %cst_65 = arith.constant dense<0.000000e+00> : vector<16xf32>
    %180 = vector.multi_reduction <add>, %179, %cst_65 [1] : vector<16x128xf32> to vector<16xf32>
    %181 = vector.shape_cast %180 : vector<16xf32> to vector<16x1xf32>
    %cst_66 = arith.constant 7.812500e-03 : f32
    %182 = vector.broadcast %cst_66 : f32 to vector<16x1xf32>
    %183 = arith.mulf %181, %182 : vector<16x1xf32>
    %cst_67 = arith.constant 9.99999974E-6 : f32
    %184 = vector.broadcast %cst_67 : f32 to vector<16x1xf32>
    %185 = arith.addf %183, %184 : vector<16x1xf32>
    %186 = math.rsqrt %185 : vector<16x1xf32>
    %187 = vector.broadcast %186 : vector<16x1xf32> to vector<16x128xf32>
    %188 = arith.mulf %178, %187 : vector<16x128xf32>
    %189 = vector.broadcast %60 : vector<1x128xf32> to vector<16x128xf32>
    %190 = arith.mulf %188, %189 : vector<16x128xf32>
    %191 = vector.broadcast %62 : vector<1x128xf32> to vector<16x128xf32>
    %192 = arith.addf %190, %191 : vector<16x128xf32>
    %c1 = arith.constant 1 : index
    %c0_68 = arith.constant 0 : index
    %c0_69 = arith.constant 0 : index
    %193 = vector.load %arg2[%c1, %c0_68, %c0_69] : memref<2x128x768xbf16, #tpu.memory_space<vmem>>, vector<1x128x384xbf16>
    %194 = vector.shape_cast %193 : vector<1x128x384xbf16> to vector<128x384xbf16>
    %c1_70 = arith.constant 1 : index
    %c0_71 = arith.constant 0 : index
    %c384_72 = arith.constant 384 : index
    %195 = vector.load %arg2[%c1_70, %c0_71, %c384_72] : memref<2x128x768xbf16, #tpu.memory_space<vmem>>, vector<1x128x128xbf16>
    %196 = vector.shape_cast %195 : vector<1x128x128xbf16> to vector<128x128xbf16>
    %c1_73 = arith.constant 1 : index
    %c0_74 = arith.constant 0 : index
    %c512_75 = arith.constant 512 : index
    %197 = vector.load %arg2[%c1_73, %c0_74, %c512_75] : memref<2x128x768xbf16, #tpu.memory_space<vmem>>, vector<1x128x128xbf16>
    %198 = vector.shape_cast %197 : vector<1x128x128xbf16> to vector<128x128xbf16>
    %c1_76 = arith.constant 1 : index
    %c0_77 = arith.constant 0 : index
    %c640_78 = arith.constant 640 : index
    %199 = vector.load %arg2[%c1_76, %c0_77, %c640_78] : memref<2x128x768xbf16, #tpu.memory_space<vmem>>, vector<1x128x128xbf16>
    %200 = vector.shape_cast %199 : vector<1x128x128xbf16> to vector<128x128xbf16>
    %c1_79 = arith.constant 1 : index
    %c0_80 = arith.constant 0 : index
    %c0_81 = arith.constant 0 : index
    %201 = vector.load %arg4[%c1_79, %c0_80, %c0_81] : memref<2x1x1280xf32, #tpu.memory_space<vmem>>, vector<1x1x384xf32>
    %202 = vector.shape_cast %201 : vector<1x1x384xf32> to vector<1x384xf32>
    %c1_82 = arith.constant 1 : index
    %c0_83 = arith.constant 0 : index
    %c384_84 = arith.constant 384 : index
    %203 = vector.load %arg4[%c1_82, %c0_83, %c384_84] : memref<2x1x1280xf32, #tpu.memory_space<vmem>>, vector<1x1x128xf32>
    %204 = vector.shape_cast %203 : vector<1x1x128xf32> to vector<1x128xf32>
    %c1_85 = arith.constant 1 : index
    %c0_86 = arith.constant 0 : index
    %c512_87 = arith.constant 512 : index
    %205 = vector.load %arg4[%c1_85, %c0_86, %c512_87] : memref<2x1x1280xf32, #tpu.memory_space<vmem>>, vector<1x1x128xf32>
    %206 = vector.shape_cast %205 : vector<1x1x128xf32> to vector<1x128xf32>
    %c1_88 = arith.constant 1 : index
    %c0_89 = arith.constant 0 : index
    %c640_90 = arith.constant 640 : index
    %207 = vector.load %arg4[%c1_88, %c0_89, %c640_90] : memref<2x1x1280xf32, #tpu.memory_space<vmem>>, vector<1x1x128xf32>
    %208 = vector.shape_cast %207 : vector<1x1x128xf32> to vector<1x128xf32>
    %c1_91 = arith.constant 1 : index
    %c0_92 = arith.constant 0 : index
    %c768_93 = arith.constant 768 : index
    %209 = vector.load %arg4[%c1_91, %c0_92, %c768_93] : memref<2x1x1280xf32, #tpu.memory_space<vmem>>, vector<1x1x128xf32>
    %210 = vector.shape_cast %209 : vector<1x1x128xf32> to vector<1x128xf32>
    %c1_94 = arith.constant 1 : index
    %c0_95 = arith.constant 0 : index
    %c896_96 = arith.constant 896 : index
    %211 = vector.load %arg4[%c1_94, %c0_95, %c896_96] : memref<2x1x1280xf32, #tpu.memory_space<vmem>>, vector<1x1x128xf32>
    %212 = vector.shape_cast %211 : vector<1x1x128xf32> to vector<1x128xf32>
    %c1_97 = arith.constant 1 : index
    %c0_98 = arith.constant 0 : index
    %c1024_99 = arith.constant 1024 : index
    %213 = vector.load %arg4[%c1_97, %c0_98, %c1024_99] : memref<2x1x1280xf32, #tpu.memory_space<vmem>>, vector<1x1x128xf32>
    %214 = vector.shape_cast %213 : vector<1x1x128xf32> to vector<1x128xf32>
    %c1_100 = arith.constant 1 : index
    %c0_101 = arith.constant 0 : index
    %c1152_102 = arith.constant 1152 : index
    %215 = vector.load %arg4[%c1_100, %c0_101, %c1152_102] : memref<2x1x1280xf32, #tpu.memory_space<vmem>>, vector<1x1x128xf32>
    %216 = vector.shape_cast %215 : vector<1x1x128xf32> to vector<1x128xf32>
    %217 = arith.truncf %192 : vector<16x128xf32> to vector<16x128xbf16>
    %cst_103 = arith.constant dense<0.000000e+00> : vector<16x384xf32>
    %218 = tpu.matmul %217, %194, %cst_103 {dimension_numbers = #tpu.dot_dimension_numbers<[1], [0], [0], [1], [0, 0, 1, 1], [], []>} : vector<16x128xbf16>, vector<128x384xbf16>, vector<16x384xf32> -> vector<16x384xf32>
    %219 = vector.broadcast %202 : vector<1x384xf32> to vector<16x384xf32>
    %220 = arith.addf %218, %219 : vector<16x384xf32>
    %221 = vector.shape_cast %220 : vector<16x384xf32> to vector<2x8x384xf32>
    %222 = vector.extract_strided_slice %221 {offsets = [0, 0, 0], sizes = [2, 8, 128], strides = [1, 1, 1]} : vector<2x8x384xf32> to vector<2x8x128xf32>
    %223 = vector.extract_strided_slice %221 {offsets = [0, 0, 128], sizes = [2, 8, 128], strides = [1, 1, 1]} : vector<2x8x384xf32> to vector<2x8x128xf32>
    %224 = vector.extract_strided_slice %221 {offsets = [0, 0, 256], sizes = [2, 8, 128], strides = [1, 1, 1]} : vector<2x8x384xf32> to vector<2x8x128xf32>
    %cst_104 = arith.constant 0.000000e+00 : f32
    %225 = vector.broadcast %cst_104 : f32 to vector<2x8x128xf32>
    %226 = vector.broadcast %17 : vector<1x1x128xf32> to vector<2x8x128xf32>
    %227 = arith.mulf %222, %226 : vector<2x8x128xf32>
    "tpu.trace_start"() <{level = 10 : i32, message = "bqd,bkd->bqk"}> : () -> ()
    %cst_105 = arith.constant dense<0.000000e+00> : vector<2x8x8xf32>
    %228 = tpu.matmul %227, %223, %cst_105 {dimension_numbers = #tpu.dot_dimension_numbers<[2], [2], [1], [1], [0, 0, 0, 1, 1, 1], [0], [0]>} : vector<2x8x128xf32>, vector<2x8x128xf32>, vector<2x8x8xf32> -> vector<2x8x8xf32>
    "tpu.trace_stop"() : () -> ()
    %cst_106 = arith.constant dense<0xFF800000> : vector<2x8xf32>
    %229 = vector.multi_reduction <maximumf>, %228, %cst_106 [2] : vector<2x8x8xf32> to vector<2x8xf32>
    %230 = vector.shape_cast %229 : vector<2x8xf32> to vector<2x8x1xf32>
    %231 = vector.broadcast %230 : vector<2x8x1xf32> to vector<2x8x8xf32>
    %232 = arith.subf %228, %231 : vector<2x8x8xf32>
    %233 = math.exp %232 : vector<2x8x8xf32>
    %cst_107 = arith.constant dense<0.000000e+00> : vector<2x8xf32>
    %234 = vector.multi_reduction <add>, %233, %cst_107 [2] : vector<2x8x8xf32> to vector<2x8xf32>
    %235 = vector.shape_cast %234 : vector<2x8xf32> to vector<2x8x1xf32>
    %236 = vector.broadcast %235 : vector<2x8x1xf32> to vector<2x8x8xf32>
    %237 = arith.divf %233, %236 : vector<2x8x8xf32>
    %238 = vector.broadcast %17 : vector<1x1x128xf32> to vector<2x8x128xf32>
    %239 = arith.mulf %224, %238 : vector<2x8x128xf32>
    "tpu.trace_start"() <{level = 10 : i32, message = "bqk,bkd->bqd"}> : () -> ()
    %cst_108 = arith.constant dense<0.000000e+00> : vector<2x8x128xf32>
    %240 = tpu.matmul %237, %239, %cst_108 {dimension_numbers = #tpu.dot_dimension_numbers<[2], [1], [1], [2], [0, 0, 0, 1, 1, 2], [0], [0]>} : vector<2x8x8xf32>, vector<2x8x128xf32>, vector<2x8x128xf32> -> vector<2x8x128xf32>
    "tpu.trace_stop"() : () -> ()
    %241 = arith.addf %225, %240 : vector<2x8x128xf32>
    %242 = vector.broadcast %24 : vector<1x1x128xf32> to vector<2x8x128xf32>
    %243 = arith.mulf %222, %242 : vector<2x8x128xf32>
    "tpu.trace_start"() <{level = 10 : i32, message = "bqd,bkd->bqk"}> : () -> ()
    %cst_109 = arith.constant dense<0.000000e+00> : vector<2x8x8xf32>
    %244 = tpu.matmul %243, %223, %cst_109 {dimension_numbers = #tpu.dot_dimension_numbers<[2], [2], [1], [1], [0, 0, 0, 1, 1, 1], [0], [0]>} : vector<2x8x128xf32>, vector<2x8x128xf32>, vector<2x8x8xf32> -> vector<2x8x8xf32>
    "tpu.trace_stop"() : () -> ()
    %cst_110 = arith.constant dense<0xFF800000> : vector<2x8xf32>
    %245 = vector.multi_reduction <maximumf>, %244, %cst_110 [2] : vector<2x8x8xf32> to vector<2x8xf32>
    %246 = vector.shape_cast %245 : vector<2x8xf32> to vector<2x8x1xf32>
    %247 = vector.broadcast %246 : vector<2x8x1xf32> to vector<2x8x8xf32>
    %248 = arith.subf %244, %247 : vector<2x8x8xf32>
    %249 = math.exp %248 : vector<2x8x8xf32>
    %cst_111 = arith.constant dense<0.000000e+00> : vector<2x8xf32>
    %250 = vector.multi_reduction <add>, %249, %cst_111 [2] : vector<2x8x8xf32> to vector<2x8xf32>
    %251 = vector.shape_cast %250 : vector<2x8xf32> to vector<2x8x1xf32>
    %252 = vector.broadcast %251 : vector<2x8x1xf32> to vector<2x8x8xf32>
    %253 = arith.divf %249, %252 : vector<2x8x8xf32>
    %254 = vector.broadcast %24 : vector<1x1x128xf32> to vector<2x8x128xf32>
    %255 = arith.mulf %224, %254 : vector<2x8x128xf32>
    "tpu.trace_start"() <{level = 10 : i32, message = "bqk,bkd->bqd"}> : () -> ()
    %cst_112 = arith.constant dense<0.000000e+00> : vector<2x8x128xf32>
    %256 = tpu.matmul %253, %255, %cst_112 {dimension_numbers = #tpu.dot_dimension_numbers<[2], [1], [1], [2], [0, 0, 0, 1, 1, 2], [0], [0]>} : vector<2x8x8xf32>, vector<2x8x128xf32>, vector<2x8x128xf32> -> vector<2x8x128xf32>
    "tpu.trace_stop"() : () -> ()
    %257 = arith.addf %241, %256 : vector<2x8x128xf32>
    %258 = vector.broadcast %31 : vector<1x1x128xf32> to vector<2x8x128xf32>
    %259 = arith.mulf %222, %258 : vector<2x8x128xf32>
    "tpu.trace_start"() <{level = 10 : i32, message = "bqd,bkd->bqk"}> : () -> ()
    %cst_113 = arith.constant dense<0.000000e+00> : vector<2x8x8xf32>
    %260 = tpu.matmul %259, %223, %cst_113 {dimension_numbers = #tpu.dot_dimension_numbers<[2], [2], [1], [1], [0, 0, 0, 1, 1, 1], [0], [0]>} : vector<2x8x128xf32>, vector<2x8x128xf32>, vector<2x8x8xf32> -> vector<2x8x8xf32>
    "tpu.trace_stop"() : () -> ()
    %cst_114 = arith.constant dense<0xFF800000> : vector<2x8xf32>
    %261 = vector.multi_reduction <maximumf>, %260, %cst_114 [2] : vector<2x8x8xf32> to vector<2x8xf32>
    %262 = vector.shape_cast %261 : vector<2x8xf32> to vector<2x8x1xf32>
    %263 = vector.broadcast %262 : vector<2x8x1xf32> to vector<2x8x8xf32>
    %264 = arith.subf %260, %263 : vector<2x8x8xf32>
    %265 = math.exp %264 : vector<2x8x8xf32>
    %cst_115 = arith.constant dense<0.000000e+00> : vector<2x8xf32>
    %266 = vector.multi_reduction <add>, %265, %cst_115 [2] : vector<2x8x8xf32> to vector<2x8xf32>
    %267 = vector.shape_cast %266 : vector<2x8xf32> to vector<2x8x1xf32>
    %268 = vector.broadcast %267 : vector<2x8x1xf32> to vector<2x8x8xf32>
    %269 = arith.divf %265, %268 : vector<2x8x8xf32>
    %270 = vector.broadcast %31 : vector<1x1x128xf32> to vector<2x8x128xf32>
    %271 = arith.mulf %224, %270 : vector<2x8x128xf32>
    "tpu.trace_start"() <{level = 10 : i32, message = "bqk,bkd->bqd"}> : () -> ()
    %cst_116 = arith.constant dense<0.000000e+00> : vector<2x8x128xf32>
    %272 = tpu.matmul %269, %271, %cst_116 {dimension_numbers = #tpu.dot_dimension_numbers<[2], [1], [1], [2], [0, 0, 0, 1, 1, 2], [0], [0]>} : vector<2x8x8xf32>, vector<2x8x128xf32>, vector<2x8x128xf32> -> vector<2x8x128xf32>
    "tpu.trace_stop"() : () -> ()
    %273 = arith.addf %257, %272 : vector<2x8x128xf32>
    %274 = vector.broadcast %38 : vector<1x1x128xf32> to vector<2x8x128xf32>
    %275 = arith.mulf %222, %274 : vector<2x8x128xf32>
    "tpu.trace_start"() <{level = 10 : i32, message = "bqd,bkd->bqk"}> : () -> ()
    %cst_117 = arith.constant dense<0.000000e+00> : vector<2x8x8xf32>
    %276 = tpu.matmul %275, %223, %cst_117 {dimension_numbers = #tpu.dot_dimension_numbers<[2], [2], [1], [1], [0, 0, 0, 1, 1, 1], [0], [0]>} : vector<2x8x128xf32>, vector<2x8x128xf32>, vector<2x8x8xf32> -> vector<2x8x8xf32>
    "tpu.trace_stop"() : () -> ()
    %cst_118 = arith.constant dense<0xFF800000> : vector<2x8xf32>
    %277 = vector.multi_reduction <maximumf>, %276, %cst_118 [2] : vector<2x8x8xf32> to vector<2x8xf32>
    %278 = vector.shape_cast %277 : vector<2x8xf32> to vector<2x8x1xf32>
    %279 = vector.broadcast %278 : vector<2x8x1xf32> to vector<2x8x8xf32>
    %280 = arith.subf %276, %279 : vector<2x8x8xf32>
    %281 = math.exp %280 : vector<2x8x8xf32>
    %cst_119 = arith.constant dense<0.000000e+00> : vector<2x8xf32>
    %282 = vector.multi_reduction <add>, %281, %cst_119 [2] : vector<2x8x8xf32> to vector<2x8xf32>
    %283 = vector.shape_cast %282 : vector<2x8xf32> to vector<2x8x1xf32>
    %284 = vector.broadcast %283 : vector<2x8x1xf32> to vector<2x8x8xf32>
    %285 = arith.divf %281, %284 : vector<2x8x8xf32>
    %286 = vector.broadcast %38 : vector<1x1x128xf32> to vector<2x8x128xf32>
    %287 = arith.mulf %224, %286 : vector<2x8x128xf32>
    "tpu.trace_start"() <{level = 10 : i32, message = "bqk,bkd->bqd"}> : () -> ()
    %cst_120 = arith.constant dense<0.000000e+00> : vector<2x8x128xf32>
    %288 = tpu.matmul %285, %287, %cst_120 {dimension_numbers = #tpu.dot_dimension_numbers<[2], [1], [1], [2], [0, 0, 0, 1, 1, 2], [0], [0]>} : vector<2x8x8xf32>, vector<2x8x128xf32>, vector<2x8x128xf32> -> vector<2x8x128xf32>
    "tpu.trace_stop"() : () -> ()
    %289 = arith.addf %273, %288 : vector<2x8x128xf32>
    %290 = vector.shape_cast %289 : vector<2x8x128xf32> to vector<16x128xf32>
    %291 = arith.truncf %290 : vector<16x128xf32> to vector<16x128xbf16>
    %cst_121 = arith.constant dense<0.000000e+00> : vector<16x128xf32>
    %292 = tpu.matmul %291, %196, %cst_121 {dimension_numbers = #tpu.dot_dimension_numbers<[1], [0], [0], [1], [0, 0, 1, 1], [], []>} : vector<16x128xbf16>, vector<128x128xbf16>, vector<16x128xf32> -> vector<16x128xf32>
    %293 = vector.broadcast %204 : vector<1x128xf32> to vector<16x128xf32>
    %294 = arith.addf %292, %293 : vector<16x128xf32>
    %295 = arith.addf %192, %294 : vector<16x128xf32>
    %cst_122 = arith.constant dense<0.000000e+00> : vector<16xf32>
    %296 = vector.multi_reduction <add>, %295, %cst_122 [1] : vector<16x128xf32> to vector<16xf32>
    %297 = vector.shape_cast %296 : vector<16xf32> to vector<16x1xf32>
    %cst_123 = arith.constant 7.812500e-03 : f32
    %298 = vector.broadcast %cst_123 : f32 to vector<16x1xf32>
    %299 = arith.mulf %297, %298 : vector<16x1xf32>
    %300 = vector.broadcast %299 : vector<16x1xf32> to vector<16x128xf32>
    %301 = arith.subf %295, %300 : vector<16x128xf32>
    %302 = arith.mulf %301, %301 : vector<16x128xf32>
    %cst_124 = arith.constant dense<0.000000e+00> : vector<16xf32>
    %303 = vector.multi_reduction <add>, %302, %cst_124 [1] : vector<16x128xf32> to vector<16xf32>
    %304 = vector.shape_cast %303 : vector<16xf32> to vector<16x1xf32>
    %cst_125 = arith.constant 7.812500e-03 : f32
    %305 = vector.broadcast %cst_125 : f32 to vector<16x1xf32>
    %306 = arith.mulf %304, %305 : vector<16x1xf32>
    %cst_126 = arith.constant 9.99999974E-6 : f32
    %307 = vector.broadcast %cst_126 : f32 to vector<16x1xf32>
    %308 = arith.addf %306, %307 : vector<16x1xf32>
    %309 = math.rsqrt %308 : vector<16x1xf32>
    %310 = vector.broadcast %309 : vector<16x1xf32> to vector<16x128xf32>
    %311 = arith.mulf %301, %310 : vector<16x128xf32>
    %312 = vector.broadcast %210 : vector<1x128xf32> to vector<16x128xf32>
    %313 = arith.mulf %311, %312 : vector<16x128xf32>
    %314 = vector.broadcast %212 : vector<1x128xf32> to vector<16x128xf32>
    %315 = arith.addf %313, %314 : vector<16x128xf32>
    %316 = arith.truncf %315 : vector<16x128xf32> to vector<16x128xbf16>
    %cst_127 = arith.constant dense<0.000000e+00> : vector<16x128xf32>
    %317 = tpu.matmul %316, %198, %cst_127 {dimension_numbers = #tpu.dot_dimension_numbers<[1], [0], [0], [1], [0, 0, 1, 1], [], []>} : vector<16x128xbf16>, vector<128x128xbf16>, vector<16x128xf32> -> vector<16x128xf32>
    %318 = vector.broadcast %206 : vector<1x128xf32> to vector<16x128xf32>
    %319 = arith.addf %317, %318 : vector<16x128xf32>
    %cst_128 = arith.constant 0.000000e+00 : f32
    %320 = vector.broadcast %cst_128 : f32 to vector<16x128xf32>
    %321 = arith.maximumf %319, %320 : vector<16x128xf32>
    %322 = arith.truncf %321 : vector<16x128xf32> to vector<16x128xbf16>
    %cst_129 = arith.constant dense<0.000000e+00> : vector<16x128xf32>
    %323 = tpu.matmul %322, %200, %cst_129 {dimension_numbers = #tpu.dot_dimension_numbers<[1], [0], [0], [1], [0, 0, 1, 1], [], []>} : vector<16x128xbf16>, vector<128x128xbf16>, vector<16x128xf32> -> vector<16x128xf32>
    %324 = vector.broadcast %208 : vector<1x128xf32> to vector<16x128xf32>
    %325 = arith.addf %323, %324 : vector<16x128xf32>
    %326 = arith.addf %315, %325 : vector<16x128xf32>
    %cst_130 = arith.constant dense<0.000000e+00> : vector<16xf32>
    %327 = vector.multi_reduction <add>, %326, %cst_130 [1] : vector<16x128xf32> to vector<16xf32>
    %328 = vector.shape_cast %327 : vector<16xf32> to vector<16x1xf32>
    %cst_131 = arith.constant 7.812500e-03 : f32
    %329 = vector.broadcast %cst_131 : f32 to vector<16x1xf32>
    %330 = arith.mulf %328, %329 : vector<16x1xf32>
    %331 = vector.broadcast %330 : vector<16x1xf32> to vector<16x128xf32>
    %332 = arith.subf %326, %331 : vector<16x128xf32>
    %333 = arith.mulf %332, %332 : vector<16x128xf32>
    %cst_132 = arith.constant dense<0.000000e+00> : vector<16xf32>
    %334 = vector.multi_reduction <add>, %333, %cst_132 [1] : vector<16x128xf32> to vector<16xf32>
    %335 = vector.shape_cast %334 : vector<16xf32> to vector<16x1xf32>
    %cst_133 = arith.constant 7.812500e-03 : f32
    %336 = vector.broadcast %cst_133 : f32 to vector<16x1xf32>
    %337 = arith.mulf %335, %336 : vector<16x1xf32>
    %cst_134 = arith.constant 9.99999974E-6 : f32
    %338 = vector.broadcast %cst_134 : f32 to vector<16x1xf32>
    %339 = arith.addf %337, %338 : vector<16x1xf32>
    %340 = math.rsqrt %339 : vector<16x1xf32>
    %341 = vector.broadcast %340 : vector<16x1xf32> to vector<16x128xf32>
    %342 = arith.mulf %332, %341 : vector<16x128xf32>
    %343 = vector.broadcast %214 : vector<1x128xf32> to vector<16x128xf32>
    %344 = arith.mulf %342, %343 : vector<16x128xf32>
    %345 = vector.broadcast %216 : vector<1x128xf32> to vector<16x128xf32>
    %346 = arith.addf %344, %345 : vector<16x128xf32>
    %c0_135 = arith.constant 0 : index
    %c0_136 = arith.constant 0 : index
    %347 = vector.load %arg5[%c0_135, %c0_136] : memref<1x640xf32, #tpu.memory_space<vmem>>, vector<1x128xf32>
    %c0_137 = arith.constant 0 : index
    %c128 = arith.constant 128 : index
    %348 = vector.load %arg5[%c0_137, %c128] : memref<1x640xf32, #tpu.memory_space<vmem>>, vector<1x128xf32>
    %c0_138 = arith.constant 0 : index
    %c256 = arith.constant 256 : index
    %349 = vector.load %arg5[%c0_138, %c256] : memref<1x640xf32, #tpu.memory_space<vmem>>, vector<1x128xf32>
    %c0_139 = arith.constant 0 : index
    %c384_140 = arith.constant 384 : index
    %350 = vector.load %arg5[%c0_139, %c384_140] : memref<1x640xf32, #tpu.memory_space<vmem>>, vector<1x128xf32>
    %c0_141 = arith.constant 0 : index
    %c512_142 = arith.constant 512 : index
    %351 = vector.load %arg5[%c0_141, %c512_142] : memref<1x640xf32, #tpu.memory_space<vmem>>, vector<1x128xf32>
    %cst_143 = arith.constant dense<0.000000e+00> : vector<16xf32>
    %352 = vector.multi_reduction <add>, %346, %cst_143 [1] : vector<16x128xf32> to vector<16xf32>
    %353 = vector.shape_cast %352 : vector<16xf32> to vector<16x1xf32>
    %cst_144 = arith.constant 7.812500e-03 : f32
    %354 = vector.broadcast %cst_144 : f32 to vector<16x1xf32>
    %355 = arith.mulf %353, %354 : vector<16x1xf32>
    %356 = vector.broadcast %355 : vector<16x1xf32> to vector<16x128xf32>
    %357 = arith.subf %346, %356 : vector<16x128xf32>
    %358 = arith.mulf %357, %357 : vector<16x128xf32>
    %cst_145 = arith.constant dense<0.000000e+00> : vector<16xf32>
    %359 = vector.multi_reduction <add>, %358, %cst_145 [1] : vector<16x128xf32> to vector<16xf32>
    %360 = vector.shape_cast %359 : vector<16xf32> to vector<16x1xf32>
    %cst_146 = arith.constant 7.812500e-03 : f32
    %361 = vector.broadcast %cst_146 : f32 to vector<16x1xf32>
    %362 = arith.mulf %360, %361 : vector<16x1xf32>
    %cst_147 = arith.constant 9.99999974E-6 : f32
    %363 = vector.broadcast %cst_147 : f32 to vector<16x1xf32>
    %364 = arith.addf %362, %363 : vector<16x1xf32>
    %365 = math.rsqrt %364 : vector<16x1xf32>
    %366 = vector.broadcast %365 : vector<16x1xf32> to vector<16x128xf32>
    %367 = arith.mulf %357, %366 : vector<16x128xf32>
    %368 = vector.broadcast %347 : vector<1x128xf32> to vector<16x128xf32>
    %369 = arith.mulf %367, %368 : vector<16x128xf32>
    %370 = vector.broadcast %348 : vector<1x128xf32> to vector<16x128xf32>
    %371 = arith.addf %369, %370 : vector<16x128xf32>
    %372 = vector.shape_cast %371 : vector<16x128xf32> to vector<2x8x128xf32>
    %cst_148 = arith.constant dense<0.000000e+00> : vector<2x128xf32>
    %373 = vector.multi_reduction <add>, %372, %cst_148 [1] : vector<2x8x128xf32> to vector<2x128xf32>
    %cst_149 = arith.constant 1.250000e-01 : f32
    %374 = vector.broadcast %cst_149 : f32 to vector<2x128xf32>
    %375 = arith.mulf %373, %374 : vector<2x128xf32>
    %cst_150 = arith.constant dense<0.000000e+00> : vector<2xf32>
    %376 = vector.multi_reduction <add>, %375, %cst_150 [1] : vector<2x128xf32> to vector<2xf32>
    %377 = vector.shape_cast %376 : vector<2xf32> to vector<2x1xf32>
    %cst_151 = arith.constant 7.812500e-03 : f32
    %378 = vector.broadcast %cst_151 : f32 to vector<2x1xf32>
    %379 = arith.mulf %377, %378 : vector<2x1xf32>
    %380 = vector.broadcast %379 : vector<2x1xf32> to vector<2x128xf32>
    %381 = arith.subf %375, %380 : vector<2x128xf32>
    %382 = arith.mulf %381, %381 : vector<2x128xf32>
    %cst_152 = arith.constant dense<0.000000e+00> : vector<2xf32>
    %383 = vector.multi_reduction <add>, %382, %cst_152 [1] : vector<2x128xf32> to vector<2xf32>
    %384 = vector.shape_cast %383 : vector<2xf32> to vector<2x1xf32>
    %cst_153 = arith.constant 7.812500e-03 : f32
    %385 = vector.broadcast %cst_153 : f32 to vector<2x1xf32>
    %386 = arith.mulf %384, %385 : vector<2x1xf32>
    %cst_154 = arith.constant 9.99999974E-6 : f32
    %387 = vector.broadcast %cst_154 : f32 to vector<2x1xf32>
    %388 = arith.addf %386, %387 : vector<2x1xf32>
    %389 = math.rsqrt %388 : vector<2x1xf32>
    %390 = vector.broadcast %389 : vector<2x1xf32> to vector<2x128xf32>
    %391 = arith.mulf %381, %390 : vector<2x128xf32>
    %392 = vector.broadcast %349 : vector<1x128xf32> to vector<2x128xf32>
    %393 = arith.mulf %391, %392 : vector<2x128xf32>
    %394 = vector.broadcast %350 : vector<1x128xf32> to vector<2x128xf32>
    %395 = arith.addf %393, %394 : vector<2x128xf32>
    %396 = arith.truncf %395 : vector<2x128xf32> to vector<2x128xbf16>
    %c1_155 = arith.constant 1 : index
    %c0_156 = arith.constant 0 : index
    %c0_157 = arith.constant 0 : index
    %397 = vector.load %arg3[%c1_155, %c0_156, %c0_157] : memref<2x128x128xbf16, #tpu.memory_space<vmem>>, vector<1x128x128xbf16>
    %398 = vector.shape_cast %397 : vector<1x128x128xbf16> to vector<128x128xbf16>
    %cst_158 = arith.constant dense<0.000000e+00> : vector<2x128xf32>
    %399 = tpu.matmul %396, %398, %cst_158 {dimension_numbers = #tpu.dot_dimension_numbers<[1], [0], [0], [1], [0, 0, 1, 1], [], []>} : vector<2x128xbf16>, vector<128x128xbf16>, vector<2x128xf32> -> vector<2x128xf32>
    %400 = vector.broadcast %351 : vector<1x128xf32> to vector<2x128xf32>
    %401 = arith.addf %399, %400 : vector<2x128xf32>
    %402 = math.tanh %401 : vector<2x128xf32>
    %c0_159 = arith.constant 0 : index
    %c0_160 = arith.constant 0 : index
    %403 = vector.load %arg6[%c0_159, %c0_160] : memref<2x128xf32, #tpu.memory_space<vmem>>, vector<2x128xf32>
    tpu.vector_store %arg6[%c0_159, %c0_160], %402 {strides = array<i32>} : memref<2x128xf32, #tpu.memory_space<vmem>>, vector<2x128xf32>,
    return
  }
  func.func @transform_0(%arg0: i32) -> (i32, i32) {
    %c0_i32 = arith.constant 0 : i32
    %c0_i32_0 = arith.constant 0 : i32
    %c0_i32_1 = arith.constant 0 : i32
    return %c0_i32, %c0_i32_0 : i32, i32
  }
  func.func @transform_1(%arg0: i32) -> (i32, i32, i32) {
    %c0_i32 = arith.constant 0 : i32
    %c0_i32_0 = arith.constant 0 : i32
    %c0_i32_1 = arith.constant 0 : i32
    %c0_i32_2 = arith.constant 0 : i32
    return %c0_i32, %c0_i32_0, %c0_i32_1 : i32, i32, i32
  }
  func.func @transform_2(%arg0: i32) -> (i32, i32, i32) {
    %c0_i32 = arith.constant 0 : i32
    %c0_i32_0 = arith.constant 0 : i32
    %c0_i32_1 = arith.constant 0 : i32
    %c0_i32_2 = arith.constant 0 : i32
    return %c0_i32, %c0_i32_0, %c0_i32_1 : i32, i32, i32
  }
  func.func @transform_3(%arg0: i32) -> (i32, i32, i32) {
    %c0_i32 = arith.constant 0 : i32
    %c0_i32_0 = arith.constant 0 : i32
    %c0_i32_1 = arith.constant 0 : i32
    %c0_i32_2 = arith.constant 0 : i32
    return %c0_i32, %c0_i32_0, %c0_i32_1 : i32, i32, i32
  }
  func.func @transform_4(%arg0: i32) -> (i32, i32) {
    %c0_i32 = arith.constant 0 : i32
    %c0_i32_0 = arith.constant 0 : i32
    %c0_i32_1 = arith.constant 0 : i32
    return %c0_i32, %c0_i32_0 : i32, i32
  }
  func.func @transform_5(%arg0: i32) -> (i32, i32) {
    %c0_i32 = arith.constant 0 : i32
    %c0_i32_0 = arith.constant 0 : i32
    %c0_i32_1 = arith.constant 0 : i32
    return %c0_i32, %c0_i32_0 : i32, i32
  }
}

</mosaic_0001>

<llo_original>
// kernel: transformer_syn_forward.1
$region0: #{transformer_syn_forward.1}
  #allocation0 [shape = 'u32[]', space=smem, size = 0x4, offset = 0x4, fixed_abs, tag = 'smem constant byte address 0x4 - core index']
  #allocation1 [shape = 'u32[144,128]{1,0:T(1,128)}', space=vmem, size = 0x12000, scoped, tag = 'internal scratch']
  %s0 = inlined_call_operand.vmem [shape: s32[16,1], index: 0, kind: input, shape index: {}]
  %s1 = inlined_call_operand.hbm [shape: bf16[2,128,768], index: 1, kind: input, shape index: {}]
  %s2 = inlined_call_operand.hbm [shape: bf16[2,128,128], index: 2, kind: input, shape index: {}]
  %s3 = inlined_call_operand.vmem [shape: f32[2,1,1280], index: 3, kind: input, shape index: {}]
  %s4 = inlined_call_operand.vmem [shape: f32[1,640], index: 4, kind: input, shape index: {}]
  %s5 = inlined_call_operand.hbm [shape: f32[2,128], index: 5, kind: output, shape index: {}]
  %s6 = sld [smem:[#allocation0]]
  $region38: #{transformer_syn_forward.1} parent=0
    _
  %s8 = ssub.s32 1, %s6
  %s9 = scalar_select 0, %s8, %s6
  $region1: #{transformer_syn_forward.1} parent=0
    #allocation2 [shape = 'u8[393216]{0}', space=vmem, size = 0x60000, scoped, tag = 'input window, operand 1, single buffered']
    #allocation3 [shape = 's32[1]{0}', space=sflag, size = 0x4, scoped, tag = 'scoped memory for transformer_syn_forward.1']
    #allocation4 [shape = 's32[1]{0}', space=sflag, size = 0x4, scoped, tag = 'scoped memory for transformer_syn_forward.1']
    #allocation5 [shape = 'u8[65536]{0}', space=vmem, size = 0x10000, scoped, tag = 'input window, operand 2, single buffered']
    #allocation6 [shape = 's32[1]{0}', space=sflag, size = 0x4, scoped, tag = 'scoped memory for transformer_syn_forward.1']
    #allocation7 [shape = 'u8[1024]{0}', space=vmem, size = 0x400, scoped, tag = 'output window, operand 0, single buffered']
    %10 = vsyncpa [#allocation3], 0
    %11 = vsyncpa [#allocation6], 0
    %12 = vsyncpa [#allocation4], 0
    // Predicated region
    $region2: #{transformer_syn_forward.1} parent=1 // pred_check
      _
    $region3: #{transformer_syn_forward.1} parent=1 // pred_check_branch
      %14 = sbr.rel (0) target = $region5
    $region4: #{transformer_syn_forward.1} parent=1 // pred_region
      _
    $region5: #{transformer_syn_forward.1} parent=1 // pred_fallthru
      _
    // Predicated region
    $region6: #{transformer_syn_forward.1} parent=1 // pred_check
      _
    $region7: #{transformer_syn_forward.1} parent=1 // pred_check_branch
      %16 = sbr.rel (0) target = $region9
    $region8: #{transformer_syn_forward.1} parent=1 // pred_region
      %s18 = ssub.s32 12288, 12288
      %19 = vsyncadd [#allocation3], %s18
      %s20 = sshll.u32 [#allocation2], 4
      %s21 = int_to_ptr.vmem [resolvable:$true] %s20
      %26 = dma.hbm_to_vmem [thread:$0]  %s1, 12288, %s21, [#allocation3], 384, 384, 24
    $region9: #{transformer_syn_forward.1} parent=1 // pred_fallthru
      _
    // Predicated region
    $region10: #{transformer_syn_forward.1} parent=1 // pred_check
      _
    $region11: #{transformer_syn_forward.1} parent=1 // pred_check_branch
      %28 = sbr.rel (0) target = $region13
    $region12: #{transformer_syn_forward.1} parent=1 // pred_region
      %s30 = ssub.s32 2048, 2048
      %31 = vsyncadd [#allocation6], %s30
      %s32 = sshll.u32 [#allocation5], 4
      %s33 = int_to_ptr.vmem [resolvable:$true] %s32
      %38 = dma.hbm_to_vmem [thread:$0]  %s2, 2048, %s33, [#allocation6], 64, 64, 4
    $region13: #{transformer_syn_forward.1} parent=1 // pred_fallthru
      _
    // Predicated region
    $region14: #{transformer_syn_forward.1} parent=1 // pred_check
      _
    $region15: #{transformer_syn_forward.1} parent=1 // pred_check_branch
      %40 = sbr.rel (0) target = $region17
    $region16: #{transformer_syn_forward.1} parent=1 // pred_region
      _
    $region17: #{transformer_syn_forward.1} parent=1 // pred_fallthru
      _
    // Predicated region
    $region18: #{transformer_syn_forward.1} parent=1 // pred_check
      _
    $region19: #{transformer_syn_forward.1} parent=1 // pred_check_branch
      %42 = sbr.rel (0) target = $region21
    $region20: #{transformer_syn_forward.1} parent=1 // pred_region
      _
    $region21: #{transformer_syn_forward.1} parent=1 // pred_fallthru
      _
    // Predicated region
    $region22: #{transformer_syn_forward.1} parent=1 // pred_check
      _
    $region23: #{transformer_syn_forward.1} parent=1 // pred_check_branch
      %44 = sbr.rel (0) target = $region25
    $region24: #{transformer_syn_forward.1} parent=1 // pred_region
      %45 = dma.done [#allocation3], 12288
    $region25: #{transformer_syn_forward.1} parent=1 // pred_fallthru
      _
    // Predicated region
    $region26: #{transformer_syn_forward.1} parent=1 // pred_check
      _
    $region27: #{transformer_syn_forward.1} parent=1 // pred_check_branch
      %47 = sbr.rel (0) target = $region29
    $region28: #{transformer_syn_forward.1} parent=1 // pred_region
      %48 = dma.done [#allocation6], 2048
    $region29: #{transformer_syn_forward.1} parent=1 // pred_fallthru
      _
    %v50 = vld [vmem:[%s0] sm:$0xff]
    %v51 = vld [vmem:[%s0 + $0x8] sm:$0xff]
    %v52 = vlaneseq
    %v53 = vand.u32 %v52, 127
    %54 = vset.pattern.permute.xlu0 0
    %55 = vperm.xlu0 %54, %v50
    %v56 = vpop.permute.xlu0 %55
    %57 = vset.pattern.permute.xlu0 0
    %58 = vperm.xlu0 %57, %v51
    %v59 = vpop.permute.xlu0 %58
    %vm60 = vcmp.eq.s32.totalorder %v56, %v53
    %vm61 = vcmp.eq.s32.totalorder %v59, %v53
    %v62 = vsel %vm60, 1, 0
    %v63 = vsel %vm61, 1, 0
    %v64 = vcvt.s32.f32 %v62
    %v65 = vcvt.s32.f32 %v63
    %v66 = vpack.c.bf16 %v65, %v64
    %v67 = vld [vmem:[#allocation5] sm:$0xf]
    %v68 = vld [vmem:[#allocation5 + $0x4] sm:$0xf]
    %v69 = vld [vmem:[#allocation5 + $0x8] sm:$0xf]
    %v70 = vld [vmem:[#allocation5 + $0xc] sm:$0xf]
    %v71 = vld [vmem:[#allocation5 + $0x10] sm:$0xf]
    %v72 = vld [vmem:[#allocation5 + $0x14] sm:$0xf]
    %v73 = vld [vmem:[#allocation5 + $0x18] sm:$0xf]
    %v74 = vld [vmem:[#allocation5 + $0x1c] sm:$0xf]
    %v75 = vld [vmem:[#allocation5 + $0x20] sm:$0xf]
    %v76 = vld [vmem:[#allocation5 + $0x24] sm:$0xf]
    %v77 = vld [vmem:[#allocation5 + $0x28] sm:$0xf]
    %v78 = vld [vmem:[#allocation5 + $0x2c] sm:$0xf]
    %v79 = vld [vmem:[#allocation5 + $0x30] sm:$0xf]
    %v80 = vld [vmem:[#allocation5 + $0x34] sm:$0xf]
    %v81 = vld [vmem:[#allocation5 + $0x38] sm:$0xf]
    %v82 = vld [vmem:[#allocation5 + $0x3c] sm:$0xf]
    %v99 = vunpack.c.l.b16 %v67
    %v100 = vunpack.c.l.b16 %v68
    %v101 = vunpack.c.l.b16 %v69
    %v102 = vunpack.c.l.b16 %v70
    %v103 = vunpack.c.l.b16 %v71
    %v104 = vunpack.c.l.b16 %v72
    %v105 = vunpack.c.l.b16 %v73
    %v106 = vunpack.c.l.b16 %v74
    %v107 = vunpack.c.l.b16 %v75
    %v108 = vunpack.c.l.b16 %v76
    %v109 = vunpack.c.l.b16 %v77
    %v110 = vunpack.c.l.b16 %v78
    %v111 = vunpack.c.l.b16 %v79
    %v112 = vunpack.c.l.b16 %v80
    %v113 = vunpack.c.l.b16 %v81
    %v114 = vunpack.c.l.b16 %v82
    %v115 = vpack.c.b16 %v100, %v99
    %v116 = vpack.c.b16 %v102, %v101
    %v117 = vpack.c.b16 %v104, %v103
    %v118 = vpack.c.b16 %v106, %v105
    %v119 = vpack.c.b16 %v108, %v107
    %v120 = vpack.c.b16 %v110, %v109
    %v121 = vpack.c.b16 %v112, %v111
    %v122 = vpack.c.b16 %v114, %v113
    %131 = vmatprep.subr.bf16.mxu0 0
    %132 = vmatpush1.bf16.msra.mxu0 %v115
    %133 = vmatprep.subr.bf16.mxu0 0
    %134 = vmatpush1.bf16.msra.mxu0 %v116
    %135 = vmatprep.subr.bf16.mxu0 0
    %136 = vmatpush1.bf16.msra.mxu0 %v117
    %137 = vmatprep.subr.bf16.mxu0 0
    %138 = vmatpush1.bf16.msra.mxu0 %v118
    %139 = vmatprep.subr.bf16.mxu0 0
    %140 = vmatpush1.bf16.msra.mxu0 %v119
    %141 = vmatprep.subr.bf16.mxu0 0
    %142 = vmatpush1.bf16.msra.mxu0 %v120
    %143 = vmatprep.subr.bf16.mxu0 0
    %144 = vmatpush1.bf16.msra.mxu0 %v121
    %145 = vmatprep.subr.bf16.mxu0 0
    %146 = vmatpush1.bf16.msra.mxu0 %v122
    %147 = vmatprep.subr.bf16.mxu0 0
    %148 = vmatpush1.bf16.msra.mxu0 0
    %149 = vmatprep.subr.bf16.mxu0 0
    %150 = vmatpush1.bf16.msra.mxu0 0
    %151 = vmatprep.subr.bf16.mxu0 0
    %152 = vmatpush1.bf16.msra.mxu0 0
    %153 = vmatprep.subr.bf16.mxu0 0
    %154 = vmatpush1.bf16.msra.mxu0 0
    %155 = vmatprep.subr.bf16.mxu0 0
    %156 = vmatpush1.bf16.msra.mxu0 0
    %157 = vmatprep.subr.bf16.mxu0 0
    %158 = vmatpush1.bf16.msra.mxu0 0
    %159 = vmatprep.subr.bf16.mxu0 0
    %160 = vmatpush1.bf16.msra.mxu0 0
    %161 = vmatprep.subr.bf16.mxu0 0
    %162 = vmatpush1.bf16.msra.mxu0 0
    %163 = vmatprep.mubr.bf16.mxu0 0
    %164 = vmatmul.mubr.bf16.gmra.mrb[0].mxu0 %v66
    %v165 = vpop.f32.mrb[0].mxu0
    %v166 = vadd.f32 0.0, %v165
    %v167 = vpop.f32.mrb[0].mxu0
    %v168 = vpop.f32.mrb[0].mxu0
    %v169 = vadd.f32 0.0, %v168
    %v170 = vpop.f32.mrb[0].mxu0
    %171 = vdwg.mxu0
    %vm172 = vcmp.ge.s32.totalorder %v53, 0
    %vm173 = vcmp.lt.s32.totalorder %v53, 32
    %vm174 = vmand %vm172, %vm173
    %v175 = vsel %vm174, 1, 0
    %v176 = vcvt.s32.f32 %v175
    %vm177 = vcmp.ge.s32.totalorder %v53, 32
    %vm178 = vcmp.lt.s32.totalorder %v53, 64
    %vm179 = vmand %vm177, %vm178
    %v180 = vsel %vm179, 1, 0
    %v181 = vcvt.s32.f32 %v180
    %vm182 = vcmp.ge.s32.totalorder %v53, 64
    %vm183 = vcmp.lt.s32.totalorder %v53, 96
    %vm184 = vmand %vm182, %vm183
    %v185 = vsel %vm184, 1, 0
    %v186 = vcvt.s32.f32 %v185
    %vm187 = vcmp.ge.s32.totalorder %v53, 96
    %vm188 = vcmp.lt.s32.totalorder %v53, 128
    %vm189 = vmand %vm187, %vm188
    %v190 = vsel %vm189, 1, 0
    %v191 = vcvt.s32.f32 %v190
    %v192 = vld [vmem:[#allocation2] sm:$0xff]
    %v193 = vld [vmem:[#allocation2 + $0x8] sm:$0xf]
    %v194 = vld [vmem:[#allocation2 + $0x18] sm:$0xff]
    %v195 = vld [vmem:[#allocation2 + $0x20] sm:$0xf]
    %v196 = vld [vmem:[#allocation2 + $0x30] sm:$0xff]
    %v197 = vld [vmem:[#allocation2 + $0x38] sm:$0xf]
    %v198 = vld [vmem:[#allocation2 + $0x48] sm:$0xff]
    %v199 = vld [vmem:[#allocation2 + $0x50] sm:$0xf]
    %v200 = vld [vmem:[#allocation2 + $0x60] sm:$0xff]
    %v201 = vld [vmem:[#allocation2 + $0x68] sm:$0xf]
    %v202 = vld [vmem:[#allocation2 + $0x78] sm:$0xff]
    %v203 = vld [vmem:[#allocation2 + $0x80] sm:$0xf]
    %v204 = vld [vmem:[#allocation2 + $0x90] sm:$0xff]
    %v205 = vld [vmem:[#allocation2 + $0x98] sm:$0xf]
    %v206 = vld [vmem:[#allocation2 + $0xa8] sm:$0xff]
    %v207 = vld [vmem:[#allocation2 + $0xb0] sm:$0xf]
    %v208 = vld [vmem:[#allocation2 + $0xc0] sm:$0xff]
    %v209 = vld [vmem:[#allocation2 + $0xc8] sm:$0xf]
    %v210 = vld [vmem:[#allocation2 + $0xd8] sm:$0xff]
    %v211 = vld [vmem:[#allocation2 + $0xe0] sm:$0xf]
    %v212 = vld [vmem:[#allocation2 + $0xf0] sm:$0xff]
    %v213 = vld [vmem:[#allocation2 + $0xf8] sm:$0xf]
    %v214 = vld [vmem:[#allocation2 + $0x108] sm:$0xff]
    %v215 = vld [vmem:[#allocation2 + $0x110] sm:$0xf]
    %v216 = vld [vmem:[#allocation2 + $0x120] sm:$0xff]
    %v217 = vld [vmem:[#allocation2 + $0x128] sm:$0xf]
    %v218 = vld [vmem:[#allocation2 + $0x138] sm:$0xff]
    %v219 = vld [vmem:[#allocation2 + $0x140] sm:$0xf]
    %v220 = vld [vmem:[#allocation2 + $0x150] sm:$0xff]
    %v221 = vld [vmem:[#allocation2 + $0x158] sm:$0xf]
    %v222 = vld [vmem:[#allocation2 + $0x168] sm:$0xff]
    %v223 = vld [vmem:[#allocation2 + $0x170] sm:$0xf]
    %v224 = vld [vmem:[#allocation2 + $0xc] sm:$0xf]
    %v225 = vld [vmem:[#allocation2 + $0x24] sm:$0xf]
    %v226 = vld [vmem:[#allocation2 + $0x3c] sm:$0xf]
    %v227 = vld [vmem:[#allocation2 + $0x54] sm:$0xf]
    %v228 = vld [vmem:[#allocation2 + $0x6c] sm:$0xf]
    %v229 = vld [vmem:[#allocation2 + $0x84] sm:$0xf]
    %v230 = vld [vmem:[#allocation2 + $0x9c] sm:$0xf]
    %v231 = vld [vmem:[#allocation2 + $0xb4] sm:$0xf]
    %v232 = vld [vmem:[#allocation2 + $0xcc] sm:$0xf]
    %v233 = vld [vmem:[#allocation2 + $0xe4] sm:$0xf]
    %v234 = vld [vmem:[#allocation2 + $0xfc] sm:$0xf]
    %v235 = vld [vmem:[#allocation2 + $0x114] sm:$0xf]
    %v236 = vld [vmem:[#allocation2 + $0x12c] sm:$0xf]
    %v237 = vld [vmem:[#allocation2 + $0x144] sm:$0xf]
    %v238 = vld [vmem:[#allocation2 + $0x15c] sm:$0xf]
    %v239 = vld [vmem:[#allocation2 + $0x174] sm:$0xf]
    %v240 = vld [vmem:[#allocation2 + $0x10] sm:$0xf]
    %v241 = vld [vmem:[#allocation2 + $0x28] sm:$0xf]
    %v242 = vld [vmem:[#allocation2 + $0x40] sm:$0xf]
    %v243 = vld [vmem:[#allocation2 + $0x58] sm:$0xf]
    %v244 = vld [vmem:[#allocation2 + $0x70] sm:$0xf]
    %v245 = vld [vmem:[#allocation2 + $0x88] sm:$0xf]
    %v246 = vld [vmem:[#allocation2 + $0xa0] sm:$0xf]
    %v247 = vld [vmem:[#allocation2 + $0xb8] sm:$0xf]
    %v248 = vld [vmem:[#allocation2 + $0xd0] sm:$0xf]
    %v249 = vld [vmem:[#allocation2 + $0xe8] sm:$0xf]
    %v250 = vld [vmem:[#allocation2 + $0x100] sm:$0xf]
    %v251 = vld [vmem:[#allocation2 + $0x118] sm:$0xf]
    %v252 = vld [vmem:[#allocation2 + $0x130] sm:$0xf]
    %v253 = vld [vmem:[#allocation2 + $0x148] sm:$0xf]
    %v254 = vld [vmem:[#allocation2 + $0x160] sm:$0xf]
    %v255 = vld [vmem:[#allocation2 + $0x178] sm:$0xf]
    %v256 = vld [vmem:[#allocation2 + $0x14] sm:$0xf]
    %v257 = vld [vmem:[#allocation2 + $0x2c] sm:$0xf]
    %v258 = vld [vmem:[#allocation2 + $0x44] sm:$0xf]
    %v259 = vld [vmem:[#allocation2 + $0x5c] sm:$0xf]
    %v260 = vld [vmem:[#allocation2 + $0x74] sm:$0xf]
    %v261 = vld [vmem:[#allocation2 + $0x8c] sm:$0xf]
    %v262 = vld [vmem:[#allocation2 + $0xa4] sm:$0xf]
    %v263 = vld [vmem:[#allocation2 + $0xbc] sm:$0xf]
    %v264 = vld [vmem:[#allocation2 + $0xd4] sm:$0xf]
    %v265 = vld [vmem:[#allocation2 + $0xec] sm:$0xf]
    %v266 = vld [vmem:[#allocation2 + $0x104] sm:$0xf]
    %v267 = vld [vmem:[#allocation2 + $0x11c] sm:$0xf]
    %v268 = vld [vmem:[#allocation2 + $0x134] sm:$0xf]
    %v269 = vld [vmem:[#allocation2 + $0x14c] sm:$0xf]
    %v270 = vld [vmem:[#allocation2 + $0x164] sm:$0xf]
    %v271 = vld [vmem:[#allocation2 + $0x17c] sm:$0xf]
    %v272 = vld [vmem:[%s3] sm:$0x7]
    %v273 = vld [vmem:[%s3 + $0x3] sm:$0x1]
    %v274 = vld [vmem:[%s3 + $0x4] sm:$0x1]
    %v275 = vld [vmem:[%s3 + $0x5] sm:$0x1]
    %v276 = vld [vmem:[%s3 + $0x6] sm:$0x1]
    %v277 = vld [vmem:[%s3 + $0x7] sm:$0x1]
    %v278 = vld [vmem:[%s3 + $0x8] sm:$0x1]
    %v279 = vld [vmem:[%s3 + $0x9] sm:$0x1]
    %v280 = vpack.c.bf16 %v169, %v166
    %v282 = vlaneseq
    %v283 = vshrl.u32 %v282, 7
    %v284 = vsub.s32 0, %v283
    %v285 = vrot.slane %v272, %v284
    %v286 = vlaneseq
    %v287 = vshrl.u32 %v286, 7
    %v288 = vsub.s32 1, %v287
    %v289 = vrot.slane %v272, %v288
    %v290 = vlaneseq
    %v291 = vshrl.u32 %v290, 7
    %v292 = vsub.s32 2, %v291
    %v293 = vrot.slane %v272, %v292
    %v329 = vunpack.c.l.b16 %v192
    %v330 = vunpack.c.h.b16 %v192
    %v331 = vunpack.c.l.b16 %v193
    %v332 = vunpack.c.l.b16 %v194
    %v333 = vunpack.c.h.b16 %v194
    %v334 = vunpack.c.l.b16 %v195
    %v335 = vunpack.c.l.b16 %v196
    %v336 = vunpack.c.h.b16 %v196
    %v337 = vunpack.c.l.b16 %v197
    %v338 = vunpack.c.l.b16 %v198
    %v339 = vunpack.c.h.b16 %v198
    %v340 = vunpack.c.l.b16 %v199
    %v341 = vunpack.c.l.b16 %v200
    %v342 = vunpack.c.h.b16 %v200
    %v343 = vunpack.c.l.b16 %v201
    %v344 = vunpack.c.l.b16 %v202
    %v345 = vunpack.c.h.b16 %v202
    %v346 = vunpack.c.l.b16 %v203
    %v347 = vunpack.c.l.b16 %v204
    %v348 = vunpack.c.h.b16 %v204
    %v349 = vunpack.c.l.b16 %v205
    %v350 = vunpack.c.l.b16 %v206
    %v351 = vunpack.c.h.b16 %v206
    %v352 = vunpack.c.l.b16 %v207
    %v353 = vunpack.c.l.b16 %v208
    %v354 = vunpack.c.h.b16 %v208
    %v355 = vunpack.c.l.b16 %v209
    %v356 = vunpack.c.l.b16 %v210
    %v357 = vunpack.c.h.b16 %v210
    %v358 = vunpack.c.l.b16 %v211
    %v359 = vunpack.c.l.b16 %v212
    %v360 = vunpack.c.h.b16 %v212
    %v361 = vunpack.c.l.b16 %v213
    %v362 = vunpack.c.l.b16 %v214
    %v363 = vunpack.c.h.b16 %v214
    %v364 = vunpack.c.l.b16 %v215
    %v365 = vunpack.c.l.b16 %v216
    %v366 = vunpack.c.h.b16 %v216
    %v367 = vunpack.c.l.b16 %v217
    %v368 = vunpack.c.l.b16 %v218
    %v369 = vunpack.c.h.b16 %v218
    %v370 = vunpack.c.l.b16 %v219
    %v371 = vunpack.c.l.b16 %v220
    %v372 = vunpack.c.h.b16 %v220
    %v373 = vunpack.c.l.b16 %v221
    %v374 = vunpack.c.l.b16 %v222
    %v375 = vunpack.c.h.b16 %v222
    %v376 = vunpack.c.l.b16 %v223
    %v377 = vpack.c.b16 %v332, %v329
    %v378 = vpack.c.b16 %v333, %v330
    %v379 = vpack.c.b16 %v334, %v331
    %v380 = vpack.c.b16 %v338, %v335
    %v381 = vpack.c.b16 %v339, %v336
    %v382 = vpack.c.b16 %v340, %v337
    %v383 = vpack.c.b16 %v344, %v341
    %v384 = vpack.c.b16 %v345, %v342
    %v385 = vpack.c.b16 %v346, %v343
    %v386 = vpack.c.b16 %v350, %v347
    %v387 = vpack.c.b16 %v351, %v348
    %v388 = vpack.c.b16 %v352, %v349
    %v389 = vpack.c.b16 %v356, %v353
    %v390 = vpack.c.b16 %v357, %v354
    %v391 = vpack.c.b16 %v358, %v355
    %v392 = vpack.c.b16 %v362, %v359
    %v393 = vpack.c.b16 %v363, %v360
    %v394 = vpack.c.b16 %v364, %v361
    %v395 = vpack.c.b16 %v368, %v365
    %v396 = vpack.c.b16 %v369, %v366
    %v397 = vpack.c.b16 %v370, %v367
    %v398 = vpack.c.b16 %v374, %v371
    %v399 = vpack.c.b16 %v375, %v372
    %v400 = vpack.c.b16 %v376, %v373
    %425 = vmatprep.subr.bf16.mxu0 %v378
    %426 = vmatpush1.bf16.msra.mxu0 %v377
    %427 = vmatprep.subr.bf16.mxu0 %v381
    %428 = vmatpush1.bf16.msra.mxu0 %v380
    %429 = vmatprep.subr.bf16.mxu0 %v384
    %430 = vmatpush1.bf16.msra.mxu0 %v383
    %431 = vmatprep.subr.bf16.mxu0 %v387
    %432 = vmatpush1.bf16.msra.mxu0 %v386
    %433 = vmatprep.subr.bf16.mxu0 %v390
    %434 = vmatpush1.bf16.msra.mxu0 %v389
    %435 = vmatprep.subr.bf16.mxu0 %v393
    %436 = vmatpush1.bf16.msra.mxu0 %v392
    %437 = vmatprep.subr.bf16.mxu0 %v396
    %438 = vmatpush1.bf16.msra.mxu0 %v395
    %439 = vmatprep.subr.bf16.mxu0 %v399
    %440 = vmatpush1.bf16.msra.mxu0 %v398
    %441 = vmatprep.subr.bf16.mxu0 0
    %442 = vmatpush1.bf16.msra.mxu0 0
    %443 = vmatprep.subr.bf16.mxu0 0
    %444 = vmatpush1.bf16.msra.mxu0 0
    %445 = vmatprep.subr.bf16.mxu0 0
    %446 = vmatpush1.bf16.msra.mxu0 0
    %447 = vmatprep.subr.bf16.mxu0 0
    %448 = vmatpush1.bf16.msra.mxu0 0
    %449 = vmatprep.subr.bf16.mxu0 0
    %450 = vmatpush1.bf16.msra.mxu0 0
    %451 = vmatprep.subr.bf16.mxu0 0
    %452 = vmatpush1.bf16.msra.mxu0 0
    %453 = vmatprep.subr.bf16.mxu0 0
    %454 = vmatpush1.bf16.msra.mxu0 0
    %455 = vmatprep.subr.bf16.mxu0 0
    %456 = vmatpush1.bf16.msra.mxu0 0
    %457 = vmatprep.mubr.bf16.mxu0 0
    %458 = vmatmul.mubr.bf16.gmra.mrb[0].mxu0 %v280
    %v459 = vpop.f32.mrb[0].mxu0
    %v460 = vadd.f32 %v285, %v459
    %v461 = vpop.f32.mrb[0].mxu0
    %v462 = vadd.f32 %v289, %v461
    %v463 = vpop.f32.mrb[0].mxu0
    %v464 = vadd.f32 %v285, %v463
    %v465 = vpop.f32.mrb[0].mxu0
    %v466 = vadd.f32 %v289, %v465
    %467 = vdwg.mxu0
    %468 = vmatprep.subr.bf16.mxu0 0
    %469 = vmatpush1.bf16.msra.mxu0 %v379
    %470 = vmatprep.subr.bf16.mxu0 0
    %471 = vmatpush1.bf16.msra.mxu0 %v382
    %472 = vmatprep.subr.bf16.mxu0 0
    %473 = vmatpush1.bf16.msra.mxu0 %v385
    %474 = vmatprep.subr.bf16.mxu0 0
    %475 = vmatpush1.bf16.msra.mxu0 %v388
    %476 = vmatprep.subr.bf16.mxu0 0
    %477 = vmatpush1.bf16.msra.mxu0 %v391
    %478 = vmatprep.subr.bf16.mxu0 0
    %479 = vmatpush1.bf16.msra.mxu0 %v394
    %480 = vmatprep.subr.bf16.mxu0 0
    %481 = vmatpush1.bf16.msra.mxu0 %v397
    %482 = vmatprep.subr.bf16.mxu0 0
    %483 = vmatpush1.bf16.msra.mxu0 %v400
    %484 = vmatprep.subr.bf16.mxu0 0
    %485 = vmatpush1.bf16.msra.mxu0 0
    %486 = vmatprep.subr.bf16.mxu0 0
    %487 = vmatpush1.bf16.msra.mxu0 0
    %488 = vmatprep.subr.bf16.mxu0 0
    %489 = vmatpush1.bf16.msra.mxu0 0
    %490 = vmatprep.subr.bf16.mxu0 0
    %491 = vmatpush1.bf16.msra.mxu0 0
    %492 = vmatprep.subr.bf16.mxu0 0
    %493 = vmatpush1.bf16.msra.mxu0 0
    %494 = vmatprep.subr.bf16.mxu0 0
    %495 = vmatpush1.bf16.msra.mxu0 0
    %496 = vmatprep.subr.bf16.mxu0 0
    %497 = vmatpush1.bf16.msra.mxu0 0
    %498 = vmatprep.subr.bf16.mxu0 0
    %499 = vmatpush1.bf16.msra.mxu0 0
    %500 = vmatprep.mubr.bf16.mxu0 0
    %501 = vmatmul.mubr.bf16.gmra.mrb[0].mxu0 %v280
    %v502 = vpop.f32.mrb[0].mxu0
    %v503 = vadd.f32 %v293, %v502
    %v504 = vpop.f32.mrb[0].mxu0
    %v505 = vpop.f32.mrb[0].mxu0
    %v506 = vadd.f32 %v293, %v505
    %v507 = vpop.f32.mrb[0].mxu0
    %508 = vdwg.mxu0
    %v509 = vmul.f32 %v460, %v176
    %v510 = vmul.f32 %v464, %v176
    %511 = vmatprep.subr.mxu0 0.0
    %512 = vmatpush1.xpose.msra.mxu0 %v462
    %513 = vmatprep.subr.mxu0 0.0
    %514 = vmatpush1.xpose.msra.mxu0 0.0
    %515 = vmatprep.subr.mxu0 0.0
    %516 = vmatpush1.xpose.msra.mxu0 0.0
    %517 = vmatprep.subr.mxu0 0.0
    %518 = vmatpush1.xpose.msra.mxu0 0.0
    %519 = vmatprep.subr.mxu0 0.0
    %520 = vmatpush1.xpose.msra.mxu0 0.0
    %521 = vmatprep.subr.mxu0 0.0
    %522 = vmatpush1.xpose.msra.mxu0 0.0
    %523 = vmatprep.subr.mxu0 0.0
    %524 = vmatpush1.xpose.msra.mxu0 0.0
    %525 = vmatprep.subr.mxu0 0.0
    %526 = vmatpush1.xpose.msra.mxu0 0.0
    %527 = vmatprep.subr.mxu0 0.0
    %528 = vmatpush1.xpose.msra.mxu0 0.0
    %529 = vmatprep.subr.mxu0 0.0
    %530 = vmatpush1.xpose.msra.mxu0 0.0
    %531 = vmatprep.subr.mxu0 0.0
    %532 = vmatpush1.xpose.msra.mxu0 0.0
    %533 = vmatprep.subr.mxu0 0.0
    %534 = vmatpush1.xpose.msra.mxu0 0.0
    %535 = vmatprep.subr.mxu0 0.0
    %536 = vmatpush1.xpose.msra.mxu0 0.0
    %537 = vmatprep.subr.mxu0 0.0
    %538 = vmatpush1.xpose.msra.mxu0 0.0
    %539 = vmatprep.subr.mxu0 0.0
    %540 = vmatpush1.xpose.msra.mxu0 0.0
    %541 = vmatprep.subr.mxu0 0.0
    %542 = vmatpush1.xpose.msra.mxu0 0.0
    %543 = vmatprep.subr.mxu0 0.0
    %544 = vmatpush1.xpose.msra.mxu0 0.0
    %545 = vmatprep.subr.mxu0 0.0
    %546 = vmatpush1.xpose.msra.mxu0 0.0
    %547 = vmatprep.subr.mxu0 0.0
    %548 = vmatpush1.xpose.msra.mxu0 0.0
    %549 = vmatprep.subr.mxu0 0.0
    %550 = vmatpush1.xpose.msra.mxu0 0.0
    %551 = vmatprep.subr.mxu0 0.0
    %552 = vmatpush1.xpose.msra.mxu0 0.0
    %553 = vmatprep.subr.mxu0 0.0
    %554 = vmatpush1.xpose.msra.mxu0 0.0
    %555 = vmatprep.subr.mxu0 0.0
    %556 = vmatpush1.xpose.msra.mxu0 0.0
    %557 = vmatprep.subr.mxu0 0.0
    %558 = vmatpush1.xpose.msra.mxu0 0.0
    %559 = vmatprep.subr.mxu0 0.0
    %560 = vmatpush1.xpose.msra.mxu0 0.0
    %561 = vmatprep.subr.mxu0 0.0
    %562 = vmatpush1.xpose.msra.mxu0 0.0
    %563 = vmatprep.subr.mxu0 0.0
    %564 = vmatpush1.xpose.msra.mxu0 0.0
    %565 = vmatprep.subr.mxu0 0.0
    %566 = vmatpush1.xpose.msra.mxu0 0.0
    %567 = vmatprep.subr.mxu0 0.0
    %568 = vmatpush1.xpose.msra.mxu0 0.0
    %569 = vmatprep.subr.mxu0 0.0
    %570 = vmatpush1.xpose.msra.mxu0 0.0
    %571 = vmatprep.subr.mxu0 0.0
    %572 = vmatpush1.xpose.msra.mxu0 0.0
    %573 = vmatprep.subr.mxu0 0.0
    %574 = vmatpush1.xpose.msra.mxu0 0.0
    %575 = vmatprep.mubr.f32.mxu0 0.0
    %576 = vmatmul.mubr.f32.gmra.mrb[0].mxu0 %v509
    %v577 = vpop.f32.mrb[0].mxu0
    %v578 = vadd.f32 0.0, %v577
    %v579 = vpop.f32.mrb[0].mxu0
    %580 = vdwg.mxu0
    %581 = vmatprep.subr.mxu0 0.0
    %582 = vmatpush1.xpose.msra.mxu0 %v466
    %583 = vmatprep.subr.mxu0 0.0
    %584 = vmatpush1.xpose.msra.mxu0 0.0
    %585 = vmatprep.subr.mxu0 0.0
    %586 = vmatpush1.xpose.msra.mxu0 0.0
    %587 = vmatprep.subr.mxu0 0.0
    %588 = vmatpush1.xpose.msra.mxu0 0.0
    %589 = vmatprep.subr.mxu0 0.0
    %590 = vmatpush1.xpose.msra.mxu0 0.0
    %591 = vmatprep.subr.mxu0 0.0
    %592 = vmatpush1.xpose.msra.mxu0 0.0
    %593 = vmatprep.subr.mxu0 0.0
    %594 = vmatpush1.xpose.msra.mxu0 0.0
    %595 = vmatprep.subr.mxu0 0.0
    %596 = vmatpush1.xpose.msra.mxu0 0.0
    %597 = vmatprep.subr.mxu0 0.0
    %598 = vmatpush1.xpose.msra.mxu0 0.0
    %599 = vmatprep.subr.mxu0 0.0
    %600 = vmatpush1.xpose.msra.mxu0 0.0
    %601 = vmatprep.subr.mxu0 0.0
    %602 = vmatpush1.xpose.msra.mxu0 0.0
    %603 = vmatprep.subr.mxu0 0.0
    %604 = vmatpush1.xpose.msra.mxu0 0.0
    %605 = vmatprep.subr.mxu0 0.0
    %606 = vmatpush1.xpose.msra.mxu0 0.0
    %607 = vmatprep.subr.mxu0 0.0
    %608 = vmatpush1.xpose.msra.mxu0 0.0
    %609 = vmatprep.subr.mxu0 0.0
    %610 = vmatpush1.xpose.msra.mxu0 0.0
    %611 = vmatprep.subr.mxu0 0.0
    %612 = vmatpush1.xpose.msra.mxu0 0.0
    %613 = vmatprep.subr.mxu0 0.0
    %614 = vmatpush1.xpose.msra.mxu0 0.0
    %615 = vmatprep.subr.mxu0 0.0
    %616 = vmatpush1.xpose.msra.mxu0 0.0
    %617 = vmatprep.subr.mxu0 0.0
    %618 = vmatpush1.xpose.msra.mxu0 0.0
    %619 = vmatprep.subr.mxu0 0.0
    %620 = vmatpush1.xpose.msra.mxu0 0.0
    %621 = vmatprep.subr.mxu0 0.0
    %622 = vmatpush1.xpose.msra.mxu0 0.0
    %623 = vmatprep.subr.mxu0 0.0
    %624 = vmatpush1.xpose.msra.mxu0 0.0
    %625 = vmatprep.subr.mxu0 0.0
    %626 = vmatpush1.xpose.msra.mxu0 0.0
    %627 = vmatprep.subr.mxu0 0.0
    %628 = vmatpush1.xpose.msra.mxu0 0.0
    %629 = vmatprep.subr.mxu0 0.0
    %630 = vmatpush1.xpose.msra.mxu0 0.0
    %631 = vmatprep.subr.mxu0 0.0
    %632 = vmatpush1.xpose.msra.mxu0 0.0
    %633 = vmatprep.subr.mxu0 0.0
    %634 = vmatpush1.xpose.msra.mxu0 0.0
    %635 = vmatprep.subr.mxu0 0.0
    %636 = vmatpush1.xpose.msra.mxu0 0.0
    %637 = vmatprep.subr.mxu0 0.0
    %638 = vmatpush1.xpose.msra.mxu0 0.0
    %639 = vmatprep.subr.mxu0 0.0
    %640 = vmatpush1.xpose.msra.mxu0 0.0
    %641 = vmatprep.subr.mxu0 0.0
    %642 = vmatpush1.xpose.msra.mxu0 0.0
    %643 = vmatprep.subr.mxu0 0.0
    %644 = vmatpush1.xpose.msra.mxu0 0.0
    %645 = vmatprep.mubr.f32.mxu0 0.0
    %646 = vmatmul.mubr.f32.gmra.mrb[0].mxu0 %v510
    %v647 = vpop.f32.mrb[0].mxu0
    %v648 = vadd.f32 0.0, %v647
    %v649 = vpop.f32.mrb[0].mxu0
    %650 = vdwg.mxu0
    %vm651 = vcmask 64512
    %v652 = vsel %vm651, %v578, -inf
    %653 = vmax.xlane.f32.xlu0 %v652
    %v654 = vpop.xlane.xlu0 %653
    %v655 = vsel %vm651, %v648, -inf
    %656 = vmax.xlane.f32.xlu0 %v655
    %v657 = vpop.xlane.xlu0 %656
    %v658 = vsub.f32 %v578, %v654
    %v659 = vsub.f32 %v648, %v657
    %v660 = vmul.f32 %v658, 1.442695
    %v661 = vpow.pop %v660
    %v662 = vmul.f32 %v659, 1.442695
    %v663 = vpow.pop %v662
    %v664 = vsel %vm651, %v661, 0.0
    %665 = vadd.xlane.f32.xlu0 %v664
    %v666 = vpop.xlane.xlu0 %665
    %v667 = vsel %vm651, %v663, 0.0
    %668 = vadd.xlane.f32.xlu0 %v667
    %v669 = vpop.xlane.xlu0 %668
    %v670 = vrcp.pop %v666
    %v671 = vmul.f32 %v661, %v670
    %v672 = vrcp.pop %v669
    %v673 = vmul.f32 %v663, %v672
    %v674 = vmul.f32 %v503, %v176
    %v675 = vmul.f32 %v506, %v176
    %v676 = vmul.f32 %v460, %v181
    %v677 = vmul.f32 %v464, %v181
    %678 = vmatprep.subr.mxu0 0.0
    %679 = vmatpush1.xpose.msra.mxu0 %v462
    %680 = vmatprep.subr.mxu0 0.0
    %681 = vmatpush1.xpose.msra.mxu0 0.0
    %682 = vmatprep.subr.mxu0 0.0
    %683 = vmatpush1.xpose.msra.mxu0 0.0
    %684 = vmatprep.subr.mxu0 0.0
    %685 = vmatpush1.xpose.msra.mxu0 0.0
    %686 = vmatprep.subr.mxu0 0.0
    %687 = vmatpush1.xpose.msra.mxu0 0.0
    %688 = vmatprep.subr.mxu0 0.0
    %689 = vmatpush1.xpose.msra.mxu0 0.0
    %690 = vmatprep.subr.mxu0 0.0
    %691 = vmatpush1.xpose.msra.mxu0 0.0
    %692 = vmatprep.subr.mxu0 0.0
    %693 = vmatpush1.xpose.msra.mxu0 0.0
    %694 = vmatprep.subr.mxu0 0.0
    %695 = vmatpush1.xpose.msra.mxu0 0.0
    %696 = vmatprep.subr.mxu0 0.0
    %697 = vmatpush1.xpose.msra.mxu0 0.0
    %698 = vmatprep.subr.mxu0 0.0
    %699 = vmatpush1.xpose.msra.mxu0 0.0
    %700 = vmatprep.subr.mxu0 0.0
    %701 = vmatpush1.xpose.msra.mxu0 0.0
    %702 = vmatprep.subr.mxu0 0.0
    %703 = vmatpush1.xpose.msra.mxu0 0.0
    %704 = vmatprep.subr.mxu0 0.0
    %705 = vmatpush1.xpose.msra.mxu0 0.0
    %706 = vmatprep.subr.mxu0 0.0
    %707 = vmatpush1.xpose.msra.mxu0 0.0
    %708 = vmatprep.subr.mxu0 0.0
    %709 = vmatpush1.xpose.msra.mxu0 0.0
    %710 = vmatprep.subr.mxu0 0.0
    %711 = vmatpush1.xpose.msra.mxu0 0.0
    %712 = vmatprep.subr.mxu0 0.0
    %713 = vmatpush1.xpose.msra.mxu0 0.0
    %714 = vmatprep.subr.mxu0 0.0
    %715 = vmatpush1.xpose.msra.mxu0 0.0
    %716 = vmatprep.subr.mxu0 0.0
    %717 = vmatpush1.xpose.msra.mxu0 0.0
    %718 = vmatprep.subr.mxu0 0.0
    %719 = vmatpush1.xpose.msra.mxu0 0.0
    %720 = vmatprep.subr.mxu0 0.0
    %721 = vmatpush1.xpose.msra.mxu0 0.0
    %722 = vmatprep.subr.mxu0 0.0
    %723 = vmatpush1.xpose.msra.mxu0 0.0
    %724 = vmatprep.subr.mxu0 0.0
    %725 = vmatpush1.xpose.msra.mxu0 0.0
    %726 = vmatprep.subr.mxu0 0.0
    %727 = vmatpush1.xpose.msra.mxu0 0.0
    %728 = vmatprep.subr.mxu0 0.0
    %729 = vmatpush1.xpose.msra.mxu0 0.0
    %730 = vmatprep.subr.mxu0 0.0
    %731 = vmatpush1.xpose.msra.mxu0 0.0
    %732 = vmatprep.subr.mxu0 0.0
    %733 = vmatpush1.xpose.msra.mxu0 0.0
    %734 = vmatprep.subr.mxu0 0.0
    %735 = vmatpush1.xpose.msra.mxu0 0.0
    %736 = vmatprep.subr.mxu0 0.0
    %737 = vmatpush1.xpose.msra.mxu0 0.0
    %738 = vmatprep.subr.mxu0 0.0
    %739 = vmatpush1.xpose.msra.mxu0 0.0
    %740 = vmatprep.subr.mxu0 0.0
    %741 = vmatpush1.xpose.msra.mxu0 0.0
    %742 = vmatprep.mubr.f32.mxu0 0.0
    %743 = vmatmul.mubr.f32.gmra.mrb[0].mxu0 %v676
    %v744 = vpop.f32.mrb[0].mxu0
    %v745 = vadd.f32 0.0, %v744
    %v746 = vpop.f32.mrb[0].mxu0
    %747 = vdwg.mxu0
    %748 = vmatprep.subr.mxu0 0.0
    %749 = vmatpush1.xpose.msra.mxu0 %v466
    %750 = vmatprep.subr.mxu0 0.0
    %751 = vmatpush1.xpose.msra.mxu0 0.0
    %752 = vmatprep.subr.mxu0 0.0
    %753 = vmatpush1.xpose.msra.mxu0 0.0
    %754 = vmatprep.subr.mxu0 0.0
    %755 = vmatpush1.xpose.msra.mxu0 0.0
    %756 = vmatprep.subr.mxu0 0.0
    %757 = vmatpush1.xpose.msra.mxu0 0.0
    %758 = vmatprep.subr.mxu0 0.0
    %759 = vmatpush1.xpose.msra.mxu0 0.0
    %760 = vmatprep.subr.mxu0 0.0
    %761 = vmatpush1.xpose.msra.mxu0 0.0
    %762 = vmatprep.subr.mxu0 0.0
    %763 = vmatpush1.xpose.msra.mxu0 0.0
    %764 = vmatprep.subr.mxu0 0.0
    %765 = vmatpush1.xpose.msra.mxu0 0.0
    %766 = vmatprep.subr.mxu0 0.0
    %767 = vmatpush1.xpose.msra.mxu0 0.0
    %768 = vmatprep.subr.mxu0 0.0
    %769 = vmatpush1.xpose.msra.mxu0 0.0
    %770 = vmatprep.subr.mxu0 0.0
    %771 = vmatpush1.xpose.msra.mxu0 0.0
    %772 = vmatprep.subr.mxu0 0.0
    %773 = vmatpush1.xpose.msra.mxu0 0.0
    %774 = vmatprep.subr.mxu0 0.0
    %775 = vmatpush1.xpose.msra.mxu0 0.0
    %776 = vmatprep.subr.mxu0 0.0
    %777 = vmatpush1.xpose.msra.mxu0 0.0
    %778 = vmatprep.subr.mxu0 0.0
    %779 = vmatpush1.xpose.msra.mxu0 0.0
    %780 = vmatprep.subr.mxu0 0.0
    %781 = vmatpush1.xpose.msra.mxu0 0.0
    %782 = vmatprep.subr.mxu0 0.0
    %783 = vmatpush1.xpose.msra.mxu0 0.0
    %784 = vmatprep.subr.mxu0 0.0
    %785 = vmatpush1.xpose.msra.mxu0 0.0
    %786 = vmatprep.subr.mxu0 0.0
    %787 = vmatpush1.xpose.msra.mxu0 0.0
    %788 = vmatprep.subr.mxu0 0.0
    %789 = vmatpush1.xpose.msra.mxu0 0.0
    %790 = vmatprep.subr.mxu0 0.0
    %791 = vmatpush1.xpose.msra.mxu0 0.0
    %792 = vmatprep.subr.mxu0 0.0
    %793 = vmatpush1.xpose.msra.mxu0 0.0
    %794 = vmatprep.subr.mxu0 0.0
    %795 = vmatpush1.xpose.msra.mxu0 0.0
    %796 = vmatprep.subr.mxu0 0.0
    %797 = vmatpush1.xpose.msra.mxu0 0.0
    %798 = vmatprep.subr.mxu0 0.0
    %799 = vmatpush1.xpose.msra.mxu0 0.0
    %800 = vmatprep.subr.mxu0 0.0
    %801 = vmatpush1.xpose.msra.mxu0 0.0
    %802 = vmatprep.subr.mxu0 0.0
    %803 = vmatpush1.xpose.msra.mxu0 0.0
    %804 = vmatprep.subr.mxu0 0.0
    %805 = vmatpush1.xpose.msra.mxu0 0.0
    %806 = vmatprep.subr.mxu0 0.0
    %807 = vmatpush1.xpose.msra.mxu0 0.0
    %808 = vmatprep.subr.mxu0 0.0
    %809 = vmatpush1.xpose.msra.mxu0 0.0
    %810 = vmatprep.subr.mxu0 0.0
    %811 = vmatpush1.xpose.msra.mxu0 0.0
    %812 = vmatprep.mubr.f32.mxu0 0.0
    %813 = vmatmul.mubr.f32.gmra.mrb[0].mxu0 %v677
    %v814 = vpop.f32.mrb[0].mxu0
    %v815 = vadd.f32 0.0, %v814
    %v816 = vpop.f32.mrb[0].mxu0
    %817 = vdwg.mxu0
    %v818 = vsel %vm651, %v745, -inf
    %819 = vmax.xlane.f32.xlu0 %v818
    %v820 = vpop.xlane.xlu0 %819
    %v821 = vsel %vm651, %v815, -inf
    %822 = vmax.xlane.f32.xlu0 %v821
    %v823 = vpop.xlane.xlu0 %822
    %v824 = vsub.f32 %v745, %v820
    %v825 = vsub.f32 %v815, %v823
    %v826 = vmul.f32 %v824, 1.442695
    %v827 = vpow.pop %v826
    %v828 = vmul.f32 %v825, 1.442695
    %v829 = vpow.pop %v828
    %v830 = vsel %vm651, %v827, 0.0
    %831 = vadd.xlane.f32.xlu0 %v830
    %v832 = vpop.xlane.xlu0 %831
    %v833 = vsel %vm651, %v829, 0.0
    %834 = vadd.xlane.f32.xlu0 %v833
    %v835 = vpop.xlane.xlu0 %834
    %v836 = vrcp.pop %v832
    %v837 = vmul.f32 %v827, %v836
    %v838 = vrcp.pop %v835
    %v839 = vmul.f32 %v829, %v838
    %v840 = vmul.f32 %v503, %v181
    %v841 = vmul.f32 %v506, %v181
    %v843 = vsel %vm651, %v837, 0
    %845 = vmatprep.subr.mxu0 0.0
    %846 = vmatpush1.msra.mxu0 %v840
    %847 = vmatprep.subr.mxu0 0.0
    %848 = vmatpush1.msra.mxu0 0.0
    %849 = vmatprep.subr.mxu0 0.0
    %850 = vmatpush1.msra.mxu0 0.0
    %851 = vmatprep.subr.mxu0 0.0
    %852 = vmatpush1.msra.mxu0 0.0
    %853 = vmatprep.subr.mxu0 0.0
    %854 = vmatpush1.msra.mxu0 0.0
    %855 = vmatprep.subr.mxu0 0.0
    %856 = vmatpush1.msra.mxu0 0.0
    %857 = vmatprep.subr.mxu0 0.0
    %858 = vmatpush1.msra.mxu0 0.0
    %859 = vmatprep.subr.mxu0 0.0
    %860 = vmatpush1.msra.mxu0 0.0
    %861 = vmatprep.subr.mxu0 0.0
    %862 = vmatpush1.msra.mxu0 0.0
    %863 = vmatprep.subr.mxu0 0.0
    %864 = vmatpush1.msra.mxu0 0.0
    %865 = vmatprep.subr.mxu0 0.0
    %866 = vmatpush1.msra.mxu0 0.0
    %867 = vmatprep.subr.mxu0 0.0
    %868 = vmatpush1.msra.mxu0 0.0
    %869 = vmatprep.subr.mxu0 0.0
    %870 = vmatpush1.msra.mxu0 0.0
    %871 = vmatprep.subr.mxu0 0.0
    %872 = vmatpush1.msra.mxu0 0.0
    %873 = vmatprep.subr.mxu0 0.0
    %874 = vmatpush1.msra.mxu0 0.0
    %875 = vmatprep.subr.mxu0 0.0
    %876 = vmatpush1.msra.mxu0 0.0
    %877 = vmatprep.subr.mxu0 0.0
    %878 = vmatpush1.msra.mxu0 0.0
    %879 = vmatprep.subr.mxu0 0.0
    %880 = vmatpush1.msra.mxu0 0.0
    %881 = vmatprep.subr.mxu0 0.0
    %882 = vmatpush1.msra.mxu0 0.0
    %883 = vmatprep.subr.mxu0 0.0
    %884 = vmatpush1.msra.mxu0 0.0
    %885 = vmatprep.subr.mxu0 0.0
    %886 = vmatpush1.msra.mxu0 0.0
    %887 = vmatprep.subr.mxu0 0.0
    %888 = vmatpush1.msra.mxu0 0.0
    %889 = vmatprep.subr.mxu0 0.0
    %890 = vmatpush1.msra.mxu0 0.0
    %891 = vmatprep.subr.mxu0 0.0
    %892 = vmatpush1.msra.mxu0 0.0
    %893 = vmatprep.subr.mxu0 0.0
    %894 = vmatpush1.msra.mxu0 0.0
    %895 = vmatprep.subr.mxu0 0.0
    %896 = vmatpush1.msra.mxu0 0.0
    %897 = vmatprep.subr.mxu0 0.0
    %898 = vmatpush1.msra.mxu0 0.0
    %899 = vmatprep.subr.mxu0 0.0
    %900 = vmatpush1.msra.mxu0 0.0
    %901 = vmatprep.subr.mxu0 0.0
    %902 = vmatpush1.msra.mxu0 0.0
    %903 = vmatprep.subr.mxu0 0.0
    %904 = vmatpush1.msra.mxu0 0.0
    %905 = vmatprep.subr.mxu0 0.0
    %906 = vmatpush1.msra.mxu0 0.0
    %907 = vmatprep.subr.mxu0 0.0
    %908 = vmatpush1.msra.mxu0 0.0
    %909 = vmatprep.mubr.f32.mxu0 0.0
    %910 = vmatmul.mubr.f32.gmra.mrb[0].mxu0 %v843
    %v911 = vpop.f32.mrb[0].mxu0
    %v912 = vadd.f32 0.0, %v911
    %v913 = vpop.f32.mrb[0].mxu0
    %914 = vdwg.mxu0
    %v916 = vsel %vm651, %v839, 0
    %918 = vmatprep.subr.mxu0 0.0
    %919 = vmatpush1.msra.mxu0 %v841
    %920 = vmatprep.subr.mxu0 0.0
    %921 = vmatpush1.msra.mxu0 0.0
    %922 = vmatprep.subr.mxu0 0.0
    %923 = vmatpush1.msra.mxu0 0.0
    %924 = vmatprep.subr.mxu0 0.0
    %925 = vmatpush1.msra.mxu0 0.0
    %926 = vmatprep.subr.mxu0 0.0
    %927 = vmatpush1.msra.mxu0 0.0
    %928 = vmatprep.subr.mxu0 0.0
    %929 = vmatpush1.msra.mxu0 0.0
    %930 = vmatprep.subr.mxu0 0.0
    %931 = vmatpush1.msra.mxu0 0.0
    %932 = vmatprep.subr.mxu0 0.0
    %933 = vmatpush1.msra.mxu0 0.0
    %934 = vmatprep.subr.mxu0 0.0
    %935 = vmatpush1.msra.mxu0 0.0
    %936 = vmatprep.subr.mxu0 0.0
    %937 = vmatpush1.msra.mxu0 0.0
    %938 = vmatprep.subr.mxu0 0.0
    %939 = vmatpush1.msra.mxu0 0.0
    %940 = vmatprep.subr.mxu0 0.0
    %941 = vmatpush1.msra.mxu0 0.0
    %942 = vmatprep.subr.mxu0 0.0
    %943 = vmatpush1.msra.mxu0 0.0
    %944 = vmatprep.subr.mxu0 0.0
    %945 = vmatpush1.msra.mxu0 0.0
    %946 = vmatprep.subr.mxu0 0.0
    %947 = vmatpush1.msra.mxu0 0.0
    %948 = vmatprep.subr.mxu0 0.0
    %949 = vmatpush1.msra.mxu0 0.0
    %950 = vmatprep.subr.mxu0 0.0
    %951 = vmatpush1.msra.mxu0 0.0
    %952 = vmatprep.subr.mxu0 0.0
    %953 = vmatpush1.msra.mxu0 0.0
    %954 = vmatprep.subr.mxu0 0.0
    %955 = vmatpush1.msra.mxu0 0.0
    %956 = vmatprep.subr.mxu0 0.0
    %957 = vmatpush1.msra.mxu0 0.0
    %958 = vmatprep.subr.mxu0 0.0
    %959 = vmatpush1.msra.mxu0 0.0
    %960 = vmatprep.subr.mxu0 0.0
    %961 = vmatpush1.msra.mxu0 0.0
    %962 = vmatprep.subr.mxu0 0.0
    %963 = vmatpush1.msra.mxu0 0.0
    %964 = vmatprep.subr.mxu0 0.0
    %965 = vmatpush1.msra.mxu0 0.0
    %966 = vmatprep.subr.mxu0 0.0
    %967 = vmatpush1.msra.mxu0 0.0
    %968 = vmatprep.subr.mxu0 0.0
    %969 = vmatpush1.msra.mxu0 0.0
    %970 = vmatprep.subr.mxu0 0.0
    %971 = vmatpush1.msra.mxu0 0.0
    %972 = vmatprep.subr.mxu0 0.0
    %973 = vmatpush1.msra.mxu0 0.0
    %974 = vmatprep.subr.mxu0 0.0
    %975 = vmatpush1.msra.mxu0 0.0
    %976 = vmatprep.subr.mxu0 0.0
    %977 = vmatpush1.msra.mxu0 0.0
    %978 = vmatprep.subr.mxu0 0.0
    %979 = vmatpush1.msra.mxu0 0.0
    %980 = vmatprep.subr.mxu0 0.0
    %981 = vmatpush1.msra.mxu0 0.0
    %982 = vmatprep.mubr.f32.mxu0 0.0
    %983 = vmatmul.mubr.f32.gmra.mrb[0].mxu0 %v916
    %v984 = vpop.f32.mrb[0].mxu0
    %v985 = vadd.f32 0.0, %v984
    %v986 = vpop.f32.mrb[0].mxu0
    %987 = vdwg.mxu0
    %v989 = vsel %vm651, %v671, 0
    %991 = vmatprep.subr.mxu0 0.0
    %992 = vmatpush1.msra.mxu0 %v674
    %993 = vmatprep.subr.mxu0 0.0
    %994 = vmatpush1.msra.mxu0 0.0
    %995 = vmatprep.subr.mxu0 0.0
    %996 = vmatpush1.msra.mxu0 0.0
    %997 = vmatprep.subr.mxu0 0.0
    %998 = vmatpush1.msra.mxu0 0.0
    %999 = vmatprep.subr.mxu0 0.0
    %1000 = vmatpush1.msra.mxu0 0.0
    %1001 = vmatprep.subr.mxu0 0.0
    %1002 = vmatpush1.msra.mxu0 0.0
    %1003 = vmatprep.subr.mxu0 0.0
    %1004 = vmatpush1.msra.mxu0 0.0
    %1005 = vmatprep.subr.mxu0 0.0
    %1006 = vmatpush1.msra.mxu0 0.0
    %1007 = vmatprep.subr.mxu0 0.0
    %1008 = vmatpush1.msra.mxu0 0.0
    %1009 = vmatprep.subr.mxu0 0.0
    %1010 = vmatpush1.msra.mxu0 0.0
    %1011 = vmatprep.subr.mxu0 0.0
    %1012 = vmatpush1.msra.mxu0 0.0
    %1013 = vmatprep.subr.mxu0 0.0
    %1014 = vmatpush1.msra.mxu0 0.0
    %1015 = vmatprep.subr.mxu0 0.0
    %1016 = vmatpush1.msra.mxu0 0.0
    %1017 = vmatprep.subr.mxu0 0.0
    %1018 = vmatpush1.msra.mxu0 0.0
    %1019 = vmatprep.subr.mxu0 0.0
    %1020 = vmatpush1.msra.mxu0 0.0
    %1021 = vmatprep.subr.mxu0 0.0
    %1022 = vmatpush1.msra.mxu0 0.0
    %1023 = vmatprep.subr.mxu0 0.0
    %1024 = vmatpush1.msra.mxu0 0.0
    %1025 = vmatprep.subr.mxu0 0.0
    %1026 = vmatpush1.msra.mxu0 0.0
    %1027 = vmatprep.subr.mxu0 0.0
    %1028 = vmatpush1.msra.mxu0 0.0
    %1029 = vmatprep.subr.mxu0 0.0
    %1030 = vmatpush1.msra.mxu0 0.0
    %1031 = vmatprep.subr.mxu0 0.0
    %1032 = vmatpush1.msra.mxu0 0.0
    %1033 = vmatprep.subr.mxu0 0.0
    %1034 = vmatpush1.msra.mxu0 0.0
    %1035 = vmatprep.subr.mxu0 0.0
    %1036 = vmatpush1.msra.mxu0 0.0
    %1037 = vmatprep.subr.mxu0 0.0
    %1038 = vmatpush1.msra.mxu0 0.0
    %1039 = vmatprep.subr.mxu0 0.0
    %1040 = vmatpush1.msra.mxu0 0.0
    %1041 = vmatprep.subr.mxu0 0.0
    %1042 = vmatpush1.msra.mxu0 0.0
    %1043 = vmatprep.subr.mxu0 0.0
    %1044 = vmatpush1.msra.mxu0 0.0
    %1045 = vmatprep.subr.mxu0 0.0
    %1046 = vmatpush1.msra.mxu0 0.0
    %1047 = vmatprep.subr.mxu0 0.0
    %1048 = vmatpush1.msra.mxu0 0.0
    %1049 = vmatprep.subr.mxu0 0.0
    %1050 = vmatpush1.msra.mxu0 0.0
    %1051 = vmatprep.subr.mxu0 0.0
    %1052 = vmatpush1.msra.mxu0 0.0
    %1053 = vmatprep.subr.mxu0 0.0
    %1054 = vmatpush1.msra.mxu0 0.0
    %1055 = vmatprep.mubr.f32.mxu0 0.0
    %1056 = vmatmul.mubr.f32.gmra.mrb[0].mxu0 %v989
    %v1057 = vpop.f32.mrb[0].mxu0
    %v1058 = vadd.f32 %v912, %v1057
    %v1059 = vpop.f32.mrb[0].mxu0
    %1060 = vdwg.mxu0
    %v1062 = vsel %vm651, %v673, 0
    %1064 = vmatprep.subr.mxu0 0.0
    %1065 = vmatpush1.msra.mxu0 %v675
    %1066 = vmatprep.subr.mxu0 0.0
    %1067 = vmatpush1.msra.mxu0 0.0
    %1068 = vmatprep.subr.mxu0 0.0
    %1069 = vmatpush1.msra.mxu0 0.0
    %1070 = vmatprep.subr.mxu0 0.0
    %1071 = vmatpush1.msra.mxu0 0.0
    %1072 = vmatprep.subr.mxu0 0.0
    %1073 = vmatpush1.msra.mxu0 0.0
    %1074 = vmatprep.subr.mxu0 0.0
    %1075 = vmatpush1.msra.mxu0 0.0
    %1076 = vmatprep.subr.mxu0 0.0
    %1077 = vmatpush1.msra.mxu0 0.0
    %1078 = vmatprep.subr.mxu0 0.0
    %1079 = vmatpush1.msra.mxu0 0.0
    %1080 = vmatprep.subr.mxu0 0.0
    %1081 = vmatpush1.msra.mxu0 0.0
    %1082 = vmatprep.subr.mxu0 0.0
    %1083 = vmatpush1.msra.mxu0 0.0
    %1084 = vmatprep.subr.mxu0 0.0
    %1085 = vmatpush1.msra.mxu0 0.0
    %1086 = vmatprep.subr.mxu0 0.0
    %1087 = vmatpush1.msra.mxu0 0.0
    %1088 = vmatprep.subr.mxu0 0.0
    %1089 = vmatpush1.msra.mxu0 0.0
    %1090 = vmatprep.subr.mxu0 0.0
    %1091 = vmatpush1.msra.mxu0 0.0
    %1092 = vmatprep.subr.mxu0 0.0
    %1093 = vmatpush1.msra.mxu0 0.0
    %1094 = vmatprep.subr.mxu0 0.0
    %1095 = vmatpush1.msra.mxu0 0.0
    %1096 = vmatprep.subr.mxu0 0.0
    %1097 = vmatpush1.msra.mxu0 0.0
    %1098 = vmatprep.subr.mxu0 0.0
    %1099 = vmatpush1.msra.mxu0 0.0
    %1100 = vmatprep.subr.mxu0 0.0
    %1101 = vmatpush1.msra.mxu0 0.0
    %1102 = vmatprep.subr.mxu0 0.0
    %1103 = vmatpush1.msra.mxu0 0.0
    %1104 = vmatprep.subr.mxu0 0.0
    %1105 = vmatpush1.msra.mxu0 0.0
    %1106 = vmatprep.subr.mxu0 0.0
    %1107 = vmatpush1.msra.mxu0 0.0
    %1108 = vmatprep.subr.mxu0 0.0
    %1109 = vmatpush1.msra.mxu0 0.0
    %1110 = vmatprep.subr.mxu0 0.0
    %1111 = vmatpush1.msra.mxu0 0.0
    %1112 = vmatprep.subr.mxu0 0.0
    %1113 = vmatpush1.msra.mxu0 0.0
    %1114 = vmatprep.subr.mxu0 0.0
    %1115 = vmatpush1.msra.mxu0 0.0
    %1116 = vmatprep.subr.mxu0 0.0
    %1117 = vmatpush1.msra.mxu0 0.0
    %1118 = vmatprep.subr.mxu0 0.0
    %1119 = vmatpush1.msra.mxu0 0.0
    %1120 = vmatprep.subr.mxu0 0.0
    %1121 = vmatpush1.msra.mxu0 0.0
    %1122 = vmatprep.subr.mxu0 0.0
    %1123 = vmatpush1.msra.mxu0 0.0
    %1124 = vmatprep.subr.mxu0 0.0
    %1125 = vmatpush1.msra.mxu0 0.0
    %1126 = vmatprep.subr.mxu0 0.0
    %1127 = vmatpush1.msra.mxu0 0.0
    %1128 = vmatprep.mubr.f32.mxu0 0.0
    %1129 = vmatmul.mubr.f32.gmra.mrb[0].mxu0 %v1062
    %v1130 = vpop.f32.mrb[0].mxu0
    %v1131 = vadd.f32 %v985, %v1130
    %v1132 = vpop.f32.mrb[0].mxu0
    %1133 = vdwg.mxu0
    %v1134 = vmul.f32 %v460, %v186
    %v1135 = vmul.f32 %v464, %v186
    %1136 = vmatprep.subr.mxu0 0.0
    %1137 = vmatpush1.xpose.msra.mxu0 %v462
    %1138 = vmatprep.subr.mxu0 0.0
    %1139 = vmatpush1.xpose.msra.mxu0 0.0
    %1140 = vmatprep.subr.mxu0 0.0
    %1141 = vmatpush1.xpose.msra.mxu0 0.0
    %1142 = vmatprep.subr.mxu0 0.0
    %1143 = vmatpush1.xpose.msra.mxu0 0.0
    %1144 = vmatprep.subr.mxu0 0.0
    %1145 = vmatpush1.xpose.msra.mxu0 0.0
    %1146 = vmatprep.subr.mxu0 0.0
    %1147 = vmatpush1.xpose.msra.mxu0 0.0
    %1148 = vmatprep.subr.mxu0 0.0
    %1149 = vmatpush1.xpose.msra.mxu0 0.0
    %1150 = vmatprep.subr.mxu0 0.0
    %1151 = vmatpush1.xpose.msra.mxu0 0.0
    %1152 = vmatprep.subr.mxu0 0.0
    %1153 = vmatpush1.xpose.msra.mxu0 0.0
    %1154 = vmatprep.subr.mxu0 0.0
    %1155 = vmatpush1.xpose.msra.mxu0 0.0
    %1156 = vmatprep.subr.mxu0 0.0
    %1157 = vmatpush1.xpose.msra.mxu0 0.0
    %1158 = vmatprep.subr.mxu0 0.0
    %1159 = vmatpush1.xpose.msra.mxu0 0.0
    %1160 = vmatprep.subr.mxu0 0.0
    %1161 = vmatpush1.xpose.msra.mxu0 0.0
    %1162 = vmatprep.subr.mxu0 0.0
    %1163 = vmatpush1.xpose.msra.mxu0 0.0
    %1164 = vmatprep.subr.mxu0 0.0
    %1165 = vmatpush1.xpose.msra.mxu0 0.0
    %1166 = vmatprep.subr.mxu0 0.0
    %1167 = vmatpush1.xpose.msra.mxu0 0.0
    %1168 = vmatprep.subr.mxu0 0.0
    %1169 = vmatpush1.xpose.msra.mxu0 0.0
    %1170 = vmatprep.subr.mxu0 0.0
    %1171 = vmatpush1.xpose.msra.mxu0 0.0
    %1172 = vmatprep.subr.mxu0 0.0
    %1173 = vmatpush1.xpose.msra.mxu0 0.0
    %1174 = vmatprep.subr.mxu0 0.0
    %1175 = vmatpush1.xpose.msra.mxu0 0.0
    %1176 = vmatprep.subr.mxu0 0.0
    %1177 = vmatpush1.xpose.msra.mxu0 0.0
    %1178 = vmatprep.subr.mxu0 0.0
    %1179 = vmatpush1.xpose.msra.mxu0 0.0
    %1180 = vmatprep.subr.mxu0 0.0
    %1181 = vmatpush1.xpose.msra.mxu0 0.0
    %1182 = vmatprep.subr.mxu0 0.0
    %1183 = vmatpush1.xpose.msra.mxu0 0.0
    %1184 = vmatprep.subr.mxu0 0.0
    %1185 = vmatpush1.xpose.msra.mxu0 0.0
    %1186 = vmatprep.subr.mxu0 0.0
    %1187 = vmatpush1.xpose.msra.mxu0 0.0
    %1188 = vmatprep.subr.mxu0 0.0
    %1189 = vmatpush1.xpose.msra.mxu0 0.0
    %1190 = vmatprep.subr.mxu0 0.0
    %1191 = vmatpush1.xpose.msra.mxu0 0.0
    %1192 = vmatprep.subr.mxu0 0.0
    %1193 = vmatpush1.xpose.msra.mxu0 0.0
    %1194 = vmatprep.subr.mxu0 0.0
    %1195 = vmatpush1.xpose.msra.mxu0 0.0
    %1196 = vmatprep.subr.mxu0 0.0
    %1197 = vmatpush1.xpose.msra.mxu0 0.0
    %1198 = vmatprep.subr.mxu0 0.0
    %1199 = vmatpush1.xpose.msra.mxu0 0.0
    %1200 = vmatprep.mubr.f32.mxu0 0.0
    %1201 = vmatmul.mubr.f32.gmra.mrb[0].mxu0 %v1134
    %v1202 = vpop.f32.mrb[0].mxu0
    %v1203 = vadd.f32 0.0, %v1202
    %v1204 = vpop.f32.mrb[0].mxu0
    %1205 = vdwg.mxu0
    %1206 = vmatprep.subr.mxu0 0.0
    %1207 = vmatpush1.xpose.msra.mxu0 %v466
    %1208 = vmatprep.subr.mxu0 0.0
    %1209 = vmatpush1.xpose.msra.mxu0 0.0
    %1210 = vmatprep.subr.mxu0 0.0
    %1211 = vmatpush1.xpose.msra.mxu0 0.0
    %1212 = vmatprep.subr.mxu0 0.0
    %1213 = vmatpush1.xpose.msra.mxu0 0.0
    %1214 = vmatprep.subr.mxu0 0.0
    %1215 = vmatpush1.xpose.msra.mxu0 0.0
    %1216 = vmatprep.subr.mxu0 0.0
    %1217 = vmatpush1.xpose.msra.mxu0 0.0
    %1218 = vmatprep.subr.mxu0 0.0
    %1219 = vmatpush1.xpose.msra.mxu0 0.0
    %1220 = vmatprep.subr.mxu0 0.0
    %1221 = vmatpush1.xpose.msra.mxu0 0.0
    %1222 = vmatprep.subr.mxu0 0.0
    %1223 = vmatpush1.xpose.msra.mxu0 0.0
    %1224 = vmatprep.subr.mxu0 0.0
    %1225 = vmatpush1.xpose.msra.mxu0 0.0
    %1226 = vmatprep.subr.mxu0 0.0
    %1227 = vmatpush1.xpose.msra.mxu0 0.0
    %1228 = vmatprep.subr.mxu0 0.0
    %1229 = vmatpush1.xpose.msra.mxu0 0.0
    %1230 = vmatprep.subr.mxu0 0.0
    %1231 = vmatpush1.xpose.msra.mxu0 0.0
    %1232 = vmatprep.subr.mxu0 0.0
    %1233 = vmatpush1.xpose.msra.mxu0 0.0
    %1234 = vmatprep.subr.mxu0 0.0
    %1235 = vmatpush1.xpose.msra.mxu0 0.0
    %1236 = vmatprep.subr.mxu0 0.0
    %1237 = vmatpush1.xpose.msra.mxu0 0.0
    %1238 = vmatprep.subr.mxu0 0.0
    %1239 = vmatpush1.xpose.msra.mxu0 0.0
    %1240 = vmatprep.subr.mxu0 0.0
    %1241 = vmatpush1.xpose.msra.mxu0 0.0
    %1242 = vmatprep.subr.mxu0 0.0
    %1243 = vmatpush1.xpose.msra.mxu0 0.0
    %1244 = vmatprep.subr.mxu0 0.0
    %1245 = vmatpush1.xpose.msra.mxu0 0.0
    %1246 = vmatprep.subr.mxu0 0.0
    %1247 = vmatpush1.xpose.msra.mxu0 0.0
    %1248 = vmatprep.subr.mxu0 0.0
    %1249 = vmatpush1.xpose.msra.mxu0 0.0
    %1250 = vmatprep.subr.mxu0 0.0
    %1251 = vmatpush1.xpose.msra.mxu0 0.0
    %1252 = vmatprep.subr.mxu0 0.0
    %1253 = vmatpush1.xpose.msra.mxu0 0.0
    %1254 = vmatprep.subr.mxu0 0.0
    %1255 = vmatpush1.xpose.msra.mxu0 0.0
    %1256 = vmatprep.subr.mxu0 0.0
    %1257 = vmatpush1.xpose.msra.mxu0 0.0
    %1258 = vmatprep.subr.mxu0 0.0
    %1259 = vmatpush1.xpose.msra.mxu0 0.0
    %1260 = vmatprep.subr.mxu0 0.0
    %1261 = vmatpush1.xpose.msra.mxu0 0.0
    %1262 = vmatprep.subr.mxu0 0.0
    %1263 = vmatpush1.xpose.msra.mxu0 0.0
    %1264 = vmatprep.subr.mxu0 0.0
    %1265 = vmatpush1.xpose.msra.mxu0 0.0
    %1266 = vmatprep.subr.mxu0 0.0
    %1267 = vmatpush1.xpose.msra.mxu0 0.0
    %1268 = vmatprep.subr.mxu0 0.0
    %1269 = vmatpush1.xpose.msra.mxu0 0.0
    %1270 = vmatprep.mubr.f32.mxu0 0.0
    %1271 = vmatmul.mubr.f32.gmra.mrb[0].mxu0 %v1135
    %v1272 = vpop.f32.mrb[0].mxu0
    %v1273 = vadd.f32 0.0, %v1272
    %v1274 = vpop.f32.mrb[0].mxu0
    %1275 = vdwg.mxu0
    %v1276 = vsel %vm651, %v1203, -inf
    %1277 = vmax.xlane.f32.xlu0 %v1276
    %v1278 = vpop.xlane.xlu0 %1277
    %v1279 = vsel %vm651, %v1273, -inf
    %1280 = vmax.xlane.f32.xlu0 %v1279
    %v1281 = vpop.xlane.xlu0 %1280
    %v1282 = vsub.f32 %v1203, %v1278
    %v1283 = vsub.f32 %v1273, %v1281
    %v1284 = vmul.f32 %v1282, 1.442695
    %v1285 = vpow.pop %v1284
    %v1286 = vmul.f32 %v1283, 1.442695
    %v1287 = vpow.pop %v1286
    %v1288 = vsel %vm651, %v1285, 0.0
    %1289 = vadd.xlane.f32.xlu0 %v1288
    %v1290 = vpop.xlane.xlu0 %1289
    %v1291 = vsel %vm651, %v1287, 0.0
    %1292 = vadd.xlane.f32.xlu0 %v1291
    %v1293 = vpop.xlane.xlu0 %1292
    %v1294 = vrcp.pop %v1290
    %v1295 = vmul.f32 %v1285, %v1294
    %v1296 = vrcp.pop %v1293
    %v1297 = vmul.f32 %v1287, %v1296
    %v1298 = vmul.f32 %v503, %v186
    %v1299 = vmul.f32 %v506, %v186
    %v1301 = vsel %vm651, %v1295, 0
    %1303 = vmatprep.subr.mxu0 0.0
    %1304 = vmatpush1.msra.mxu0 %v1298
    %1305 = vmatprep.subr.mxu0 0.0
    %1306 = vmatpush1.msra.mxu0 0.0
    %1307 = vmatprep.subr.mxu0 0.0
    %1308 = vmatpush1.msra.mxu0 0.0
    %1309 = vmatprep.subr.mxu0 0.0
    %1310 = vmatpush1.msra.mxu0 0.0
    %1311 = vmatprep.subr.mxu0 0.0
    %1312 = vmatpush1.msra.mxu0 0.0
    %1313 = vmatprep.subr.mxu0 0.0
    %1314 = vmatpush1.msra.mxu0 0.0
    %1315 = vmatprep.subr.mxu0 0.0
    %1316 = vmatpush1.msra.mxu0 0.0
    %1317 = vmatprep.subr.mxu0 0.0
    %1318 = vmatpush1.msra.mxu0 0.0
    %1319 = vmatprep.subr.mxu0 0.0
    %1320 = vmatpush1.msra.mxu0 0.0
    %1321 = vmatprep.subr.mxu0 0.0
    %1322 = vmatpush1.msra.mxu0 0.0
    %1323 = vmatprep.subr.mxu0 0.0
    %1324 = vmatpush1.msra.mxu0 0.0
    %1325 = vmatprep.subr.mxu0 0.0
    %1326 = vmatpush1.msra.mxu0 0.0
    %1327 = vmatprep.subr.mxu0 0.0
    %1328 = vmatpush1.msra.mxu0 0.0
    %1329 = vmatprep.subr.mxu0 0.0
    %1330 = vmatpush1.msra.mxu0 0.0
    %1331 = vmatprep.subr.mxu0 0.0
    %1332 = vmatpush1.msra.mxu0 0.0
    %1333 = vmatprep.subr.mxu0 0.0
    %1334 = vmatpush1.msra.mxu0 0.0
    %1335 = vmatprep.subr.mxu0 0.0
    %1336 = vmatpush1.msra.mxu0 0.0
    %1337 = vmatprep.subr.mxu0 0.0
    %1338 = vmatpush1.msra.mxu0 0.0
    %1339 = vmatprep.subr.mxu0 0.0
    %1340 = vmatpush1.msra.mxu0 0.0
    %1341 = vmatprep.subr.mxu0 0.0
    %1342 = vmatpush1.msra.mxu0 0.0
    %1343 = vmatprep.subr.mxu0 0.0
    %1344 = vmatpush1.msra.mxu0 0.0
    %1345 = vmatprep.subr.mxu0 0.0
    %1346 = vmatpush1.msra.mxu0 0.0
    %1347 = vmatprep.subr.mxu0 0.0
    %1348 = vmatpush1.msra.mxu0 0.0
    %1349 = vmatprep.subr.mxu0 0.0
    %1350 = vmatpush1.msra.mxu0 0.0
    %1351 = vmatprep.subr.mxu0 0.0
    %1352 = vmatpush1.msra.mxu0 0.0
    %1353 = vmatprep.subr.mxu0 0.0
    %1354 = vmatpush1.msra.mxu0 0.0
    %1355 = vmatprep.subr.mxu0 0.0
    %1356 = vmatpush1.msra.mxu0 0.0
    %1357 = vmatprep.subr.mxu0 0.0
    %1358 = vmatpush1.msra.mxu0 0.0
    %1359 = vmatprep.subr.mxu0 0.0
    %1360 = vmatpush1.msra.mxu0 0.0
    %1361 = vmatprep.subr.mxu0 0.0
    %1362 = vmatpush1.msra.mxu0 0.0
    %1363 = vmatprep.subr.mxu0 0.0
    %1364 = vmatpush1.msra.mxu0 0.0
    %1365 = vmatprep.subr.mxu0 0.0
    %1366 = vmatpush1.msra.mxu0 0.0
    %1367 = vmatprep.mubr.f32.mxu0 0.0
    %1368 = vmatmul.mubr.f32.gmra.mrb[0].mxu0 %v1301
    %v1369 = vpop.f32.mrb[0].mxu0
    %v1370 = vadd.f32 0.0, %v1369
    %v1371 = vpop.f32.mrb[0].mxu0
    %1372 = vdwg.mxu0
    %v1374 = vsel %vm651, %v1297, 0
    %1376 = vmatprep.subr.mxu0 0.0
    %1377 = vmatpush1.msra.mxu0 %v1299
    %1378 = vmatprep.subr.mxu0 0.0
    %1379 = vmatpush1.msra.mxu0 0.0
    %1380 = vmatprep.subr.mxu0 0.0
    %1381 = vmatpush1.msra.mxu0 0.0
    %1382 = vmatprep.subr.mxu0 0.0
    %1383 = vmatpush1.msra.mxu0 0.0
    %1384 = vmatprep.subr.mxu0 0.0
    %1385 = vmatpush1.msra.mxu0 0.0
    %1386 = vmatprep.subr.mxu0 0.0
    %1387 = vmatpush1.msra.mxu0 0.0
    %1388 = vmatprep.subr.mxu0 0.0
    %1389 = vmatpush1.msra.mxu0 0.0
    %1390 = vmatprep.subr.mxu0 0.0
    %1391 = vmatpush1.msra.mxu0 0.0
    %1392 = vmatprep.subr.mxu0 0.0
    %1393 = vmatpush1.msra.mxu0 0.0
    %1394 = vmatprep.subr.mxu0 0.0
    %1395 = vmatpush1.msra.mxu0 0.0
    %1396 = vmatprep.subr.mxu0 0.0
    %1397 = vmatpush1.msra.mxu0 0.0
    %1398 = vmatprep.subr.mxu0 0.0
    %1399 = vmatpush1.msra.mxu0 0.0
    %1400 = vmatprep.subr.mxu0 0.0
    %1401 = vmatpush1.msra.mxu0 0.0
    %1402 = vmatprep.subr.mxu0 0.0
    %1403 = vmatpush1.msra.mxu0 0.0
    %1404 = vmatprep.subr.mxu0 0.0
    %1405 = vmatpush1.msra.mxu0 0.0
    %1406 = vmatprep.subr.mxu0 0.0
    %1407 = vmatpush1.msra.mxu0 0.0
    %1408 = vmatprep.subr.mxu0 0.0
    %1409 = vmatpush1.msra.mxu0 0.0
    %1410 = vmatprep.subr.mxu0 0.0
    %1411 = vmatpush1.msra.mxu0 0.0
    %1412 = vmatprep.subr.mxu0 0.0
    %1413 = vmatpush1.msra.mxu0 0.0
    %1414 = vmatprep.subr.mxu0 0.0
    %1415 = vmatpush1.msra.mxu0 0.0
    %1416 = vmatprep.subr.mxu0 0.0
    %1417 = vmatpush1.msra.mxu0 0.0
    %1418 = vmatprep.subr.mxu0 0.0
    %1419 = vmatpush1.msra.mxu0 0.0
    %1420 = vmatprep.subr.mxu0 0.0
    %1421 = vmatpush1.msra.mxu0 0.0
    %1422 = vmatprep.subr.mxu0 0.0
    %1423 = vmatpush1.msra.mxu0 0.0
    %1424 = vmatprep.subr.mxu0 0.0
    %1425 = vmatpush1.msra.mxu0 0.0
    %1426 = vmatprep.subr.mxu0 0.0
    %1427 = vmatpush1.msra.mxu0 0.0
    %1428 = vmatprep.subr.mxu0 0.0
    %1429 = vmatpush1.msra.mxu0 0.0
    %1430 = vmatprep.subr.mxu0 0.0
    %1431 = vmatpush1.msra.mxu0 0.0
    %1432 = vmatprep.subr.mxu0 0.0
    %1433 = vmatpush1.msra.mxu0 0.0
    %1434 = vmatprep.subr.mxu0 0.0
    %1435 = vmatpush1.msra.mxu0 0.0
    %1436 = vmatprep.subr.mxu0 0.0
    %1437 = vmatpush1.msra.mxu0 0.0
    %1438 = vmatprep.subr.mxu0 0.0
    %1439 = vmatpush1.msra.mxu0 0.0
    %1440 = vmatprep.mubr.f32.mxu0 0.0
    %1441 = vmatmul.mubr.f32.gmra.mrb[0].mxu0 %v1374
    %v1442 = vpop.f32.mrb[0].mxu0
    %v1443 = vadd.f32 0.0, %v1442
    %v1444 = vpop.f32.mrb[0].mxu0
    %1445 = vdwg.mxu0
    %v1446 = vadd.f32 %v1058, %v1370
    %v1447 = vadd.f32 %v1131, %v1443
    %v1448 = vmul.f32 %v460, %v191
    %v1449 = vmul.f32 %v464, %v191
    %1450 = vmatprep.subr.mxu0 0.0
    %1451 = vmatpush1.xpose.msra.mxu0 %v462
    %1452 = vmatprep.subr.mxu0 0.0
    %1453 = vmatpush1.xpose.msra.mxu0 0.0
    %1454 = vmatprep.subr.mxu0 0.0
    %1455 = vmatpush1.xpose.msra.mxu0 0.0
    %1456 = vmatprep.subr.mxu0 0.0
    %1457 = vmatpush1.xpose.msra.mxu0 0.0
    %1458 = vmatprep.subr.mxu0 0.0
    %1459 = vmatpush1.xpose.msra.mxu0 0.0
    %1460 = vmatprep.subr.mxu0 0.0
    %1461 = vmatpush1.xpose.msra.mxu0 0.0
    %1462 = vmatprep.subr.mxu0 0.0
    %1463 = vmatpush1.xpose.msra.mxu0 0.0
    %1464 = vmatprep.subr.mxu0 0.0
    %1465 = vmatpush1.xpose.msra.mxu0 0.0
    %1466 = vmatprep.subr.mxu0 0.0
    %1467 = vmatpush1.xpose.msra.mxu0 0.0
    %1468 = vmatprep.subr.mxu0 0.0
    %1469 = vmatpush1.xpose.msra.mxu0 0.0
    %1470 = vmatprep.subr.mxu0 0.0
    %1471 = vmatpush1.xpose.msra.mxu0 0.0
    %1472 = vmatprep.subr.mxu0 0.0
    %1473 = vmatpush1.xpose.msra.mxu0 0.0
    %1474 = vmatprep.subr.mxu0 0.0
    %1475 = vmatpush1.xpose.msra.mxu0 0.0
    %1476 = vmatprep.subr.mxu0 0.0
    %1477 = vmatpush1.xpose.msra.mxu0 0.0
    %1478 = vmatprep.subr.mxu0 0.0
    %1479 = vmatpush1.xpose.msra.mxu0 0.0
    %1480 = vmatprep.subr.mxu0 0.0
    %1481 = vmatpush1.xpose.msra.mxu0 0.0
    %1482 = vmatprep.subr.mxu0 0.0
    %1483 = vmatpush1.xpose.msra.mxu0 0.0
    %1484 = vmatprep.subr.mxu0 0.0
    %1485 = vmatpush1.xpose.msra.mxu0 0.0
    %1486 = vmatprep.subr.mxu0 0.0
    %1487 = vmatpush1.xpose.msra.mxu0 0.0
    %1488 = vmatprep.subr.mxu0 0.0
    %1489 = vmatpush1.xpose.msra.mxu0 0.0
    %1490 = vmatprep.subr.mxu0 0.0
    %1491 = vmatpush1.xpose.msra.mxu0 0.0
    %1492 = vmatprep.subr.mxu0 0.0
    %1493 = vmatpush1.xpose.msra.mxu0 0.0
    %1494 = vmatprep.subr.mxu0 0.0
    %1495 = vmatpush1.xpose.msra.mxu0 0.0
    %1496 = vmatprep.subr.mxu0 0.0
    %1497 = vmatpush1.xpose.msra.mxu0 0.0
    %1498 = vmatprep.subr.mxu0 0.0
    %1499 = vmatpush1.xpose.msra.mxu0 0.0
    %1500 = vmatprep.subr.mxu0 0.0
    %1501 = vmatpush1.xpose.msra.mxu0 0.0
    %1502 = vmatprep.subr.mxu0 0.0
    %1503 = vmatpush1.xpose.msra.mxu0 0.0
    %1504 = vmatprep.subr.mxu0 0.0
    %1505 = vmatpush1.xpose.msra.mxu0 0.0
    %1506 = vmatprep.subr.mxu0 0.0
    %1507 = vmatpush1.xpose.msra.mxu0 0.0
    %1508 = vmatprep.subr.mxu0 0.0
    %1509 = vmatpush1.xpose.msra.mxu0 0.0
    %1510 = vmatprep.subr.mxu0 0.0
    %1511 = vmatpush1.xpose.msra.mxu0 0.0
    %1512 = vmatprep.subr.mxu0 0.0
    %1513 = vmatpush1.xpose.msra.mxu0 0.0
    %1514 = vmatprep.mubr.f32.mxu0 0.0
    %1515 = vmatmul.mubr.f32.gmra.mrb[0].mxu0 %v1448
    %v1516 = vpop.f32.mrb[0].mxu0
    %v1517 = vadd.f32 0.0, %v1516
    %v1518 = vpop.f32.mrb[0].mxu0
    %1519 = vdwg.mxu0
    %1520 = vmatprep.subr.mxu0 0.0
    %1521 = vmatpush1.xpose.msra.mxu0 %v466
    %1522 = vmatprep.subr.mxu0 0.0
    %1523 = vmatpush1.xpose.msra.mxu0 0.0
    %1524 = vmatprep.subr.mxu0 0.0
    %1525 = vmatpush1.xpose.msra.mxu0 0.0
    %1526 = vmatprep.subr.mxu0 0.0
    %1527 = vmatpush1.xpose.msra.mxu0 0.0
    %1528 = vmatprep.subr.mxu0 0.0
    %1529 = vmatpush1.xpose.msra.mxu0 0.0
    %1530 = vmatprep.subr.mxu0 0.0
    %1531 = vmatpush1.xpose.msra.mxu0 0.0
    %1532 = vmatprep.subr.mxu0 0.0
    %1533 = vmatpush1.xpose.msra.mxu0 0.0
    %1534 = vmatprep.subr.mxu0 0.0
    %1535 = vmatpush1.xpose.msra.mxu0 0.0
    %1536 = vmatprep.subr.mxu0 0.0
    %1537 = vmatpush1.xpose.msra.mxu0 0.0
    %1538 = vmatprep.subr.mxu0 0.0
    %1539 = vmatpush1.xpose.msra.mxu0 0.0
    %1540 = vmatprep.subr.mxu0 0.0
    %1541 = vmatpush1.xpose.msra.mxu0 0.0
    %1542 = vmatprep.subr.mxu0 0.0
    %1543 = vmatpush1.xpose.msra.mxu0 0.0
    %1544 = vmatprep.subr.mxu0 0.0
    %1545 = vmatpush1.xpose.msra.mxu0 0.0
    %1546 = vmatprep.subr.mxu0 0.0
    %1547 = vmatpush1.xpose.msra.mxu0 0.0
    %1548 = vmatprep.subr.mxu0 0.0
    %1549 = vmatpush1.xpose.msra.mxu0 0.0
    %1550 = vmatprep.subr.mxu0 0.0
    %1551 = vmatpush1.xpose.msra.mxu0 0.0
    %1552 = vmatprep.subr.mxu0 0.0
    %1553 = vmatpush1.xpose.msra.mxu0 0.0
    %1554 = vmatprep.subr.mxu0 0.0
    %1555 = vmatpush1.xpose.msra.mxu0 0.0
    %1556 = vmatprep.subr.mxu0 0.0
    %1557 = vmatpush1.xpose.msra.mxu0 0.0
    %1558 = vmatprep.subr.mxu0 0.0
    %1559 = vmatpush1.xpose.msra.mxu0 0.0
    %1560 = vmatprep.subr.mxu0 0.0
    %1561 = vmatpush1.xpose.msra.mxu0 0.0
    %1562 = vmatprep.subr.mxu0 0.0
    %1563 = vmatpush1.xpose.msra.mxu0 0.0
    %1564 = vmatprep.subr.mxu0 0.0
    %1565 = vmatpush1.xpose.msra.mxu0 0.0
    %1566 = vmatprep.subr.mxu0 0.0
    %1567 = vmatpush1.xpose.msra.mxu0 0.0
    %1568 = vmatprep.subr.mxu0 0.0
    %1569 = vmatpush1.xpose.msra.mxu0 0.0
    %1570 = vmatprep.subr.mxu0 0.0
    %1571 = vmatpush1.xpose.msra.mxu0 0.0
    %1572 = vmatprep.subr.mxu0 0.0
    %1573 = vmatpush1.xpose.msra.mxu0 0.0
    %1574 = vmatprep.subr.mxu0 0.0
    %1575 = vmatpush1.xpose.msra.mxu0 0.0
    %1576 = vmatprep.subr.mxu0 0.0
    %1577 = vmatpush1.xpose.msra.mxu0 0.0
    %1578 = vmatprep.subr.mxu0 0.0
    %1579 = vmatpush1.xpose.msra.mxu0 0.0
    %1580 = vmatprep.subr.mxu0 0.0
    %1581 = vmatpush1.xpose.msra.mxu0 0.0
    %1582 = vmatprep.subr.mxu0 0.0
    %1583 = vmatpush1.xpose.msra.mxu0 0.0
    %1584 = vmatprep.mubr.f32.mxu0 0.0
    %1585 = vmatmul.mubr.f32.gmra.mrb[0].mxu0 %v1449
    %v1586 = vpop.f32.mrb[0].mxu0
    %v1587 = vadd.f32 0.0, %v1586
    %v1588 = vpop.f32.mrb[0].mxu0
    %1589 = vdwg.mxu0
    %v1590 = vsel %vm651, %v1517, -inf
    %1591 = vmax.xlane.f32.xlu0 %v1590
    %v1592 = vpop.xlane.xlu0 %1591
    %v1593 = vsel %vm651, %v1587, -inf
    %1594 = vmax.xlane.f32.xlu0 %v1593
    %v1595 = vpop.xlane.xlu0 %1594
    %v1596 = vsub.f32 %v1517, %v1592
    %v1597 = vsub.f32 %v1587, %v1595
    %v1598 = vmul.f32 %v1596, 1.442695
    %v1599 = vpow.pop %v1598
    %v1600 = vmul.f32 %v1597, 1.442695
    %v1601 = vpow.pop %v1600
    %v1602 = vsel %vm651, %v1599, 0.0
    %1603 = vadd.xlane.f32.xlu0 %v1602
    %v1604 = vpop.xlane.xlu0 %1603
    %v1605 = vsel %vm651, %v1601, 0.0
    %1606 = vadd.xlane.f32.xlu0 %v1605
    %v1607 = vpop.xlane.xlu0 %1606
    %v1608 = vrcp.pop %v1604
    %v1609 = vmul.f32 %v1599, %v1608
    %v1610 = vrcp.pop %v1607
    %v1611 = vmul.f32 %v1601, %v1610
    %v1612 = vmul.f32 %v503, %v191
    %v1613 = vmul.f32 %v506, %v191
    %v1615 = vsel %vm651, %v1609, 0
    %1617 = vmatprep.subr.mxu0 0.0
    %1618 = vmatpush1.msra.mxu0 %v1612
    %1619 = vmatprep.subr.mxu0 0.0
    %1620 = vmatpush1.msra.mxu0 0.0
    %1621 = vmatprep.subr.mxu0 0.0
    %1622 = vmatpush1.msra.mxu0 0.0
    %1623 = vmatprep.subr.mxu0 0.0
    %1624 = vmatpush1.msra.mxu0 0.0
    %1625 = vmatprep.subr.mxu0 0.0
    %1626 = vmatpush1.msra.mxu0 0.0
    %1627 = vmatprep.subr.mxu0 0.0
    %1628 = vmatpush1.msra.mxu0 0.0
    %1629 = vmatprep.subr.mxu0 0.0
    %1630 = vmatpush1.msra.mxu0 0.0
    %1631 = vmatprep.subr.mxu0 0.0
    %1632 = vmatpush1.msra.mxu0 0.0
    %1633 = vmatprep.subr.mxu0 0.0
    %1634 = vmatpush1.msra.mxu0 0.0
    %1635 = vmatprep.subr.mxu0 0.0
    %1636 = vmatpush1.msra.mxu0 0.0
    %1637 = vmatprep.subr.mxu0 0.0
    %1638 = vmatpush1.msra.mxu0 0.0
    %1639 = vmatprep.subr.mxu0 0.0
    %1640 = vmatpush1.msra.mxu0 0.0
    %1641 = vmatprep.subr.mxu0 0.0
    %1642 = vmatpush1.msra.mxu0 0.0
    %1643 = vmatprep.subr.mxu0 0.0
    %1644 = vmatpush1.msra.mxu0 0.0
    %1645 = vmatprep.subr.mxu0 0.0
    %1646 = vmatpush1.msra.mxu0 0.0
    %1647 = vmatprep.subr.mxu0 0.0
    %1648 = vmatpush1.msra.mxu0 0.0
    %1649 = vmatprep.subr.mxu0 0.0
    %1650 = vmatpush1.msra.mxu0 0.0
    %1651 = vmatprep.subr.mxu0 0.0
    %1652 = vmatpush1.msra.mxu0 0.0
    %1653 = vmatprep.subr.mxu0 0.0
    %1654 = vmatpush1.msra.mxu0 0.0
    %1655 = vmatprep.subr.mxu0 0.0
    %1656 = vmatpush1.msra.mxu0 0.0
    %1657 = vmatprep.subr.mxu0 0.0
    %1658 = vmatpush1.msra.mxu0 0.0
    %1659 = vmatprep.subr.mxu0 0.0
    %1660 = vmatpush1.msra.mxu0 0.0
    %1661 = vmatprep.subr.mxu0 0.0
    %1662 = vmatpush1.msra.mxu0 0.0
    %1663 = vmatprep.subr.mxu0 0.0
    %1664 = vmatpush1.msra.mxu0 0.0
    %1665 = vmatprep.subr.mxu0 0.0
    %1666 = vmatpush1.msra.mxu0 0.0
    %1667 = vmatprep.subr.mxu0 0.0
    %1668 = vmatpush1.msra.mxu0 0.0
    %1669 = vmatprep.subr.mxu0 0.0
    %1670 = vmatpush1.msra.mxu0 0.0
    %1671 = vmatprep.subr.mxu0 0.0
    %1672 = vmatpush1.msra.mxu0 0.0
    %1673 = vmatprep.subr.mxu0 0.0
    %1674 = vmatpush1.msra.mxu0 0.0
    %1675 = vmatprep.subr.mxu0 0.0
    %1676 = vmatpush1.msra.mxu0 0.0
    %1677 = vmatprep.subr.mxu0 0.0
    %1678 = vmatpush1.msra.mxu0 0.0
    %1679 = vmatprep.subr.mxu0 0.0
    %1680 = vmatpush1.msra.mxu0 0.0
    %1681 = vmatprep.mubr.f32.mxu0 0.0
    %1682 = vmatmul.mubr.f32.gmra.mrb[0].mxu0 %v1615
    %v1683 = vpop.f32.mrb[0].mxu0
    %v1684 = vadd.f32 0.0, %v1683
    %v1685 = vpop.f32.mrb[0].mxu0
    %1686 = vdwg.mxu0
    %v1688 = vsel %vm651, %v1611, 0
    %1690 = vmatprep.subr.mxu0 0.0
    %1691 = vmatpush1.msra.mxu0 %v1613
    %1692 = vmatprep.subr.mxu0 0.0
    %1693 = vmatpush1.msra.mxu0 0.0
    %1694 = vmatprep.subr.mxu0 0.0
    %1695 = vmatpush1.msra.mxu0 0.0
    %1696 = vmatprep.subr.mxu0 0.0
    %1697 = vmatpush1.msra.mxu0 0.0
    %1698 = vmatprep.subr.mxu0 0.0
    %1699 = vmatpush1.msra.mxu0 0.0
    %1700 = vmatprep.subr.mxu0 0.0
    %1701 = vmatpush1.msra.mxu0 0.0
    %1702 = vmatprep.subr.mxu0 0.0
    %1703 = vmatpush1.msra.mxu0 0.0
    %1704 = vmatprep.subr.mxu0 0.0
    %1705 = vmatpush1.msra.mxu0 0.0
    %1706 = vmatprep.subr.mxu0 0.0
    %1707 = vmatpush1.msra.mxu0 0.0
    %1708 = vmatprep.subr.mxu0 0.0
    %1709 = vmatpush1.msra.mxu0 0.0
    %1710 = vmatprep.subr.mxu0 0.0
    %1711 = vmatpush1.msra.mxu0 0.0
    %1712 = vmatprep.subr.mxu0 0.0
    %1713 = vmatpush1.msra.mxu0 0.0
    %1714 = vmatprep.subr.mxu0 0.0
    %1715 = vmatpush1.msra.mxu0 0.0
    %1716 = vmatprep.subr.mxu0 0.0
    %1717 = vmatpush1.msra.mxu0 0.0
    %1718 = vmatprep.subr.mxu0 0.0
    %1719 = vmatpush1.msra.mxu0 0.0
    %1720 = vmatprep.subr.mxu0 0.0
    %1721 = vmatpush1.msra.mxu0 0.0
    %1722 = vmatprep.subr.mxu0 0.0
    %1723 = vmatpush1.msra.mxu0 0.0
    %1724 = vmatprep.subr.mxu0 0.0
    %1725 = vmatpush1.msra.mxu0 0.0
    %1726 = vmatprep.subr.mxu0 0.0
    %1727 = vmatpush1.msra.mxu0 0.0
    %1728 = vmatprep.subr.mxu0 0.0
    %1729 = vmatpush1.msra.mxu0 0.0
    %1730 = vmatprep.subr.mxu0 0.0
    %1731 = vmatpush1.msra.mxu0 0.0
    %1732 = vmatprep.subr.mxu0 0.0
    %1733 = vmatpush1.msra.mxu0 0.0
    %1734 = vmatprep.subr.mxu0 0.0
    %1735 = vmatpush1.msra.mxu0 0.0
    %1736 = vmatprep.subr.mxu0 0.0
    %1737 = vmatpush1.msra.mxu0 0.0
    %1738 = vmatprep.subr.mxu0 0.0
    %1739 = vmatpush1.msra.mxu0 0.0
    %1740 = vmatprep.subr.mxu0 0.0
    %1741 = vmatpush1.msra.mxu0 0.0
    %1742 = vmatprep.subr.mxu0 0.0
    %1743 = vmatpush1.msra.mxu0 0.0
    %1744 = vmatprep.subr.mxu0 0.0
    %1745 = vmatpush1.msra.mxu0 0.0
    %1746 = vmatprep.subr.mxu0 0.0
    %1747 = vmatpush1.msra.mxu0 0.0
    %1748 = vmatprep.subr.mxu0 0.0
    %1749 = vmatpush1.msra.mxu0 0.0
    %1750 = vmatprep.subr.mxu0 0.0
    %1751 = vmatpush1.msra.mxu0 0.0
    %1752 = vmatprep.subr.mxu0 0.0
    %1753 = vmatpush1.msra.mxu0 0.0
    %1754 = vmatprep.mubr.f32.mxu0 0.0
    %1755 = vmatmul.mubr.f32.gmra.mrb[0].mxu0 %v1688
    %v1756 = vpop.f32.mrb[0].mxu0
    %v1757 = vadd.f32 0.0, %v1756
    %v1758 = vpop.f32.mrb[0].mxu0
    %1759 = vdwg.mxu0
    %v1760 = vadd.f32 %v1446, %v1684
    %v1761 = vadd.f32 %v1447, %v1757
    %v1762 = vpack.c.bf16 %v1761, %v1760
    %v1764 = vlaneseq
    %v1765 = vshrl.u32 %v1764, 7
    %v1766 = vsub.s32 0, %v1765
    %v1767 = vrot.slane %v273, %v1766
    %v1785 = vunpack.c.l.b16 %v224
    %v1786 = vunpack.c.l.b16 %v225
    %v1787 = vunpack.c.l.b16 %v226
    %v1788 = vunpack.c.l.b16 %v227
    %v1789 = vunpack.c.l.b16 %v228
    %v1790 = vunpack.c.l.b16 %v229
    %v1791 = vunpack.c.l.b16 %v230
    %v1792 = vunpack.c.l.b16 %v231
    %v1793 = vunpack.c.l.b16 %v232
    %v1794 = vunpack.c.l.b16 %v233
    %v1795 = vunpack.c.l.b16 %v234
    %v1796 = vunpack.c.l.b16 %v235
    %v1797 = vunpack.c.l.b16 %v236
    %v1798 = vunpack.c.l.b16 %v237
    %v1799 = vunpack.c.l.b16 %v238
    %v1800 = vunpack.c.l.b16 %v239
    %v1801 = vpack.c.b16 %v1786, %v1785
    %v1802 = vpack.c.b16 %v1788, %v1787
    %v1803 = vpack.c.b16 %v1790, %v1789
    %v1804 = vpack.c.b16 %v1792, %v1791
    %v1805 = vpack.c.b16 %v1794, %v1793
    %v1806 = vpack.c.b16 %v1796, %v1795
    %v1807 = vpack.c.b16 %v1798, %v1797
    %v1808 = vpack.c.b16 %v1800, %v1799
    %1817 = vmatprep.subr.bf16.mxu0 0
    %1818 = vmatpush1.bf16.msra.mxu0 %v1801
    %1819 = vmatprep.subr.bf16.mxu0 0
    %1820 = vmatpush1.bf16.msra.mxu0 %v1802
    %1821 = vmatprep.subr.bf16.mxu0 0
    %1822 = vmatpush1.bf16.msra.mxu0 %v1803
    %1823 = vmatprep.subr.bf16.mxu0 0
    %1824 = vmatpush1.bf16.msra.mxu0 %v1804
    %1825 = vmatprep.subr.bf16.mxu0 0
    %1826 = vmatpush1.bf16.msra.mxu0 %v1805
    %1827 = vmatprep.subr.bf16.mxu0 0
    %1828 = vmatpush1.bf16.msra.mxu0 %v1806
    %1829 = vmatprep.subr.bf16.mxu0 0
    %1830 = vmatpush1.bf16.msra.mxu0 %v1807
    %1831 = vmatprep.subr.bf16.mxu0 0
    %1832 = vmatpush1.bf16.msra.mxu0 %v1808
    %1833 = vmatprep.subr.bf16.mxu0 0
    %1834 = vmatpush1.bf16.msra.mxu0 0
    %1835 = vmatprep.subr.bf16.mxu0 0
    %1836 = vmatpush1.bf16.msra.mxu0 0
    %1837 = vmatprep.subr.bf16.mxu0 0
    %1838 = vmatpush1.bf16.msra.mxu0 0
    %1839 = vmatprep.subr.bf16.mxu0 0
    %1840 = vmatpush1.bf16.msra.mxu0 0
    %1841 = vmatprep.subr.bf16.mxu0 0
    %1842 = vmatpush1.bf16.msra.mxu0 0
    %1843 = vmatprep.subr.bf16.mxu0 0
    %1844 = vmatpush1.bf16.msra.mxu0 0
    %1845 = vmatprep.subr.bf16.mxu0 0
    %1846 = vmatpush1.bf16.msra.mxu0 0
    %1847 = vmatprep.subr.bf16.mxu0 0
    %1848 = vmatpush1.bf16.msra.mxu0 0
    %1849 = vmatprep.mubr.bf16.mxu0 0
    %1850 = vmatmul.mubr.bf16.gmra.mrb[0].mxu0 %v1762
    %v1851 = vpop.f32.mrb[0].mxu0
    %v1852 = vadd.f32 %v1767, %v1851
    %v1853 = vpop.f32.mrb[0].mxu0
    %v1854 = vpop.f32.mrb[0].mxu0
    %v1855 = vadd.f32 %v1767, %v1854
    %v1856 = vpop.f32.mrb[0].mxu0
    %1857 = vdwg.mxu0
    %v1858 = vadd.f32 %v166, %v1852
    %v1859 = vadd.f32 %v169, %v1855
    %1860 = vadd.xlane.f32.xlu0 %v1858
    %v1861 = vpop.xlane.xlu0 %1860
    %1862 = vadd.xlane.f32.xlu0 %v1859
    %v1863 = vpop.xlane.xlu0 %1862
    %v1864 = vmul.f32 %v1861, 0.0078125
    %v1865 = vmul.f32 %v1863, 0.0078125
    %v1866 = vsub.f32 %v1858, %v1864
    %v1867 = vsub.f32 %v1859, %v1865
    %v1868 = vmul.f32 %v1866, %v1866
    %v1869 = vmul.f32 %v1867, %v1867
    %1870 = vadd.xlane.f32.xlu0 %v1868
    %v1871 = vpop.xlane.xlu0 %1870
    %1872 = vadd.xlane.f32.xlu0 %v1869
    %v1873 = vpop.xlane.xlu0 %1872
    %v1874 = vmul.f32 %v1871, 0.0078125
    %v1875 = vmul.f32 %v1873, 0.0078125
    %v1876 = vadd.f32 %v1874, 1e-05
    %v1877 = vadd.f32 %v1875, 1e-05
    %v1878 = vrsqrt.pop %v1876
    %v1879 = vrsqrt.pop %v1877
    %v1880 = vmul.f32 %v1866, %v1878
    %v1881 = vmul.f32 %v1867, %v1879
    %v1883 = vlaneseq
    %v1884 = vshrl.u32 %v1883, 7
    %v1885 = vsub.s32 0, %v1884
    %v1886 = vrot.slane %v276, %v1885
    %v1888 = vmul.f32 %v1880, %v1886
    %v1889 = vmul.f32 %v1881, %v1886
    %v1891 = vlaneseq
    %v1892 = vshrl.u32 %v1891, 7
    %v1893 = vsub.s32 0, %v1892
    %v1894 = vrot.slane %v277, %v1893
    %v1896 = vadd.f32 %v1888, %v1894
    %v1897 = vadd.f32 %v1889, %v1894
    %v1898 = vpack.c.bf16 %v1897, %v1896
    %v1900 = vlaneseq
    %v1901 = vshrl.u32 %v1900, 7
    %v1902 = vsub.s32 0, %v1901
    %v1903 = vrot.slane %v274, %v1902
    %v1921 = vunpack.c.l.b16 %v240
    %v1922 = vunpack.c.l.b16 %v241
    %v1923 = vunpack.c.l.b16 %v242
    %v1924 = vunpack.c.l.b16 %v243
    %v1925 = vunpack.c.l.b16 %v244
    %v1926 = vunpack.c.l.b16 %v245
    %v1927 = vunpack.c.l.b16 %v246
    %v1928 = vunpack.c.l.b16 %v247
    %v1929 = vunpack.c.l.b16 %v248
    %v1930 = vunpack.c.l.b16 %v249
    %v1931 = vunpack.c.l.b16 %v250
    %v1932 = vunpack.c.l.b16 %v251
    %v1933 = vunpack.c.l.b16 %v252
    %v1934 = vunpack.c.l.b16 %v253
    %v1935 = vunpack.c.l.b16 %v254
    %v1936 = vunpack.c.l.b16 %v255
    %v1937 = vpack.c.b16 %v1922, %v1921
    %v1938 = vpack.c.b16 %v1924, %v1923
    %v1939 = vpack.c.b16 %v1926, %v1925
    %v1940 = vpack.c.b16 %v1928, %v1927
    %v1941 = vpack.c.b16 %v1930, %v1929
    %v1942 = vpack.c.b16 %v1932, %v1931
    %v1943 = vpack.c.b16 %v1934, %v1933
    %v1944 = vpack.c.b16 %v1936, %v1935
    %1953 = vmatprep.subr.bf16.mxu0 0
    %1954 = vmatpush1.bf16.msra.mxu0 %v1937
    %1955 = vmatprep.subr.bf16.mxu0 0
    %1956 = vmatpush1.bf16.msra.mxu0 %v1938
    %1957 = vmatprep.subr.bf16.mxu0 0
    %1958 = vmatpush1.bf16.msra.mxu0 %v1939
    %1959 = vmatprep.subr.bf16.mxu0 0
    %1960 = vmatpush1.bf16.msra.mxu0 %v1940
    %1961 = vmatprep.subr.bf16.mxu0 0
    %1962 = vmatpush1.bf16.msra.mxu0 %v1941
    %1963 = vmatprep.subr.bf16.mxu0 0
    %1964 = vmatpush1.bf16.msra.mxu0 %v1942
    %1965 = vmatprep.subr.bf16.mxu0 0
    %1966 = vmatpush1.bf16.msra.mxu0 %v1943
    %1967 = vmatprep.subr.bf16.mxu0 0
    %1968 = vmatpush1.bf16.msra.mxu0 %v1944
    %1969 = vmatprep.subr.bf16.mxu0 0
    %1970 = vmatpush1.bf16.msra.mxu0 0
    %1971 = vmatprep.subr.bf16.mxu0 0
    %1972 = vmatpush1.bf16.msra.mxu0 0
    %1973 = vmatprep.subr.bf16.mxu0 0
    %1974 = vmatpush1.bf16.msra.mxu0 0
    %1975 = vmatprep.subr.bf16.mxu0 0
    %1976 = vmatpush1.bf16.msra.mxu0 0
    %1977 = vmatprep.subr.bf16.mxu0 0
    %1978 = vmatpush1.bf16.msra.mxu0 0
    %1979 = vmatprep.subr.bf16.mxu0 0
    %1980 = vmatpush1.bf16.msra.mxu0 0
    %1981 = vmatprep.subr.bf16.mxu0 0
    %1982 = vmatpush1.bf16.msra.mxu0 0
    %1983 = vmatprep.subr.bf16.mxu0 0
    %1984 = vmatpush1.bf16.msra.mxu0 0
    %1985 = vmatprep.mubr.bf16.mxu0 0
    %1986 = vmatmul.mubr.bf16.gmra.mrb[0].mxu0 %v1898
    %v1987 = vpop.f32.mrb[0].mxu0
    %v1988 = vadd.f32 %v1903, %v1987
    %v1989 = vpop.f32.mrb[0].mxu0
    %v1990 = vpop.f32.mrb[0].mxu0
    %v1991 = vadd.f32 %v1903, %v1990
    %v1992 = vpop.f32.mrb[0].mxu0
    %1993 = vdwg.mxu0
    %v1994 = vmax.f32 %v1988, 0.0
    %v1995 = vmax.f32 %v1991, 0.0
    %v1996 = vpack.c.bf16 %v1995, %v1994
    %v1998 = vlaneseq
    %v1999 = vshrl.u32 %v1998, 7
    %v2000 = vsub.s32 0, %v1999
    %v2001 = vrot.slane %v275, %v2000
    %v2019 = vunpack.c.l.b16 %v256
    %v2020 = vunpack.c.l.b16 %v257
    %v2021 = vunpack.c.l.b16 %v258
    %v2022 = vunpack.c.l.b16 %v259
    %v2023 = vunpack.c.l.b16 %v260
    %v2024 = vunpack.c.l.b16 %v261
    %v2025 = vunpack.c.l.b16 %v262
    %v2026 = vunpack.c.l.b16 %v263
    %v2027 = vunpack.c.l.b16 %v264
    %v2028 = vunpack.c.l.b16 %v265
    %v2029 = vunpack.c.l.b16 %v266
    %v2030 = vunpack.c.l.b16 %v267
    %v2031 = vunpack.c.l.b16 %v268
    %v2032 = vunpack.c.l.b16 %v269
    %v2033 = vunpack.c.l.b16 %v270
    %v2034 = vunpack.c.l.b16 %v271
    %v2035 = vpack.c.b16 %v2020, %v2019
    %v2036 = vpack.c.b16 %v2022, %v2021
    %v2037 = vpack.c.b16 %v2024, %v2023
    %v2038 = vpack.c.b16 %v2026, %v2025
    %v2039 = vpack.c.b16 %v2028, %v2027
    %v2040 = vpack.c.b16 %v2030, %v2029
    %v2041 = vpack.c.b16 %v2032, %v2031
    %v2042 = vpack.c.b16 %v2034, %v2033
    %2051 = vmatprep.subr.bf16.mxu0 0
    %2052 = vmatpush1.bf16.msra.mxu0 %v2035
    %2053 = vmatprep.subr.bf16.mxu0 0
    %2054 = vmatpush1.bf16.msra.mxu0 %v2036
    %2055 = vmatprep.subr.bf16.mxu0 0
    %2056 = vmatpush1.bf16.msra.mxu0 %v2037
    %2057 = vmatprep.subr.bf16.mxu0 0
    %2058 = vmatpush1.bf16.msra.mxu0 %v2038
    %2059 = vmatprep.subr.bf16.mxu0 0
    %2060 = vmatpush1.bf16.msra.mxu0 %v2039
    %2061 = vmatprep.subr.bf16.mxu0 0
    %2062 = vmatpush1.bf16.msra.mxu0 %v2040
    %2063 = vmatprep.subr.bf16.mxu0 0
    %2064 = vmatpush1.bf16.msra.mxu0 %v2041
    %2065 = vmatprep.subr.bf16.mxu0 0
    %2066 = vmatpush1.bf16.msra.mxu0 %v2042
    %2067 = vmatprep.subr.bf16.mxu0 0
    %2068 = vmatpush1.bf16.msra.mxu0 0
    %2069 = vmatprep.subr.bf16.mxu0 0
    %2070 = vmatpush1.bf16.msra.mxu0 0
    %2071 = vmatprep.subr.bf16.mxu0 0
    %2072 = vmatpush1.bf16.msra.mxu0 0
    %2073 = vmatprep.subr.bf16.mxu0 0
    %2074 = vmatpush1.bf16.msra.mxu0 0
    %2075 = vmatprep.subr.bf16.mxu0 0
    %2076 = vmatpush1.bf16.msra.mxu0 0
    %2077 = vmatprep.subr.bf16.mxu0 0
    %2078 = vmatpush1.bf16.msra.mxu0 0
    %2079 = vmatprep.subr.bf16.mxu0 0
    %2080 = vmatpush1.bf16.msra.mxu0 0
    %2081 = vmatprep.subr.bf16.mxu0 0
    %2082 = vmatpush1.bf16.msra.mxu0 0
    %2083 = vmatprep.mubr.bf16.mxu0 0
    %2084 = vmatmul.mubr.bf16.gmra.mrb[0].mxu0 %v1996
    %v2085 = vpop.f32.mrb[0].mxu0
    %v2086 = vadd.f32 %v2001, %v2085
    %v2087 = vpop.f32.mrb[0].mxu0
    %v2088 = vpop.f32.mrb[0].mxu0
    %v2089 = vadd.f32 %v2001, %v2088
    %v2090 = vpop.f32.mrb[0].mxu0
    %2091 = vdwg.mxu0
    %v2092 = vadd.f32 %v1896, %v2086
    %v2093 = vadd.f32 %v1897, %v2089
    %2094 = vadd.xlane.f32.xlu0 %v2092
    %v2095 = vpop.xlane.xlu0 %2094
    %2096 = vadd.xlane.f32.xlu0 %v2093
    %v2097 = vpop.xlane.xlu0 %2096
    %v2098 = vmul.f32 %v2095, 0.0078125
    %v2099 = vmul.f32 %v2097, 0.0078125
    %v2100 = vsub.f32 %v2092, %v2098
    %v2101 = vsub.f32 %v2093, %v2099
    %v2102 = vmul.f32 %v2100, %v2100
    %v2103 = vmul.f32 %v2101, %v2101
    %2104 = vadd.xlane.f32.xlu0 %v2102
    %v2105 = vpop.xlane.xlu0 %2104
    %2106 = vadd.xlane.f32.xlu0 %v2103
    %v2107 = vpop.xlane.xlu0 %2106
    %v2108 = vmul.f32 %v2105, 0.0078125
    %v2109 = vmul.f32 %v2107, 0.0078125
    %v2110 = vadd.f32 %v2108, 1e-05
    %v2111 = vadd.f32 %v2109, 1e-05
    %v2112 = vrsqrt.pop %v2110
    %v2113 = vrsqrt.pop %v2111
    %v2114 = vmul.f32 %v2100, %v2112
    %v2115 = vmul.f32 %v2101, %v2113
    %v2117 = vlaneseq
    %v2118 = vshrl.u32 %v2117, 7
    %v2119 = vsub.s32 0, %v2118
    %v2120 = vrot.slane %v278, %v2119
    %v2122 = vmul.f32 %v2114, %v2120
    %v2123 = vmul.f32 %v2115, %v2120
    %v2125 = vlaneseq
    %v2126 = vshrl.u32 %v2125, 7
    %v2127 = vsub.s32 0, %v2126
    %v2128 = vrot.slane %v279, %v2127
    %v2130 = vadd.f32 %v2122, %v2128
    %v2131 = vadd.f32 %v2123, %v2128
    %s2132 = scalar_lea.vmem [#allocation2], 384
    %v2133 = vld [vmem:[%s2132] sm:$0xff]
    %v2134 = vld [vmem:[%s2132 + $0x8] sm:$0xf]
    %v2135 = vld [vmem:[%s2132 + $0x18] sm:$0xff]
    %v2136 = vld [vmem:[%s2132 + $0x20] sm:$0xf]
    %v2137 = vld [vmem:[%s2132 + $0x30] sm:$0xff]
    %v2138 = vld [vmem:[%s2132 + $0x38] sm:$0xf]
    %v2139 = vld [vmem:[%s2132 + $0x48] sm:$0xff]
    %v2140 = vld [vmem:[%s2132 + $0x50] sm:$0xf]
    %v2141 = vld [vmem:[%s2132 + $0x60] sm:$0xff]
    %v2142 = vld [vmem:[%s2132 + $0x68] sm:$0xf]
    %v2143 = vld [vmem:[%s2132 + $0x78] sm:$0xff]
    %v2144 = vld [vmem:[%s2132 + $0x80] sm:$0xf]
    %v2145 = vld [vmem:[%s2132 + $0x90] sm:$0xff]
    %v2146 = vld [vmem:[%s2132 + $0x98] sm:$0xf]
    %v2147 = vld [vmem:[%s2132 + $0xa8] sm:$0xff]
    %v2148 = vld [vmem:[%s2132 + $0xb0] sm:$0xf]
    %v2149 = vld [vmem:[%s2132 + $0xc0] sm:$0xff]
    %v2150 = vld [vmem:[%s2132 + $0xc8] sm:$0xf]
    %v2151 = vld [vmem:[%s2132 + $0xd8] sm:$0xff]
    %v2152 = vld [vmem:[%s2132 + $0xe0] sm:$0xf]
    %v2153 = vld [vmem:[%s2132 + $0xf0] sm:$0xff]
    %v2154 = vld [vmem:[%s2132 + $0xf8] sm:$0xf]
    %v2155 = vld [vmem:[%s2132 + $0x108] sm:$0xff]
    %v2156 = vld [vmem:[%s2132 + $0x110] sm:$0xf]
    %v2157 = vld [vmem:[%s2132 + $0x120] sm:$0xff]
    %v2158 = vld [vmem:[%s2132 + $0x128] sm:$0xf]
    %v2159 = vld [vmem:[%s2132 + $0x138] sm:$0xff]
    %v2160 = vld [vmem:[%s2132 + $0x140] sm:$0xf]
    %v2161 = vld [vmem:[%s2132 + $0x150] sm:$0xff]
    %v2162 = vld [vmem:[%s2132 + $0x158] sm:$0xf]
    %v2163 = vld [vmem:[%s2132 + $0x168] sm:$0xff]
    %v2164 = vld [vmem:[%s2132 + $0x170] sm:$0xf]
    %v2165 = vld [vmem:[%s2132 + $0xc] sm:$0xf]
    %v2166 = vld [vmem:[%s2132 + $0x24] sm:$0xf]
    %v2167 = vld [vmem:[%s2132 + $0x3c] sm:$0xf]
    %v2168 = vld [vmem:[%s2132 + $0x54] sm:$0xf]
    %v2169 = vld [vmem:[%s2132 + $0x6c] sm:$0xf]
    %v2170 = vld [vmem:[%s2132 + $0x84] sm:$0xf]
    %v2171 = vld [vmem:[%s2132 + $0x9c] sm:$0xf]
    %v2172 = vld [vmem:[%s2132 + $0xb4] sm:$0xf]
    %v2173 = vld [vmem:[%s2132 + $0xcc] sm:$0xf]
    %v2174 = vld [vmem:[%s2132 + $0xe4] sm:$0xf]
    %v2175 = vld [vmem:[%s2132 + $0xfc] sm:$0xf]
    %v2176 = vld [vmem:[%s2132 + $0x114] sm:$0xf]
    %v2177 = vld [vmem:[%s2132 + $0x12c] sm:$0xf]
    %v2178 = vld [vmem:[%s2132 + $0x144] sm:$0xf]
    %v2179 = vld [vmem:[%s2132 + $0x15c] sm:$0xf]
    %v2180 = vld [vmem:[%s2132 + $0x174] sm:$0xf]
    %v2181 = vld [vmem:[%s2132 + $0x10] sm:$0xf]
    %v2182 = vld [vmem:[%s2132 + $0x28] sm:$0xf]
    %v2183 = vld [vmem:[%s2132 + $0x40] sm:$0xf]
    %v2184 = vld [vmem:[%s2132 + $0x58] sm:$0xf]
    %v2185 = vld [vmem:[%s2132 + $0x70] sm:$0xf]
    %v2186 = vld [vmem:[%s2132 + $0x88] sm:$0xf]
    %v2187 = vld [vmem:[%s2132 + $0xa0] sm:$0xf]
    %v2188 = vld [vmem:[%s2132 + $0xb8] sm:$0xf]
    %v2189 = vld [vmem:[%s2132 + $0xd0] sm:$0xf]
    %v2190 = vld [vmem:[%s2132 + $0xe8] sm:$0xf]
    %v2191 = vld [vmem:[%s2132 + $0x100] sm:$0xf]
    %v2192 = vld [vmem:[%s2132 + $0x118] sm:$0xf]
    %v2193 = vld [vmem:[%s2132 + $0x130] sm:$0xf]
    %v2194 = vld [vmem:[%s2132 + $0x148] sm:$0xf]
    %v2195 = vld [vmem:[%s2132 + $0x160] sm:$0xf]
    %v2196 = vld [vmem:[%s2132 + $0x178] sm:$0xf]
    %v2197 = vld [vmem:[%s2132 + $0x14] sm:$0xf]
    %v2198 = vld [vmem:[%s2132 + $0x2c] sm:$0xf]
    %v2199 = vld [vmem:[%s2132 + $0x44] sm:$0xf]
    %v2200 = vld [vmem:[%s2132 + $0x5c] sm:$0xf]
    %v2201 = vld [vmem:[%s2132 + $0x74] sm:$0xf]
    %v2202 = vld [vmem:[%s2132 + $0x8c] sm:$0xf]
    %v2203 = vld [vmem:[%s2132 + $0xa4] sm:$0xf]
    %v2204 = vld [vmem:[%s2132 + $0xbc] sm:$0xf]
    %v2205 = vld [vmem:[%s2132 + $0xd4] sm:$0xf]
    %v2206 = vld [vmem:[%s2132 + $0xec] sm:$0xf]
    %v2207 = vld [vmem:[%s2132 + $0x104] sm:$0xf]
    %v2208 = vld [vmem:[%s2132 + $0x11c] sm:$0xf]
    %v2209 = vld [vmem:[%s2132 + $0x134] sm:$0xf]
    %v2210 = vld [vmem:[%s2132 + $0x14c] sm:$0xf]
    %v2211 = vld [vmem:[%s2132 + $0x164] sm:$0xf]
    %v2212 = vld [vmem:[%s2132 + $0x17c] sm:$0xf]
    %s2213 = scalar_lea.vmem %s3, 10
    %v2214 = vld [vmem:[%s2213] sm:$0x7]
    %v2215 = vld [vmem:[%s2213 + $0x3] sm:$0x1]
    %v2216 = vld [vmem:[%s2213 + $0x4] sm:$0x1]
    %v2217 = vld [vmem:[%s2213 + $0x5] sm:$0x1]
    %v2218 = vld [vmem:[%s2213 + $0x6] sm:$0x1]
    %v2219 = vld [vmem:[%s2213 + $0x7] sm:$0x1]
    %v2220 = vld [vmem:[%s2213 + $0x8] sm:$0x1]
    %v2221 = vld [vmem:[%s2213 + $0x9] sm:$0x1]
    %v2222 = vpack.c.bf16 %v2131, %v2130
    %v2224 = vlaneseq
    %v2225 = vshrl.u32 %v2224, 7
    %v2226 = vsub.s32 0, %v2225
    %v2227 = vrot.slane %v2214, %v2226
    %v2228 = vlaneseq
    %v2229 = vshrl.u32 %v2228, 7
    %v2230 = vsub.s32 1, %v2229
    %v2231 = vrot.slane %v2214, %v2230
    %v2232 = vlaneseq
    %v2233 = vshrl.u32 %v2232, 7
    %v2234 = vsub.s32 2, %v2233
    %v2235 = vrot.slane %v2214, %v2234
    %v2271 = vunpack.c.l.b16 %v2133
    %v2272 = vunpack.c.h.b16 %v2133
    %v2273 = vunpack.c.l.b16 %v2134
    %v2274 = vunpack.c.l.b16 %v2135
    %v2275 = vunpack.c.h.b16 %v2135
    %v2276 = vunpack.c.l.b16 %v2136
    %v2277 = vunpack.c.l.b16 %v2137
    %v2278 = vunpack.c.h.b16 %v2137
    %v2279 = vunpack.c.l.b16 %v2138
    %v2280 = vunpack.c.l.b16 %v2139
    %v2281 = vunpack.c.h.b16 %v2139
    %v2282 = vunpack.c.l.b16 %v2140
    %v2283 = vunpack.c.l.b16 %v2141
    %v2284 = vunpack.c.h.b16 %v2141
    %v2285 = vunpack.c.l.b16 %v2142
    %v2286 = vunpack.c.l.b16 %v2143
    %v2287 = vunpack.c.h.b16 %v2143
    %v2288 = vunpack.c.l.b16 %v2144
    %v2289 = vunpack.c.l.b16 %v2145
    %v2290 = vunpack.c.h.b16 %v2145
    %v2291 = vunpack.c.l.b16 %v2146
    %v2292 = vunpack.c.l.b16 %v2147
    %v2293 = vunpack.c.h.b16 %v2147
    %v2294 = vunpack.c.l.b16 %v2148
    %v2295 = vunpack.c.l.b16 %v2149
    %v2296 = vunpack.c.h.b16 %v2149
    %v2297 = vunpack.c.l.b16 %v2150
    %v2298 = vunpack.c.l.b16 %v2151
    %v2299 = vunpack.c.h.b16 %v2151
    %v2300 = vunpack.c.l.b16 %v2152
    %v2301 = vunpack.c.l.b16 %v2153
    %v2302 = vunpack.c.h.b16 %v2153
    %v2303 = vunpack.c.l.b16 %v2154
    %v2304 = vunpack.c.l.b16 %v2155
    %v2305 = vunpack.c.h.b16 %v2155
    %v2306 = vunpack.c.l.b16 %v2156
    %v2307 = vunpack.c.l.b16 %v2157
    %v2308 = vunpack.c.h.b16 %v2157
    %v2309 = vunpack.c.l.b16 %v2158
    %v2310 = vunpack.c.l.b16 %v2159
    %v2311 = vunpack.c.h.b16 %v2159
    %v2312 = vunpack.c.l.b16 %v2160
    %v2313 = vunpack.c.l.b16 %v2161
    %v2314 = vunpack.c.h.b16 %v2161
    %v2315 = vunpack.c.l.b16 %v2162
    %v2316 = vunpack.c.l.b16 %v2163
    %v2317 = vunpack.c.h.b16 %v2163
    %v2318 = vunpack.c.l.b16 %v2164
    %v2319 = vpack.c.b16 %v2274, %v2271
    %v2320 = vpack.c.b16 %v2275, %v2272
    %v2321 = vpack.c.b16 %v2276, %v2273
    %v2322 = vpack.c.b16 %v2280, %v2277
    %v2323 = vpack.c.b16 %v2281, %v2278
    %v2324 = vpack.c.b16 %v2282, %v2279
    %v2325 = vpack.c.b16 %v2286, %v2283
    %v2326 = vpack.c.b16 %v2287, %v2284
    %v2327 = vpack.c.b16 %v2288, %v2285
    %v2328 = vpack.c.b16 %v2292, %v2289
    %v2329 = vpack.c.b16 %v2293, %v2290
    %v2330 = vpack.c.b16 %v2294, %v2291
    %v2331 = vpack.c.b16 %v2298, %v2295
    %v2332 = vpack.c.b16 %v2299, %v2296
    %v2333 = vpack.c.b16 %v2300, %v2297
    %v2334 = vpack.c.b16 %v2304, %v2301
    %v2335 = vpack.c.b16 %v2305, %v2302
    %v2336 = vpack.c.b16 %v2306, %v2303
    %v2337 = vpack.c.b16 %v2310, %v2307
    %v2338 = vpack.c.b16 %v2311, %v2308
    %v2339 = vpack.c.b16 %v2312, %v2309
    %v2340 = vpack.c.b16 %v2316, %v2313
    %v2341 = vpack.c.b16 %v2317, %v2314
    %v2342 = vpack.c.b16 %v2318, %v2315
    %2367 = vmatprep.subr.bf16.mxu0 %v2320
    %2368 = vmatpush1.bf16.msra.mxu0 %v2319
    %2369 = vmatprep.subr.bf16.mxu0 %v2323
    %2370 = vmatpush1.bf16.msra.mxu0 %v2322
    %2371 = vmatprep.subr.bf16.mxu0 %v2326
    %2372 = vmatpush1.bf16.msra.mxu0 %v2325
    %2373 = vmatprep.subr.bf16.mxu0 %v2329
    %2374 = vmatpush1.bf16.msra.mxu0 %v2328
    %2375 = vmatprep.subr.bf16.mxu0 %v2332
    %2376 = vmatpush1.bf16.msra.mxu0 %v2331
    %2377 = vmatprep.subr.bf16.mxu0 %v2335
    %2378 = vmatpush1.bf16.msra.mxu0 %v2334
    %2379 = vmatprep.subr.bf16.mxu0 %v2338
    %2380 = vmatpush1.bf16.msra.mxu0 %v2337
    %2381 = vmatprep.subr.bf16.mxu0 %v2341
    %2382 = vmatpush1.bf16.msra.mxu0 %v2340
    %2383 = vmatprep.subr.bf16.mxu0 0
    %2384 = vmatpush1.bf16.msra.mxu0 0
    %2385 = vmatprep.subr.bf16.mxu0 0
    %2386 = vmatpush1.bf16.msra.mxu0 0
    %2387 = vmatprep.subr.bf16.mxu0 0
    %2388 = vmatpush1.bf16.msra.mxu0 0
    %2389 = vmatprep.subr.bf16.mxu0 0
    %2390 = vmatpush1.bf16.msra.mxu0 0
    %2391 = vmatprep.subr.bf16.mxu0 0
    %2392 = vmatpush1.bf16.msra.mxu0 0
    %2393 = vmatprep.subr.bf16.mxu0 0
    %2394 = vmatpush1.bf16.msra.mxu0 0
    %2395 = vmatprep.subr.bf16.mxu0 0
    %2396 = vmatpush1.bf16.msra.mxu0 0
    %2397 = vmatprep.subr.bf16.mxu0 0
    %2398 = vmatpush1.bf16.msra.mxu0 0
    %2399 = vmatprep.mubr.bf16.mxu0 0
    %2400 = vmatmul.mubr.bf16.gmra.mrb[0].mxu0 %v2222
    %v2401 = vpop.f32.mrb[0].mxu0
    %v2402 = vadd.f32 %v2227, %v2401
    %v2403 = vpop.f32.mrb[0].mxu0
    %v2404 = vadd.f32 %v2231, %v2403
    %v2405 = vpop.f32.mrb[0].mxu0
    %v2406 = vadd.f32 %v2227, %v2405
    %v2407 = vpop.f32.mrb[0].mxu0
    %v2408 = vadd.f32 %v2231, %v2407
    %2409 = vdwg.mxu0
    %2410 = vmatprep.subr.bf16.mxu0 0
    %2411 = vmatpush1.bf16.msra.mxu0 %v2321
    %2412 = vmatprep.subr.bf16.mxu0 0
    %2413 = vmatpush1.bf16.msra.mxu0 %v2324
    %2414 = vmatprep.subr.bf16.mxu0 0
    %2415 = vmatpush1.bf16.msra.mxu0 %v2327
    %2416 = vmatprep.subr.bf16.mxu0 0
    %2417 = vmatpush1.bf16.msra.mxu0 %v2330
    %2418 = vmatprep.subr.bf16.mxu0 0
    %2419 = vmatpush1.bf16.msra.mxu0 %v2333
    %2420 = vmatprep.subr.bf16.mxu0 0
    %2421 = vmatpush1.bf16.msra.mxu0 %v2336
    %2422 = vmatprep.subr.bf16.mxu0 0
    %2423 = vmatpush1.bf16.msra.mxu0 %v2339
    %2424 = vmatprep.subr.bf16.mxu0 0
    %2425 = vmatpush1.bf16.msra.mxu0 %v2342
    %2426 = vmatprep.subr.bf16.mxu0 0
    %2427 = vmatpush1.bf16.msra.mxu0 0
    %2428 = vmatprep.subr.bf16.mxu0 0
    %2429 = vmatpush1.bf16.msra.mxu0 0
    %2430 = vmatprep.subr.bf16.mxu0 0
    %2431 = vmatpush1.bf16.msra.mxu0 0
    %2432 = vmatprep.subr.bf16.mxu0 0
    %2433 = vmatpush1.bf16.msra.mxu0 0
    %2434 = vmatprep.subr.bf16.mxu0 0
    %2435 = vmatpush1.bf16.msra.mxu0 0
    %2436 = vmatprep.subr.bf16.mxu0 0
    %2437 = vmatpush1.bf16.msra.mxu0 0
    %2438 = vmatprep.subr.bf16.mxu0 0
    %2439 = vmatpush1.bf16.msra.mxu0 0
    %2440 = vmatprep.subr.bf16.mxu0 0
    %2441 = vmatpush1.bf16.msra.mxu0 0
    %2442 = vmatprep.mubr.bf16.mxu0 0
    %2443 = vmatmul.mubr.bf16.gmra.mrb[0].mxu0 %v2222
    %v2444 = vpop.f32.mrb[0].mxu0
    %v2445 = vadd.f32 %v2235, %v2444
    %v2446 = vpop.f32.mrb[0].mxu0
    %v2447 = vpop.f32.mrb[0].mxu0
    %v2448 = vadd.f32 %v2235, %v2447
    %v2449 = vpop.f32.mrb[0].mxu0
    %2450 = vdwg.mxu0
    %v2451 = vmul.f32 %v2402, %v176
    %v2452 = vmul.f32 %v2406, %v176
    %2453 = vmatprep.subr.mxu0 0.0
    %2454 = vmatpush1.xpose.msra.mxu0 %v2404
    %2455 = vmatprep.subr.mxu0 0.0
    %2456 = vmatpush1.xpose.msra.mxu0 0.0
    %2457 = vmatprep.subr.mxu0 0.0
    %2458 = vmatpush1.xpose.msra.mxu0 0.0
    %2459 = vmatprep.subr.mxu0 0.0
    %2460 = vmatpush1.xpose.msra.mxu0 0.0
    %2461 = vmatprep.subr.mxu0 0.0
    %2462 = vmatpush1.xpose.msra.mxu0 0.0
    %2463 = vmatprep.subr.mxu0 0.0
    %2464 = vmatpush1.xpose.msra.mxu0 0.0
    %2465 = vmatprep.subr.mxu0 0.0
    %2466 = vmatpush1.xpose.msra.mxu0 0.0
    %2467 = vmatprep.subr.mxu0 0.0
    %2468 = vmatpush1.xpose.msra.mxu0 0.0
    %2469 = vmatprep.subr.mxu0 0.0
    %2470 = vmatpush1.xpose.msra.mxu0 0.0
    %2471 = vmatprep.subr.mxu0 0.0
    %2472 = vmatpush1.xpose.msra.mxu0 0.0
    %2473 = vmatprep.subr.mxu0 0.0
    %2474 = vmatpush1.xpose.msra.mxu0 0.0
    %2475 = vmatprep.subr.mxu0 0.0
    %2476 = vmatpush1.xpose.msra.mxu0 0.0
    %2477 = vmatprep.subr.mxu0 0.0
    %2478 = vmatpush1.xpose.msra.mxu0 0.0
    %2479 = vmatprep.subr.mxu0 0.0
    %2480 = vmatpush1.xpose.msra.mxu0 0.0
    %2481 = vmatprep.subr.mxu0 0.0
    %2482 = vmatpush1.xpose.msra.mxu0 0.0
    %2483 = vmatprep.subr.mxu0 0.0
    %2484 = vmatpush1.xpose.msra.mxu0 0.0
    %2485 = vmatprep.subr.mxu0 0.0
    %2486 = vmatpush1.xpose.msra.mxu0 0.0
    %2487 = vmatprep.subr.mxu0 0.0
    %2488 = vmatpush1.xpose.msra.mxu0 0.0
    %2489 = vmatprep.subr.mxu0 0.0
    %2490 = vmatpush1.xpose.msra.mxu0 0.0
    %2491 = vmatprep.subr.mxu0 0.0
    %2492 = vmatpush1.xpose.msra.mxu0 0.0
    %2493 = vmatprep.subr.mxu0 0.0
    %2494 = vmatpush1.xpose.msra.mxu0 0.0
    %2495 = vmatprep.subr.mxu0 0.0
    %2496 = vmatpush1.xpose.msra.mxu0 0.0
    %2497 = vmatprep.subr.mxu0 0.0
    %2498 = vmatpush1.xpose.msra.mxu0 0.0
    %2499 = vmatprep.subr.mxu0 0.0
    %2500 = vmatpush1.xpose.msra.mxu0 0.0
    %2501 = vmatprep.subr.mxu0 0.0
    %2502 = vmatpush1.xpose.msra.mxu0 0.0
    %2503 = vmatprep.subr.mxu0 0.0
    %2504 = vmatpush1.xpose.msra.mxu0 0.0
    %2505 = vmatprep.subr.mxu0 0.0
    %2506 = vmatpush1.xpose.msra.mxu0 0.0
    %2507 = vmatprep.subr.mxu0 0.0
    %2508 = vmatpush1.xpose.msra.mxu0 0.0
    %2509 = vmatprep.subr.mxu0 0.0
    %2510 = vmatpush1.xpose.msra.mxu0 0.0
    %2511 = vmatprep.subr.mxu0 0.0
    %2512 = vmatpush1.xpose.msra.mxu0 0.0
    %2513 = vmatprep.subr.mxu0 0.0
    %2514 = vmatpush1.xpose.msra.mxu0 0.0
    %2515 = vmatprep.subr.mxu0 0.0
    %2516 = vmatpush1.xpose.msra.mxu0 0.0
    %2517 = vmatprep.mubr.f32.mxu0 0.0
    %2518 = vmatmul.mubr.f32.gmra.mrb[0].mxu0 %v2451
    %v2519 = vpop.f32.mrb[0].mxu0
    %v2520 = vadd.f32 0.0, %v2519
    %v2521 = vpop.f32.mrb[0].mxu0
    %2522 = vdwg.mxu0
    %2523 = vmatprep.subr.mxu0 0.0
    %2524 = vmatpush1.xpose.msra.mxu0 %v2408
    %2525 = vmatprep.subr.mxu0 0.0
    %2526 = vmatpush1.xpose.msra.mxu0 0.0
    %2527 = vmatprep.subr.mxu0 0.0
    %2528 = vmatpush1.xpose.msra.mxu0 0.0
    %2529 = vmatprep.subr.mxu0 0.0
    %2530 = vmatpush1.xpose.msra.mxu0 0.0
    %2531 = vmatprep.subr.mxu0 0.0
    %2532 = vmatpush1.xpose.msra.mxu0 0.0
    %2533 = vmatprep.subr.mxu0 0.0
    %2534 = vmatpush1.xpose.msra.mxu0 0.0
    %2535 = vmatprep.subr.mxu0 0.0
    %2536 = vmatpush1.xpose.msra.mxu0 0.0
    %2537 = vmatprep.subr.mxu0 0.0
    %2538 = vmatpush1.xpose.msra.mxu0 0.0
    %2539 = vmatprep.subr.mxu0 0.0
    %2540 = vmatpush1.xpose.msra.mxu0 0.0
    %2541 = vmatprep.subr.mxu0 0.0
    %2542 = vmatpush1.xpose.msra.mxu0 0.0
    %2543 = vmatprep.subr.mxu0 0.0
    %2544 = vmatpush1.xpose.msra.mxu0 0.0
    %2545 = vmatprep.subr.mxu0 0.0
    %2546 = vmatpush1.xpose.msra.mxu0 0.0
    %2547 = vmatprep.subr.mxu0 0.0
    %2548 = vmatpush1.xpose.msra.mxu0 0.0
    %2549 = vmatprep.subr.mxu0 0.0
    %2550 = vmatpush1.xpose.msra.mxu0 0.0
    %2551 = vmatprep.subr.mxu0 0.0
    %2552 = vmatpush1.xpose.msra.mxu0 0.0
    %2553 = vmatprep.subr.mxu0 0.0
    %2554 = vmatpush1.xpose.msra.mxu0 0.0
    %2555 = vmatprep.subr.mxu0 0.0
    %2556 = vmatpush1.xpose.msra.mxu0 0.0
    %2557 = vmatprep.subr.mxu0 0.0
    %2558 = vmatpush1.xpose.msra.mxu0 0.0
    %2559 = vmatprep.subr.mxu0 0.0
    %2560 = vmatpush1.xpose.msra.mxu0 0.0
    %2561 = vmatprep.subr.mxu0 0.0
    %2562 = vmatpush1.xpose.msra.mxu0 0.0
    %2563 = vmatprep.subr.mxu0 0.0
    %2564 = vmatpush1.xpose.msra.mxu0 0.0
    %2565 = vmatprep.subr.mxu0 0.0
    %2566 = vmatpush1.xpose.msra.mxu0 0.0
    %2567 = vmatprep.subr.mxu0 0.0
    %2568 = vmatpush1.xpose.msra.mxu0 0.0
    %2569 = vmatprep.subr.mxu0 0.0
    %2570 = vmatpush1.xpose.msra.mxu0 0.0
    %2571 = vmatprep.subr.mxu0 0.0
    %2572 = vmatpush1.xpose.msra.mxu0 0.0
    %2573 = vmatprep.subr.mxu0 0.0
    %2574 = vmatpush1.xpose.msra.mxu0 0.0
    %2575 = vmatprep.subr.mxu0 0.0
    %2576 = vmatpush1.xpose.msra.mxu0 0.0
    %2577 = vmatprep.subr.mxu0 0.0
    %2578 = vmatpush1.xpose.msra.mxu0 0.0
    %2579 = vmatprep.subr.mxu0 0.0
    %2580 = vmatpush1.xpose.msra.mxu0 0.0
    %2581 = vmatprep.subr.mxu0 0.0
    %2582 = vmatpush1.xpose.msra.mxu0 0.0
    %2583 = vmatprep.subr.mxu0 0.0
    %2584 = vmatpush1.xpose.msra.mxu0 0.0
    %2585 = vmatprep.subr.mxu0 0.0
    %2586 = vmatpush1.xpose.msra.mxu0 0.0
    %2587 = vmatprep.mubr.f32.mxu0 0.0
    %2588 = vmatmul.mubr.f32.gmra.mrb[0].mxu0 %v2452
    %v2589 = vpop.f32.mrb[0].mxu0
    %v2590 = vadd.f32 0.0, %v2589
    %v2591 = vpop.f32.mrb[0].mxu0
    %2592 = vdwg.mxu0
    %v2593 = vsel %vm651, %v2520, -inf
    %2594 = vmax.xlane.f32.xlu0 %v2593
    %v2595 = vpop.xlane.xlu0 %2594
    %v2596 = vsel %vm651, %v2590, -inf
    %2597 = vmax.xlane.f32.xlu0 %v2596
    %v2598 = vpop.xlane.xlu0 %2597
    %v2599 = vsub.f32 %v2520, %v2595
    %v2600 = vsub.f32 %v2590, %v2598
    %v2601 = vmul.f32 %v2599, 1.442695
    %v2602 = vpow.pop %v2601
    %v2603 = vmul.f32 %v2600, 1.442695
    %v2604 = vpow.pop %v2603
    %v2605 = vsel %vm651, %v2602, 0.0
    %2606 = vadd.xlane.f32.xlu0 %v2605
    %v2607 = vpop.xlane.xlu0 %2606
    %v2608 = vsel %vm651, %v2604, 0.0
    %2609 = vadd.xlane.f32.xlu0 %v2608
    %v2610 = vpop.xlane.xlu0 %2609
    %v2611 = vrcp.pop %v2607
    %v2612 = vmul.f32 %v2602, %v2611
    %v2613 = vrcp.pop %v2610
    %v2614 = vmul.f32 %v2604, %v2613
    %v2615 = vmul.f32 %v2445, %v176
    %v2616 = vmul.f32 %v2448, %v176
    %v2617 = vmul.f32 %v2402, %v181
    %v2618 = vmul.f32 %v2406, %v181
    %2619 = vmatprep.subr.mxu0 0.0
    %2620 = vmatpush1.xpose.msra.mxu0 %v2404
    %2621 = vmatprep.subr.mxu0 0.0
    %2622 = vmatpush1.xpose.msra.mxu0 0.0
    %2623 = vmatprep.subr.mxu0 0.0
    %2624 = vmatpush1.xpose.msra.mxu0 0.0
    %2625 = vmatprep.subr.mxu0 0.0
    %2626 = vmatpush1.xpose.msra.mxu0 0.0
    %2627 = vmatprep.subr.mxu0 0.0
    %2628 = vmatpush1.xpose.msra.mxu0 0.0
    %2629 = vmatprep.subr.mxu0 0.0
    %2630 = vmatpush1.xpose.msra.mxu0 0.0
    %2631 = vmatprep.subr.mxu0 0.0
    %2632 = vmatpush1.xpose.msra.mxu0 0.0
    %2633 = vmatprep.subr.mxu0 0.0
    %2634 = vmatpush1.xpose.msra.mxu0 0.0
    %2635 = vmatprep.subr.mxu0 0.0
    %2636 = vmatpush1.xpose.msra.mxu0 0.0
    %2637 = vmatprep.subr.mxu0 0.0
    %2638 = vmatpush1.xpose.msra.mxu0 0.0
    %2639 = vmatprep.subr.mxu0 0.0
    %2640 = vmatpush1.xpose.msra.mxu0 0.0
    %2641 = vmatprep.subr.mxu0 0.0
    %2642 = vmatpush1.xpose.msra.mxu0 0.0
    %2643 = vmatprep.subr.mxu0 0.0
    %2644 = vmatpush1.xpose.msra.mxu0 0.0
    %2645 = vmatprep.subr.mxu0 0.0
    %2646 = vmatpush1.xpose.msra.mxu0 0.0
    %2647 = vmatprep.subr.mxu0 0.0
    %2648 = vmatpush1.xpose.msra.mxu0 0.0
    %2649 = vmatprep.subr.mxu0 0.0
    %2650 = vmatpush1.xpose.msra.mxu0 0.0
    %2651 = vmatprep.subr.mxu0 0.0
    %2652 = vmatpush1.xpose.msra.mxu0 0.0
    %2653 = vmatprep.subr.mxu0 0.0
    %2654 = vmatpush1.xpose.msra.mxu0 0.0
    %2655 = vmatprep.subr.mxu0 0.0
    %2656 = vmatpush1.xpose.msra.mxu0 0.0
    %2657 = vmatprep.subr.mxu0 0.0
    %2658 = vmatpush1.xpose.msra.mxu0 0.0
    %2659 = vmatprep.subr.mxu0 0.0
    %2660 = vmatpush1.xpose.msra.mxu0 0.0
    %2661 = vmatprep.subr.mxu0 0.0
    %2662 = vmatpush1.xpose.msra.mxu0 0.0
    %2663 = vmatprep.subr.mxu0 0.0
    %2664 = vmatpush1.xpose.msra.mxu0 0.0
    %2665 = vmatprep.subr.mxu0 0.0
    %2666 = vmatpush1.xpose.msra.mxu0 0.0
    %2667 = vmatprep.subr.mxu0 0.0
    %2668 = vmatpush1.xpose.msra.mxu0 0.0
    %2669 = vmatprep.subr.mxu0 0.0
    %2670 = vmatpush1.xpose.msra.mxu0 0.0
    %2671 = vmatprep.subr.mxu0 0.0
    %2672 = vmatpush1.xpose.msra.mxu0 0.0
    %2673 = vmatprep.subr.mxu0 0.0
    %2674 = vmatpush1.xpose.msra.mxu0 0.0
    %2675 = vmatprep.subr.mxu0 0.0
    %2676 = vmatpush1.xpose.msra.mxu0 0.0
    %2677 = vmatprep.subr.mxu0 0.0
    %2678 = vmatpush1.xpose.msra.mxu0 0.0
    %2679 = vmatprep.subr.mxu0 0.0
    %2680 = vmatpush1.xpose.msra.mxu0 0.0
    %2681 = vmatprep.subr.mxu0 0.0
    %2682 = vmatpush1.xpose.msra.mxu0 0.0
    %2683 = vmatprep.mubr.f32.mxu0 0.0
    %2684 = vmatmul.mubr.f32.gmra.mrb[0].mxu0 %v2617
    %v2685 = vpop.f32.mrb[0].mxu0
    %v2686 = vadd.f32 0.0, %v2685
    %v2687 = vpop.f32.mrb[0].mxu0
    %2688 = vdwg.mxu0
    %2689 = vmatprep.subr.mxu0 0.0
    %2690 = vmatpush1.xpose.msra.mxu0 %v2408
    %2691 = vmatprep.subr.mxu0 0.0
    %2692 = vmatpush1.xpose.msra.mxu0 0.0
    %2693 = vmatprep.subr.mxu0 0.0
    %2694 = vmatpush1.xpose.msra.mxu0 0.0
    %2695 = vmatprep.subr.mxu0 0.0
    %2696 = vmatpush1.xpose.msra.mxu0 0.0
    %2697 = vmatprep.subr.mxu0 0.0
    %2698 = vmatpush1.xpose.msra.mxu0 0.0
    %2699 = vmatprep.subr.mxu0 0.0
    %2700 = vmatpush1.xpose.msra.mxu0 0.0
    %2701 = vmatprep.subr.mxu0 0.0
    %2702 = vmatpush1.xpose.msra.mxu0 0.0
    %2703 = vmatprep.subr.mxu0 0.0
    %2704 = vmatpush1.xpose.msra.mxu0 0.0
    %2705 = vmatprep.subr.mxu0 0.0
    %2706 = vmatpush1.xpose.msra.mxu0 0.0
    %2707 = vmatprep.subr.mxu0 0.0
    %2708 = vmatpush1.xpose.msra.mxu0 0.0
    %2709 = vmatprep.subr.mxu0 0.0
    %2710 = vmatpush1.xpose.msra.mxu0 0.0
    %2711 = vmatprep.subr.mxu0 0.0
    %2712 = vmatpush1.xpose.msra.mxu0 0.0
    %2713 = vmatprep.subr.mxu0 0.0
    %2714 = vmatpush1.xpose.msra.mxu0 0.0
    %2715 = vmatprep.subr.mxu0 0.0
    %2716 = vmatpush1.xpose.msra.mxu0 0.0
    %2717 = vmatprep.subr.mxu0 0.0
    %2718 = vmatpush1.xpose.msra.mxu0 0.0
    %2719 = vmatprep.subr.mxu0 0.0
    %2720 = vmatpush1.xpose.msra.mxu0 0.0
    %2721 = vmatprep.subr.mxu0 0.0
    %2722 = vmatpush1.xpose.msra.mxu0 0.0
    %2723 = vmatprep.subr.mxu0 0.0
    %2724 = vmatpush1.xpose.msra.mxu0 0.0
    %2725 = vmatprep.subr.mxu0 0.0
    %2726 = vmatpush1.xpose.msra.mxu0 0.0
    %2727 = vmatprep.subr.mxu0 0.0
    %2728 = vmatpush1.xpose.msra.mxu0 0.0
    %2729 = vmatprep.subr.mxu0 0.0
    %2730 = vmatpush1.xpose.msra.mxu0 0.0
    %2731 = vmatprep.subr.mxu0 0.0
    %2732 = vmatpush1.xpose.msra.mxu0 0.0
    %2733 = vmatprep.subr.mxu0 0.0
    %2734 = vmatpush1.xpose.msra.mxu0 0.0
    %2735 = vmatprep.subr.mxu0 0.0
    %2736 = vmatpush1.xpose.msra.mxu0 0.0
    %2737 = vmatprep.subr.mxu0 0.0
    %2738 = vmatpush1.xpose.msra.mxu0 0.0
    %2739 = vmatprep.subr.mxu0 0.0
    %2740 = vmatpush1.xpose.msra.mxu0 0.0
    %2741 = vmatprep.subr.mxu0 0.0
    %2742 = vmatpush1.xpose.msra.mxu0 0.0
    %2743 = vmatprep.subr.mxu0 0.0
    %2744 = vmatpush1.xpose.msra.mxu0 0.0
    %2745 = vmatprep.subr.mxu0 0.0
    %2746 = vmatpush1.xpose.msra.mxu0 0.0
    %2747 = vmatprep.subr.mxu0 0.0
    %2748 = vmatpush1.xpose.msra.mxu0 0.0
    %2749 = vmatprep.subr.mxu0 0.0
    %2750 = vmatpush1.xpose.msra.mxu0 0.0
    %2751 = vmatprep.subr.mxu0 0.0
    %2752 = vmatpush1.xpose.msra.mxu0 0.0
    %2753 = vmatprep.mubr.f32.mxu0 0.0
    %2754 = vmatmul.mubr.f32.gmra.mrb[0].mxu0 %v2618
    %v2755 = vpop.f32.mrb[0].mxu0
    %v2756 = vadd.f32 0.0, %v2755
    %v2757 = vpop.f32.mrb[0].mxu0
    %2758 = vdwg.mxu0
    %v2759 = vsel %vm651, %v2686, -inf
    %2760 = vmax.xlane.f32.xlu0 %v2759
    %v2761 = vpop.xlane.xlu0 %2760
    %v2762 = vsel %vm651, %v2756, -inf
    %2763 = vmax.xlane.f32.xlu0 %v2762
    %v2764 = vpop.xlane.xlu0 %2763
    %v2765 = vsub.f32 %v2686, %v2761
    %v2766 = vsub.f32 %v2756, %v2764
    %v2767 = vmul.f32 %v2765, 1.442695
    %v2768 = vpow.pop %v2767
    %v2769 = vmul.f32 %v2766, 1.442695
    %v2770 = vpow.pop %v2769
    %v2771 = vsel %vm651, %v2768, 0.0
    %2772 = vadd.xlane.f32.xlu0 %v2771
    %v2773 = vpop.xlane.xlu0 %2772
    %v2774 = vsel %vm651, %v2770, 0.0
    %2775 = vadd.xlane.f32.xlu0 %v2774
    %v2776 = vpop.xlane.xlu0 %2775
    %v2777 = vrcp.pop %v2773
    %v2778 = vmul.f32 %v2768, %v2777
    %v2779 = vrcp.pop %v2776
    %v2780 = vmul.f32 %v2770, %v2779
    %v2781 = vmul.f32 %v2445, %v181
    %v2782 = vmul.f32 %v2448, %v181
    %v2784 = vsel %vm651, %v2778, 0
    %2786 = vmatprep.subr.mxu0 0.0
    %2787 = vmatpush1.msra.mxu0 %v2781
    %2788 = vmatprep.subr.mxu0 0.0
    %2789 = vmatpush1.msra.mxu0 0.0
    %2790 = vmatprep.subr.mxu0 0.0
    %2791 = vmatpush1.msra.mxu0 0.0
    %2792 = vmatprep.subr.mxu0 0.0
    %2793 = vmatpush1.msra.mxu0 0.0
    %2794 = vmatprep.subr.mxu0 0.0
    %2795 = vmatpush1.msra.mxu0 0.0
    %2796 = vmatprep.subr.mxu0 0.0
    %2797 = vmatpush1.msra.mxu0 0.0
    %2798 = vmatprep.subr.mxu0 0.0
    %2799 = vmatpush1.msra.mxu0 0.0
    %2800 = vmatprep.subr.mxu0 0.0
    %2801 = vmatpush1.msra.mxu0 0.0
    %2802 = vmatprep.subr.mxu0 0.0
    %2803 = vmatpush1.msra.mxu0 0.0
    %2804 = vmatprep.subr.mxu0 0.0
    %2805 = vmatpush1.msra.mxu0 0.0
    %2806 = vmatprep.subr.mxu0 0.0
    %2807 = vmatpush1.msra.mxu0 0.0
    %2808 = vmatprep.subr.mxu0 0.0
    %2809 = vmatpush1.msra.mxu0 0.0
    %2810 = vmatprep.subr.mxu0 0.0
    %2811 = vmatpush1.msra.mxu0 0.0
    %2812 = vmatprep.subr.mxu0 0.0
    %2813 = vmatpush1.msra.mxu0 0.0
    %2814 = vmatprep.subr.mxu0 0.0
    %2815 = vmatpush1.msra.mxu0 0.0
    %2816 = vmatprep.subr.mxu0 0.0
    %2817 = vmatpush1.msra.mxu0 0.0
    %2818 = vmatprep.subr.mxu0 0.0
    %2819 = vmatpush1.msra.mxu0 0.0
    %2820 = vmatprep.subr.mxu0 0.0
    %2821 = vmatpush1.msra.mxu0 0.0
    %2822 = vmatprep.subr.mxu0 0.0
    %2823 = vmatpush1.msra.mxu0 0.0
    %2824 = vmatprep.subr.mxu0 0.0
    %2825 = vmatpush1.msra.mxu0 0.0
    %2826 = vmatprep.subr.mxu0 0.0
    %2827 = vmatpush1.msra.mxu0 0.0
    %2828 = vmatprep.subr.mxu0 0.0
    %2829 = vmatpush1.msra.mxu0 0.0
    %2830 = vmatprep.subr.mxu0 0.0
    %2831 = vmatpush1.msra.mxu0 0.0
    %2832 = vmatprep.subr.mxu0 0.0
    %2833 = vmatpush1.msra.mxu0 0.0
    %2834 = vmatprep.subr.mxu0 0.0
    %2835 = vmatpush1.msra.mxu0 0.0
    %2836 = vmatprep.subr.mxu0 0.0
    %2837 = vmatpush1.msra.mxu0 0.0
    %2838 = vmatprep.subr.mxu0 0.0
    %2839 = vmatpush1.msra.mxu0 0.0
    %2840 = vmatprep.subr.mxu0 0.0
    %2841 = vmatpush1.msra.mxu0 0.0
    %2842 = vmatprep.subr.mxu0 0.0
    %2843 = vmatpush1.msra.mxu0 0.0
    %2844 = vmatprep.subr.mxu0 0.0
    %2845 = vmatpush1.msra.mxu0 0.0
    %2846 = vmatprep.subr.mxu0 0.0
    %2847 = vmatpush1.msra.mxu0 0.0
    %2848 = vmatprep.subr.mxu0 0.0
    %2849 = vmatpush1.msra.mxu0 0.0
    %2850 = vmatprep.mubr.f32.mxu0 0.0
    %2851 = vmatmul.mubr.f32.gmra.mrb[0].mxu0 %v2784
    %v2852 = vpop.f32.mrb[0].mxu0
    %v2853 = vadd.f32 0.0, %v2852
    %v2854 = vpop.f32.mrb[0].mxu0
    %2855 = vdwg.mxu0
    %v2857 = vsel %vm651, %v2780, 0
    %2859 = vmatprep.subr.mxu0 0.0
    %2860 = vmatpush1.msra.mxu0 %v2782
    %2861 = vmatprep.subr.mxu0 0.0
    %2862 = vmatpush1.msra.mxu0 0.0
    %2863 = vmatprep.subr.mxu0 0.0
    %2864 = vmatpush1.msra.mxu0 0.0
    %2865 = vmatprep.subr.mxu0 0.0
    %2866 = vmatpush1.msra.mxu0 0.0
    %2867 = vmatprep.subr.mxu0 0.0
    %2868 = vmatpush1.msra.mxu0 0.0
    %2869 = vmatprep.subr.mxu0 0.0
    %2870 = vmatpush1.msra.mxu0 0.0
    %2871 = vmatprep.subr.mxu0 0.0
    %2872 = vmatpush1.msra.mxu0 0.0
    %2873 = vmatprep.subr.mxu0 0.0
    %2874 = vmatpush1.msra.mxu0 0.0
    %2875 = vmatprep.subr.mxu0 0.0
    %2876 = vmatpush1.msra.mxu0 0.0
    %2877 = vmatprep.subr.mxu0 0.0
    %2878 = vmatpush1.msra.mxu0 0.0
    %2879 = vmatprep.subr.mxu0 0.0
    %2880 = vmatpush1.msra.mxu0 0.0
    %2881 = vmatprep.subr.mxu0 0.0
    %2882 = vmatpush1.msra.mxu0 0.0
    %2883 = vmatprep.subr.mxu0 0.0
    %2884 = vmatpush1.msra.mxu0 0.0
    %2885 = vmatprep.subr.mxu0 0.0
    %2886 = vmatpush1.msra.mxu0 0.0
    %2887 = vmatprep.subr.mxu0 0.0
    %2888 = vmatpush1.msra.mxu0 0.0
    %2889 = vmatprep.subr.mxu0 0.0
    %2890 = vmatpush1.msra.mxu0 0.0
    %2891 = vmatprep.subr.mxu0 0.0
    %2892 = vmatpush1.msra.mxu0 0.0
    %2893 = vmatprep.subr.mxu0 0.0
    %2894 = vmatpush1.msra.mxu0 0.0
    %2895 = vmatprep.subr.mxu0 0.0
    %2896 = vmatpush1.msra.mxu0 0.0
    %2897 = vmatprep.subr.mxu0 0.0
    %2898 = vmatpush1.msra.mxu0 0.0
    %2899 = vmatprep.subr.mxu0 0.0
    %2900 = vmatpush1.msra.mxu0 0.0
    %2901 = vmatprep.subr.mxu0 0.0
    %2902 = vmatpush1.msra.mxu0 0.0
    %2903 = vmatprep.subr.mxu0 0.0
    %2904 = vmatpush1.msra.mxu0 0.0
    %2905 = vmatprep.subr.mxu0 0.0
    %2906 = vmatpush1.msra.mxu0 0.0
    %2907 = vmatprep.subr.mxu0 0.0
    %2908 = vmatpush1.msra.mxu0 0.0
    %2909 = vmatprep.subr.mxu0 0.0
    %2910 = vmatpush1.msra.mxu0 0.0
    %2911 = vmatprep.subr.mxu0 0.0
    %2912 = vmatpush1.msra.mxu0 0.0
    %2913 = vmatprep.subr.mxu0 0.0
    %2914 = vmatpush1.msra.mxu0 0.0
    %2915 = vmatprep.subr.mxu0 0.0
    %2916 = vmatpush1.msra.mxu0 0.0
    %2917 = vmatprep.subr.mxu0 0.0
    %2918 = vmatpush1.msra.mxu0 0.0
    %2919 = vmatprep.subr.mxu0 0.0
    %2920 = vmatpush1.msra.mxu0 0.0
    %2921 = vmatprep.subr.mxu0 0.0
    %2922 = vmatpush1.msra.mxu0 0.0
    %2923 = vmatprep.mubr.f32.mxu0 0.0
    %2924 = vmatmul.mubr.f32.gmra.mrb[0].mxu0 %v2857
    %v2925 = vpop.f32.mrb[0].mxu0
    %v2926 = vadd.f32 0.0, %v2925
    %v2927 = vpop.f32.mrb[0].mxu0
    %2928 = vdwg.mxu0
    %v2930 = vsel %vm651, %v2612, 0
    %2932 = vmatprep.subr.mxu0 0.0
    %2933 = vmatpush1.msra.mxu0 %v2615
    %2934 = vmatprep.subr.mxu0 0.0
    %2935 = vmatpush1.msra.mxu0 0.0
    %2936 = vmatprep.subr.mxu0 0.0
    %2937 = vmatpush1.msra.mxu0 0.0
    %2938 = vmatprep.subr.mxu0 0.0
    %2939 = vmatpush1.msra.mxu0 0.0
    %2940 = vmatprep.subr.mxu0 0.0
    %2941 = vmatpush1.msra.mxu0 0.0
    %2942 = vmatprep.subr.mxu0 0.0
    %2943 = vmatpush1.msra.mxu0 0.0
    %2944 = vmatprep.subr.mxu0 0.0
    %2945 = vmatpush1.msra.mxu0 0.0
    %2946 = vmatprep.subr.mxu0 0.0
    %2947 = vmatpush1.msra.mxu0 0.0
    %2948 = vmatprep.subr.mxu0 0.0
    %2949 = vmatpush1.msra.mxu0 0.0
    %2950 = vmatprep.subr.mxu0 0.0
    %2951 = vmatpush1.msra.mxu0 0.0
    %2952 = vmatprep.subr.mxu0 0.0
    %2953 = vmatpush1.msra.mxu0 0.0
    %2954 = vmatprep.subr.mxu0 0.0
    %2955 = vmatpush1.msra.mxu0 0.0
    %2956 = vmatprep.subr.mxu0 0.0
    %2957 = vmatpush1.msra.mxu0 0.0
    %2958 = vmatprep.subr.mxu0 0.0
    %2959 = vmatpush1.msra.mxu0 0.0
    %2960 = vmatprep.subr.mxu0 0.0
    %2961 = vmatpush1.msra.mxu0 0.0
    %2962 = vmatprep.subr.mxu0 0.0
    %2963 = vmatpush1.msra.mxu0 0.0
    %2964 = vmatprep.subr.mxu0 0.0
    %2965 = vmatpush1.msra.mxu0 0.0
    %2966 = vmatprep.subr.mxu0 0.0
    %2967 = vmatpush1.msra.mxu0 0.0
    %2968 = vmatprep.subr.mxu0 0.0
    %2969 = vmatpush1.msra.mxu0 0.0
    %2970 = vmatprep.subr.mxu0 0.0
    %2971 = vmatpush1.msra.mxu0 0.0
    %2972 = vmatprep.subr.mxu0 0.0
    %2973 = vmatpush1.msra.mxu0 0.0
    %2974 = vmatprep.subr.mxu0 0.0
    %2975 = vmatpush1.msra.mxu0 0.0
    %2976 = vmatprep.subr.mxu0 0.0
    %2977 = vmatpush1.msra.mxu0 0.0
    %2978 = vmatprep.subr.mxu0 0.0
    %2979 = vmatpush1.msra.mxu0 0.0
    %2980 = vmatprep.subr.mxu0 0.0
    %2981 = vmatpush1.msra.mxu0 0.0
    %2982 = vmatprep.subr.mxu0 0.0
    %2983 = vmatpush1.msra.mxu0 0.0
    %2984 = vmatprep.subr.mxu0 0.0
    %2985 = vmatpush1.msra.mxu0 0.0
    %2986 = vmatprep.subr.mxu0 0.0
    %2987 = vmatpush1.msra.mxu0 0.0
    %2988 = vmatprep.subr.mxu0 0.0
    %2989 = vmatpush1.msra.mxu0 0.0
    %2990 = vmatprep.subr.mxu0 0.0
    %2991 = vmatpush1.msra.mxu0 0.0
    %2992 = vmatprep.subr.mxu0 0.0
    %2993 = vmatpush1.msra.mxu0 0.0
    %2994 = vmatprep.subr.mxu0 0.0
    %2995 = vmatpush1.msra.mxu0 0.0
    %2996 = vmatprep.mubr.f32.mxu0 0.0
    %2997 = vmatmul.mubr.f32.gmra.mrb[0].mxu0 %v2930
    %v2998 = vpop.f32.mrb[0].mxu0
    %v2999 = vadd.f32 %v2853, %v2998
    %v3000 = vpop.f32.mrb[0].mxu0
    %3001 = vdwg.mxu0
    %v3003 = vsel %vm651, %v2614, 0
    %3005 = vmatprep.subr.mxu0 0.0
    %3006 = vmatpush1.msra.mxu0 %v2616
    %3007 = vmatprep.subr.mxu0 0.0
    %3008 = vmatpush1.msra.mxu0 0.0
    %3009 = vmatprep.subr.mxu0 0.0
    %3010 = vmatpush1.msra.mxu0 0.0
    %3011 = vmatprep.subr.mxu0 0.0
    %3012 = vmatpush1.msra.mxu0 0.0
    %3013 = vmatprep.subr.mxu0 0.0
    %3014 = vmatpush1.msra.mxu0 0.0
    %3015 = vmatprep.subr.mxu0 0.0
    %3016 = vmatpush1.msra.mxu0 0.0
    %3017 = vmatprep.subr.mxu0 0.0
    %3018 = vmatpush1.msra.mxu0 0.0
    %3019 = vmatprep.subr.mxu0 0.0
    %3020 = vmatpush1.msra.mxu0 0.0
    %3021 = vmatprep.subr.mxu0 0.0
    %3022 = vmatpush1.msra.mxu0 0.0
    %3023 = vmatprep.subr.mxu0 0.0
    %3024 = vmatpush1.msra.mxu0 0.0
    %3025 = vmatprep.subr.mxu0 0.0
    %3026 = vmatpush1.msra.mxu0 0.0
    %3027 = vmatprep.subr.mxu0 0.0
    %3028 = vmatpush1.msra.mxu0 0.0
    %3029 = vmatprep.subr.mxu0 0.0
    %3030 = vmatpush1.msra.mxu0 0.0
    %3031 = vmatprep.subr.mxu0 0.0
    %3032 = vmatpush1.msra.mxu0 0.0
    %3033 = vmatprep.subr.mxu0 0.0
    %3034 = vmatpush1.msra.mxu0 0.0
    %3035 = vmatprep.subr.mxu0 0.0
    %3036 = vmatpush1.msra.mxu0 0.0
    %3037 = vmatprep.subr.mxu0 0.0
    %3038 = vmatpush1.msra.mxu0 0.0
    %3039 = vmatprep.subr.mxu0 0.0
    %3040 = vmatpush1.msra.mxu0 0.0
    %3041 = vmatprep.subr.mxu0 0.0
    %3042 = vmatpush1.msra.mxu0 0.0
    %3043 = vmatprep.subr.mxu0 0.0
    %3044 = vmatpush1.msra.mxu0 0.0
    %3045 = vmatprep.subr.mxu0 0.0
    %3046 = vmatpush1.msra.mxu0 0.0
    %3047 = vmatprep.subr.mxu0 0.0
    %3048 = vmatpush1.msra.mxu0 0.0
    %3049 = vmatprep.subr.mxu0 0.0
    %3050 = vmatpush1.msra.mxu0 0.0
    %3051 = vmatprep.subr.mxu0 0.0
    %3052 = vmatpush1.msra.mxu0 0.0
    %3053 = vmatprep.subr.mxu0 0.0
    %3054 = vmatpush1.msra.mxu0 0.0
    %3055 = vmatprep.subr.mxu0 0.0
    %3056 = vmatpush1.msra.mxu0 0.0
    %3057 = vmatprep.subr.mxu0 0.0
    %3058 = vmatpush1.msra.mxu0 0.0
    %3059 = vmatprep.subr.mxu0 0.0
    %3060 = vmatpush1.msra.mxu0 0.0
    %3061 = vmatprep.subr.mxu0 0.0
    %3062 = vmatpush1.msra.mxu0 0.0
    %3063 = vmatprep.subr.mxu0 0.0
    %3064 = vmatpush1.msra.mxu0 0.0
    %3065 = vmatprep.subr.mxu0 0.0
    %3066 = vmatpush1.msra.mxu0 0.0
    %3067 = vmatprep.subr.mxu0 0.0
    %3068 = vmatpush1.msra.mxu0 0.0
    %3069 = vmatprep.mubr.f32.mxu0 0.0
    %3070 = vmatmul.mubr.f32.gmra.mrb[0].mxu0 %v3003
    %v3071 = vpop.f32.mrb[0].mxu0
    %v3072 = vadd.f32 %v2926, %v3071
    %v3073 = vpop.f32.mrb[0].mxu0
    %3074 = vdwg.mxu0
    %v3075 = vmul.f32 %v2402, %v186
    %v3076 = vmul.f32 %v2406, %v186
    %3077 = vmatprep.subr.mxu0 0.0
    %3078 = vmatpush1.xpose.msra.mxu0 %v2404
    %3079 = vmatprep.subr.mxu0 0.0
    %3080 = vmatpush1.xpose.msra.mxu0 0.0
    %3081 = vmatprep.subr.mxu0 0.0
    %3082 = vmatpush1.xpose.msra.mxu0 0.0
    %3083 = vmatprep.subr.mxu0 0.0
    %3084 = vmatpush1.xpose.msra.mxu0 0.0
    %3085 = vmatprep.subr.mxu0 0.0
    %3086 = vmatpush1.xpose.msra.mxu0 0.0
    %3087 = vmatprep.subr.mxu0 0.0
    %3088 = vmatpush1.xpose.msra.mxu0 0.0
    %3089 = vmatprep.subr.mxu0 0.0
    %3090 = vmatpush1.xpose.msra.mxu0 0.0
    %3091 = vmatprep.subr.mxu0 0.0
    %3092 = vmatpush1.xpose.msra.mxu0 0.0
    %3093 = vmatprep.subr.mxu0 0.0
    %3094 = vmatpush1.xpose.msra.mxu0 0.0
    %3095 = vmatprep.subr.mxu0 0.0
    %3096 = vmatpush1.xpose.msra.mxu0 0.0
    %3097 = vmatprep.subr.mxu0 0.0
    %3098 = vmatpush1.xpose.msra.mxu0 0.0
    %3099 = vmatprep.subr.mxu0 0.0
    %3100 = vmatpush1.xpose.msra.mxu0 0.0
    %3101 = vmatprep.subr.mxu0 0.0
    %3102 = vmatpush1.xpose.msra.mxu0 0.0
    %3103 = vmatprep.subr.mxu0 0.0
    %3104 = vmatpush1.xpose.msra.mxu0 0.0
    %3105 = vmatprep.subr.mxu0 0.0
    %3106 = vmatpush1.xpose.msra.mxu0 0.0
    %3107 = vmatprep.subr.mxu0 0.0
    %3108 = vmatpush1.xpose.msra.mxu0 0.0
    %3109 = vmatprep.subr.mxu0 0.0
    %3110 = vmatpush1.xpose.msra.mxu0 0.0
    %3111 = vmatprep.subr.mxu0 0.0
    %3112 = vmatpush1.xpose.msra.mxu0 0.0
    %3113 = vmatprep.subr.mxu0 0.0
    %3114 = vmatpush1.xpose.msra.mxu0 0.0
    %3115 = vmatprep.subr.mxu0 0.0
    %3116 = vmatpush1.xpose.msra.mxu0 0.0
    %3117 = vmatprep.subr.mxu0 0.0
    %3118 = vmatpush1.xpose.msra.mxu0 0.0
    %3119 = vmatprep.subr.mxu0 0.0
    %3120 = vmatpush1.xpose.msra.mxu0 0.0
    %3121 = vmatprep.subr.mxu0 0.0
    %3122 = vmatpush1.xpose.msra.mxu0 0.0
    %3123 = vmatprep.subr.mxu0 0.0
    %3124 = vmatpush1.xpose.msra.mxu0 0.0
    %3125 = vmatprep.subr.mxu0 0.0
    %3126 = vmatpush1.xpose.msra.mxu0 0.0
    %3127 = vmatprep.subr.mxu0 0.0
    %3128 = vmatpush1.xpose.msra.mxu0 0.0
    %3129 = vmatprep.subr.mxu0 0.0
    %3130 = vmatpush1.xpose.msra.mxu0 0.0
    %3131 = vmatprep.subr.mxu0 0.0
    %3132 = vmatpush1.xpose.msra.mxu0 0.0
    %3133 = vmatprep.subr.mxu0 0.0
    %3134 = vmatpush1.xpose.msra.mxu0 0.0
    %3135 = vmatprep.subr.mxu0 0.0
    %3136 = vmatpush1.xpose.msra.mxu0 0.0
    %3137 = vmatprep.subr.mxu0 0.0
    %3138 = vmatpush1.xpose.msra.mxu0 0.0
    %3139 = vmatprep.subr.mxu0 0.0
    %3140 = vmatpush1.xpose.msra.mxu0 0.0
    %3141 = vmatprep.mubr.f32.mxu0 0.0
    %3142 = vmatmul.mubr.f32.gmra.mrb[0].mxu0 %v3075
    %v3143 = vpop.f32.mrb[0].mxu0
    %v3144 = vadd.f32 0.0, %v3143
    %v3145 = vpop.f32.mrb[0].mxu0
    %3146 = vdwg.mxu0
    %3147 = vmatprep.subr.mxu0 0.0
    %3148 = vmatpush1.xpose.msra.mxu0 %v2408
    %3149 = vmatprep.subr.mxu0 0.0
    %3150 = vmatpush1.xpose.msra.mxu0 0.0
    %3151 = vmatprep.subr.mxu0 0.0
    %3152 = vmatpush1.xpose.msra.mxu0 0.0
    %3153 = vmatprep.subr.mxu0 0.0
    %3154 = vmatpush1.xpose.msra.mxu0 0.0
    %3155 = vmatprep.subr.mxu0 0.0
    %3156 = vmatpush1.xpose.msra.mxu0 0.0
    %3157 = vmatprep.subr.mxu0 0.0
    %3158 = vmatpush1.xpose.msra.mxu0 0.0
    %3159 = vmatprep.subr.mxu0 0.0
    %3160 = vmatpush1.xpose.msra.mxu0 0.0
    %3161 = vmatprep.subr.mxu0 0.0
    %3162 = vmatpush1.xpose.msra.mxu0 0.0
    %3163 = vmatprep.subr.mxu0 0.0
    %3164 = vmatpush1.xpose.msra.mxu0 0.0
    %3165 = vmatprep.subr.mxu0 0.0
    %3166 = vmatpush1.xpose.msra.mxu0 0.0
    %3167 = vmatprep.subr.mxu0 0.0
    %3168 = vmatpush1.xpose.msra.mxu0 0.0
    %3169 = vmatprep.subr.mxu0 0.0
    %3170 = vmatpush1.xpose.msra.mxu0 0.0
    %3171 = vmatprep.subr.mxu0 0.0
    %3172 = vmatpush1.xpose.msra.mxu0 0.0
    %3173 = vmatprep.subr.mxu0 0.0
    %3174 = vmatpush1.xpose.msra.mxu0 0.0
    %3175 = vmatprep.subr.mxu0 0.0
    %3176 = vmatpush1.xpose.msra.mxu0 0.0
    %3177 = vmatprep.subr.mxu0 0.0
    %3178 = vmatpush1.xpose.msra.mxu0 0.0
    %3179 = vmatprep.subr.mxu0 0.0
    %3180 = vmatpush1.xpose.msra.mxu0 0.0
    %3181 = vmatprep.subr.mxu0 0.0
    %3182 = vmatpush1.xpose.msra.mxu0 0.0
    %3183 = vmatprep.subr.mxu0 0.0
    %3184 = vmatpush1.xpose.msra.mxu0 0.0
    %3185 = vmatprep.subr.mxu0 0.0
    %3186 = vmatpush1.xpose.msra.mxu0 0.0
    %3187 = vmatprep.subr.mxu0 0.0
    %3188 = vmatpush1.xpose.msra.mxu0 0.0
    %3189 = vmatprep.subr.mxu0 0.0
    %3190 = vmatpush1.xpose.msra.mxu0 0.0
    %3191 = vmatprep.subr.mxu0 0.0
    %3192 = vmatpush1.xpose.msra.mxu0 0.0
    %3193 = vmatprep.subr.mxu0 0.0
    %3194 = vmatpush1.xpose.msra.mxu0 0.0
    %3195 = vmatprep.subr.mxu0 0.0
    %3196 = vmatpush1.xpose.msra.mxu0 0.0
    %3197 = vmatprep.subr.mxu0 0.0
    %3198 = vmatpush1.xpose.msra.mxu0 0.0
    %3199 = vmatprep.subr.mxu0 0.0
    %3200 = vmatpush1.xpose.msra.mxu0 0.0
    %3201 = vmatprep.subr.mxu0 0.0
    %3202 = vmatpush1.xpose.msra.mxu0 0.0
    %3203 = vmatprep.subr.mxu0 0.0
    %3204 = vmatpush1.xpose.msra.mxu0 0.0
    %3205 = vmatprep.subr.mxu0 0.0
    %3206 = vmatpush1.xpose.msra.mxu0 0.0
    %3207 = vmatprep.subr.mxu0 0.0
    %3208 = vmatpush1.xpose.msra.mxu0 0.0
    %3209 = vmatprep.subr.mxu0 0.0
    %3210 = vmatpush1.xpose.msra.mxu0 0.0
    %3211 = vmatprep.mubr.f32.mxu0 0.0
    %3212 = vmatmul.mubr.f32.gmra.mrb[0].mxu0 %v3076
    %v3213 = vpop.f32.mrb[0].mxu0
    %v3214 = vadd.f32 0.0, %v3213
    %v3215 = vpop.f32.mrb[0].mxu0
    %3216 = vdwg.mxu0
    %v3217 = vsel %vm651, %v3144, -inf
    %3218 = vmax.xlane.f32.xlu0 %v3217
    %v3219 = vpop.xlane.xlu0 %3218
    %v3220 = vsel %vm651, %v3214, -inf
    %3221 = vmax.xlane.f32.xlu0 %v3220
    %v3222 = vpop.xlane.xlu0 %3221
    %v3223 = vsub.f32 %v3144, %v3219
    %v3224 = vsub.f32 %v3214, %v3222
    %v3225 = vmul.f32 %v3223, 1.442695
    %v3226 = vpow.pop %v3225
    %v3227 = vmul.f32 %v3224, 1.442695
    %v3228 = vpow.pop %v3227
    %v3229 = vsel %vm651, %v3226, 0.0
    %3230 = vadd.xlane.f32.xlu0 %v3229
    %v3231 = vpop.xlane.xlu0 %3230
    %v3232 = vsel %vm651, %v3228, 0.0
    %3233 = vadd.xlane.f32.xlu0 %v3232
    %v3234 = vpop.xlane.xlu0 %3233
    %v3235 = vrcp.pop %v3231
    %v3236 = vmul.f32 %v3226, %v3235
    %v3237 = vrcp.pop %v3234
    %v3238 = vmul.f32 %v3228, %v3237
    %v3239 = vmul.f32 %v2445, %v186
    %v3240 = vmul.f32 %v2448, %v186
    %v3242 = vsel %vm651, %v3236, 0
    %3244 = vmatprep.subr.mxu0 0.0
    %3245 = vmatpush1.msra.mxu0 %v3239
    %3246 = vmatprep.subr.mxu0 0.0
    %3247 = vmatpush1.msra.mxu0 0.0
    %3248 = vmatprep.subr.mxu0 0.0
    %3249 = vmatpush1.msra.mxu0 0.0
    %3250 = vmatprep.subr.mxu0 0.0
    %3251 = vmatpush1.msra.mxu0 0.0
    %3252 = vmatprep.subr.mxu0 0.0
    %3253 = vmatpush1.msra.mxu0 0.0
    %3254 = vmatprep.subr.mxu0 0.0
    %3255 = vmatpush1.msra.mxu0 0.0
    %3256 = vmatprep.subr.mxu0 0.0
    %3257 = vmatpush1.msra.mxu0 0.0
    %3258 = vmatprep.subr.mxu0 0.0
    %3259 = vmatpush1.msra.mxu0 0.0
    %3260 = vmatprep.subr.mxu0 0.0
    %3261 = vmatpush1.msra.mxu0 0.0
    %3262 = vmatprep.subr.mxu0 0.0
    %3263 = vmatpush1.msra.mxu0 0.0
    %3264 = vmatprep.subr.mxu0 0.0
    %3265 = vmatpush1.msra.mxu0 0.0
    %3266 = vmatprep.subr.mxu0 0.0
    %3267 = vmatpush1.msra.mxu0 0.0
    %3268 = vmatprep.subr.mxu0 0.0
    %3269 = vmatpush1.msra.mxu0 0.0
    %3270 = vmatprep.subr.mxu0 0.0
    %3271 = vmatpush1.msra.mxu0 0.0
    %3272 = vmatprep.subr.mxu0 0.0
    %3273 = vmatpush1.msra.mxu0 0.0
    %3274 = vmatprep.subr.mxu0 0.0
    %3275 = vmatpush1.msra.mxu0 0.0
    %3276 = vmatprep.subr.mxu0 0.0
    %3277 = vmatpush1.msra.mxu0 0.0
    %3278 = vmatprep.subr.mxu0 0.0
    %3279 = vmatpush1.msra.mxu0 0.0
    %3280 = vmatprep.subr.mxu0 0.0
    %3281 = vmatpush1.msra.mxu0 0.0
    %3282 = vmatprep.subr.mxu0 0.0
    %3283 = vmatpush1.msra.mxu0 0.0
    %3284 = vmatprep.subr.mxu0 0.0
    %3285 = vmatpush1.msra.mxu0 0.0
    %3286 = vmatprep.subr.mxu0 0.0
    %3287 = vmatpush1.msra.mxu0 0.0
    %3288 = vmatprep.subr.mxu0 0.0
    %3289 = vmatpush1.msra.mxu0 0.0
    %3290 = vmatprep.subr.mxu0 0.0
    %3291 = vmatpush1.msra.mxu0 0.0
    %3292 = vmatprep.subr.mxu0 0.0
    %3293 = vmatpush1.msra.mxu0 0.0
    %3294 = vmatprep.subr.mxu0 0.0
    %3295 = vmatpush1.msra.mxu0 0.0
    %3296 = vmatprep.subr.mxu0 0.0
    %3297 = vmatpush1.msra.mxu0 0.0
    %3298 = vmatprep.subr.mxu0 0.0
    %3299 = vmatpush1.msra.mxu0 0.0
    %3300 = vmatprep.subr.mxu0 0.0
    %3301 = vmatpush1.msra.mxu0 0.0
    %3302 = vmatprep.subr.mxu0 0.0
    %3303 = vmatpush1.msra.mxu0 0.0
    %3304 = vmatprep.subr.mxu0 0.0
    %3305 = vmatpush1.msra.mxu0 0.0
    %3306 = vmatprep.subr.mxu0 0.0
    %3307 = vmatpush1.msra.mxu0 0.0
    %3308 = vmatprep.mubr.f32.mxu0 0.0
    %3309 = vmatmul.mubr.f32.gmra.mrb[0].mxu0 %v3242
    %v3310 = vpop.f32.mrb[0].mxu0
    %v3311 = vadd.f32 0.0, %v3310
    %v3312 = vpop.f32.mrb[0].mxu0
    %3313 = vdwg.mxu0
    %v3315 = vsel %vm651, %v3238, 0
    %3317 = vmatprep.subr.mxu0 0.0
    %3318 = vmatpush1.msra.mxu0 %v3240
    %3319 = vmatprep.subr.mxu0 0.0
    %3320 = vmatpush1.msra.mxu0 0.0
    %3321 = vmatprep.subr.mxu0 0.0
    %3322 = vmatpush1.msra.mxu0 0.0
    %3323 = vmatprep.subr.mxu0 0.0
    %3324 = vmatpush1.msra.mxu0 0.0
    %3325 = vmatprep.subr.mxu0 0.0
    %3326 = vmatpush1.msra.mxu0 0.0
    %3327 = vmatprep.subr.mxu0 0.0
    %3328 = vmatpush1.msra.mxu0 0.0
    %3329 = vmatprep.subr.mxu0 0.0
    %3330 = vmatpush1.msra.mxu0 0.0
    %3331 = vmatprep.subr.mxu0 0.0
    %3332 = vmatpush1.msra.mxu0 0.0
    %3333 = vmatprep.subr.mxu0 0.0
    %3334 = vmatpush1.msra.mxu0 0.0
    %3335 = vmatprep.subr.mxu0 0.0
    %3336 = vmatpush1.msra.mxu0 0.0
    %3337 = vmatprep.subr.mxu0 0.0
    %3338 = vmatpush1.msra.mxu0 0.0
    %3339 = vmatprep.subr.mxu0 0.0
    %3340 = vmatpush1.msra.mxu0 0.0
    %3341 = vmatprep.subr.mxu0 0.0
    %3342 = vmatpush1.msra.mxu0 0.0
    %3343 = vmatprep.subr.mxu0 0.0
    %3344 = vmatpush1.msra.mxu0 0.0
    %3345 = vmatprep.subr.mxu0 0.0
    %3346 = vmatpush1.msra.mxu0 0.0
    %3347 = vmatprep.subr.mxu0 0.0
    %3348 = vmatpush1.msra.mxu0 0.0
    %3349 = vmatprep.subr.mxu0 0.0
    %3350 = vmatpush1.msra.mxu0 0.0
    %3351 = vmatprep.subr.mxu0 0.0
    %3352 = vmatpush1.msra.mxu0 0.0
    %3353 = vmatprep.subr.mxu0 0.0
    %3354 = vmatpush1.msra.mxu0 0.0
    %3355 = vmatprep.subr.mxu0 0.0
    %3356 = vmatpush1.msra.mxu0 0.0
    %3357 = vmatprep.subr.mxu0 0.0
    %3358 = vmatpush1.msra.mxu0 0.0
    %3359 = vmatprep.subr.mxu0 0.0
    %3360 = vmatpush1.msra.mxu0 0.0
    %3361 = vmatprep.subr.mxu0 0.0
    %3362 = vmatpush1.msra.mxu0 0.0
    %3363 = vmatprep.subr.mxu0 0.0
    %3364 = vmatpush1.msra.mxu0 0.0
    %3365 = vmatprep.subr.mxu0 0.0
    %3366 = vmatpush1.msra.mxu0 0.0
    %3367 = vmatprep.subr.mxu0 0.0
    %3368 = vmatpush1.msra.mxu0 0.0
    %3369 = vmatprep.subr.mxu0 0.0
    %3370 = vmatpush1.msra.mxu0 0.0
    %3371 = vmatprep.subr.mxu0 0.0
    %3372 = vmatpush1.msra.mxu0 0.0
    %3373 = vmatprep.subr.mxu0 0.0
    %3374 = vmatpush1.msra.mxu0 0.0
    %3375 = vmatprep.subr.mxu0 0.0
    %3376 = vmatpush1.msra.mxu0 0.0
    %3377 = vmatprep.subr.mxu0 0.0
    %3378 = vmatpush1.msra.mxu0 0.0
    %3379 = vmatprep.subr.mxu0 0.0
    %3380 = vmatpush1.msra.mxu0 0.0
    %3381 = vmatprep.mubr.f32.mxu0 0.0
    %3382 = vmatmul.mubr.f32.gmra.mrb[0].mxu0 %v3315
    %v3383 = vpop.f32.mrb[0].mxu0
    %v3384 = vadd.f32 0.0, %v3383
    %v3385 = vpop.f32.mrb[0].mxu0
    %3386 = vdwg.mxu0
    %v3387 = vadd.f32 %v2999, %v3311
    %v3388 = vadd.f32 %v3072, %v3384
    %v3389 = vmul.f32 %v2402, %v191
    %v3390 = vmul.f32 %v2406, %v191
    %3391 = vmatprep.subr.mxu0 0.0
    %3392 = vmatpush1.xpose.msra.mxu0 %v2404
    %3393 = vmatprep.subr.mxu0 0.0
    %3394 = vmatpush1.xpose.msra.mxu0 0.0
    %3395 = vmatprep.subr.mxu0 0.0
    %3396 = vmatpush1.xpose.msra.mxu0 0.0
    %3397 = vmatprep.subr.mxu0 0.0
    %3398 = vmatpush1.xpose.msra.mxu0 0.0
    %3399 = vmatprep.subr.mxu0 0.0
    %3400 = vmatpush1.xpose.msra.mxu0 0.0
    %3401 = vmatprep.subr.mxu0 0.0
    %3402 = vmatpush1.xpose.msra.mxu0 0.0
    %3403 = vmatprep.subr.mxu0 0.0
    %3404 = vmatpush1.xpose.msra.mxu0 0.0
    %3405 = vmatprep.subr.mxu0 0.0
    %3406 = vmatpush1.xpose.msra.mxu0 0.0
    %3407 = vmatprep.subr.mxu0 0.0
    %3408 = vmatpush1.xpose.msra.mxu0 0.0
    %3409 = vmatprep.subr.mxu0 0.0
    %3410 = vmatpush1.xpose.msra.mxu0 0.0
    %3411 = vmatprep.subr.mxu0 0.0
    %3412 = vmatpush1.xpose.msra.mxu0 0.0
    %3413 = vmatprep.subr.mxu0 0.0
    %3414 = vmatpush1.xpose.msra.mxu0 0.0
    %3415 = vmatprep.subr.mxu0 0.0
    %3416 = vmatpush1.xpose.msra.mxu0 0.0
    %3417 = vmatprep.subr.mxu0 0.0
    %3418 = vmatpush1.xpose.msra.mxu0 0.0
    %3419 = vmatprep.subr.mxu0 0.0
    %3420 = vmatpush1.xpose.msra.mxu0 0.0
    %3421 = vmatprep.subr.mxu0 0.0
    %3422 = vmatpush1.xpose.msra.mxu0 0.0
    %3423 = vmatprep.subr.mxu0 0.0
    %3424 = vmatpush1.xpose.msra.mxu0 0.0
    %3425 = vmatprep.subr.mxu0 0.0
    %3426 = vmatpush1.xpose.msra.mxu0 0.0
    %3427 = vmatprep.subr.mxu0 0.0
    %3428 = vmatpush1.xpose.msra.mxu0 0.0
    %3429 = vmatprep.subr.mxu0 0.0
    %3430 = vmatpush1.xpose.msra.mxu0 0.0
    %3431 = vmatprep.subr.mxu0 0.0
    %3432 = vmatpush1.xpose.msra.mxu0 0.0
    %3433 = vmatprep.subr.mxu0 0.0
    %3434 = vmatpush1.xpose.msra.mxu0 0.0
    %3435 = vmatprep.subr.mxu0 0.0
    %3436 = vmatpush1.xpose.msra.mxu0 0.0
    %3437 = vmatprep.subr.mxu0 0.0
    %3438 = vmatpush1.xpose.msra.mxu0 0.0
    %3439 = vmatprep.subr.mxu0 0.0
    %3440 = vmatpush1.xpose.msra.mxu0 0.0
    %3441 = vmatprep.subr.mxu0 0.0
    %3442 = vmatpush1.xpose.msra.mxu0 0.0
    %3443 = vmatprep.subr.mxu0 0.0
    %3444 = vmatpush1.xpose.msra.mxu0 0.0
    %3445 = vmatprep.subr.mxu0 0.0
    %3446 = vmatpush1.xpose.msra.mxu0 0.0
    %3447 = vmatprep.subr.mxu0 0.0
    %3448 = vmatpush1.xpose.msra.mxu0 0.0
    %3449 = vmatprep.subr.mxu0 0.0
    %3450 = vmatpush1.xpose.msra.mxu0 0.0
    %3451 = vmatprep.subr.mxu0 0.0
    %3452 = vmatpush1.xpose.msra.mxu0 0.0
    %3453 = vmatprep.subr.mxu0 0.0
    %3454 = vmatpush1.xpose.msra.mxu0 0.0
    %3455 = vmatprep.mubr.f32.mxu0 0.0
    %3456 = vmatmul.mubr.f32.gmra.mrb[0].mxu0 %v3389
    %v3457 = vpop.f32.mrb[0].mxu0
    %v3458 = vadd.f32 0.0, %v3457
    %v3459 = vpop.f32.mrb[0].mxu0
    %3460 = vdwg.mxu0
    %3461 = vmatprep.subr.mxu0 0.0
    %3462 = vmatpush1.xpose.msra.mxu0 %v2408
    %3463 = vmatprep.subr.mxu0 0.0
    %3464 = vmatpush1.xpose.msra.mxu0 0.0
    %3465 = vmatprep.subr.mxu0 0.0
    %3466 = vmatpush1.xpose.msra.mxu0 0.0
    %3467 = vmatprep.subr.mxu0 0.0
    %3468 = vmatpush1.xpose.msra.mxu0 0.0
    %3469 = vmatprep.subr.mxu0 0.0
    %3470 = vmatpush1.xpose.msra.mxu0 0.0
    %3471 = vmatprep.subr.mxu0 0.0
    %3472 = vmatpush1.xpose.msra.mxu0 0.0
    %3473 = vmatprep.subr.mxu0 0.0
    %3474 = vmatpush1.xpose.msra.mxu0 0.0
    %3475 = vmatprep.subr.mxu0 0.0
    %3476 = vmatpush1.xpose.msra.mxu0 0.0
    %3477 = vmatprep.subr.mxu0 0.0
    %3478 = vmatpush1.xpose.msra.mxu0 0.0
    %3479 = vmatprep.subr.mxu0 0.0
    %3480 = vmatpush1.xpose.msra.mxu0 0.0
    %3481 = vmatprep.subr.mxu0 0.0
    %3482 = vmatpush1.xpose.msra.mxu0 0.0
    %3483 = vmatprep.subr.mxu0 0.0
    %3484 = vmatpush1.xpose.msra.mxu0 0.0
    %3485 = vmatprep.subr.mxu0 0.0
    %3486 = vmatpush1.xpose.msra.mxu0 0.0
    %3487 = vmatprep.subr.mxu0 0.0
    %3488 = vmatpush1.xpose.msra.mxu0 0.0
    %3489 = vmatprep.subr.mxu0 0.0
    %3490 = vmatpush1.xpose.msra.mxu0 0.0
    %3491 = vmatprep.subr.mxu0 0.0
    %3492 = vmatpush1.xpose.msra.mxu0 0.0
    %3493 = vmatprep.subr.mxu0 0.0
    %3494 = vmatpush1.xpose.msra.mxu0 0.0
    %3495 = vmatprep.subr.mxu0 0.0
    %3496 = vmatpush1.xpose.msra.mxu0 0.0
    %3497 = vmatprep.subr.mxu0 0.0
    %3498 = vmatpush1.xpose.msra.mxu0 0.0
    %3499 = vmatprep.subr.mxu0 0.0
    %3500 = vmatpush1.xpose.msra.mxu0 0.0
    %3501 = vmatprep.subr.mxu0 0.0
    %3502 = vmatpush1.xpose.msra.mxu0 0.0
    %3503 = vmatprep.subr.mxu0 0.0
    %3504 = vmatpush1.xpose.msra.mxu0 0.0
    %3505 = vmatprep.subr.mxu0 0.0
    %3506 = vmatpush1.xpose.msra.mxu0 0.0
    %3507 = vmatprep.subr.mxu0 0.0
    %3508 = vmatpush1.xpose.msra.mxu0 0.0
    %3509 = vmatprep.subr.mxu0 0.0
    %3510 = vmatpush1.xpose.msra.mxu0 0.0
    %3511 = vmatprep.subr.mxu0 0.0
    %3512 = vmatpush1.xpose.msra.mxu0 0.0
    %3513 = vmatprep.subr.mxu0 0.0
    %3514 = vmatpush1.xpose.msra.mxu0 0.0
    %3515 = vmatprep.subr.mxu0 0.0
    %3516 = vmatpush1.xpose.msra.mxu0 0.0
    %3517 = vmatprep.subr.mxu0 0.0
    %3518 = vmatpush1.xpose.msra.mxu0 0.0
    %3519 = vmatprep.subr.mxu0 0.0
    %3520 = vmatpush1.xpose.msra.mxu0 0.0
    %3521 = vmatprep.subr.mxu0 0.0
    %3522 = vmatpush1.xpose.msra.mxu0 0.0
    %3523 = vmatprep.subr.mxu0 0.0
    %3524 = vmatpush1.xpose.msra.mxu0 0.0
    %3525 = vmatprep.mubr.f32.mxu0 0.0
    %3526 = vmatmul.mubr.f32.gmra.mrb[0].mxu0 %v3390
    %v3527 = vpop.f32.mrb[0].mxu0
    %v3528 = vadd.f32 0.0, %v3527
    %v3529 = vpop.f32.mrb[0].mxu0
    %3530 = vdwg.mxu0
    %v3531 = vsel %vm651, %v3458, -inf
    %3532 = vmax.xlane.f32.xlu0 %v3531
    %v3533 = vpop.xlane.xlu0 %3532
    %v3534 = vsel %vm651, %v3528, -inf
    %3535 = vmax.xlane.f32.xlu0 %v3534
    %v3536 = vpop.xlane.xlu0 %3535
    %v3537 = vsub.f32 %v3458, %v3533
    %v3538 = vsub.f32 %v3528, %v3536
    %v3539 = vmul.f32 %v3537, 1.442695
    %v3540 = vpow.pop %v3539
    %v3541 = vmul.f32 %v3538, 1.442695
    %v3542 = vpow.pop %v3541
    %v3543 = vsel %vm651, %v3540, 0.0
    %3544 = vadd.xlane.f32.xlu0 %v3543
    %v3545 = vpop.xlane.xlu0 %3544
    %v3546 = vsel %vm651, %v3542, 0.0
    %3547 = vadd.xlane.f32.xlu0 %v3546
    %v3548 = vpop.xlane.xlu0 %3547
    %v3549 = vrcp.pop %v3545
    %v3550 = vmul.f32 %v3540, %v3549
    %v3551 = vrcp.pop %v3548
    %v3552 = vmul.f32 %v3542, %v3551
    %v3553 = vmul.f32 %v2445, %v191
    %v3554 = vmul.f32 %v2448, %v191
    %v3556 = vsel %vm651, %v3550, 0
    %3558 = vmatprep.subr.mxu0 0.0
    %3559 = vmatpush1.msra.mxu0 %v3553
    %3560 = vmatprep.subr.mxu0 0.0
    %3561 = vmatpush1.msra.mxu0 0.0
    %3562 = vmatprep.subr.mxu0 0.0
    %3563 = vmatpush1.msra.mxu0 0.0
    %3564 = vmatprep.subr.mxu0 0.0
    %3565 = vmatpush1.msra.mxu0 0.0
    %3566 = vmatprep.subr.mxu0 0.0
    %3567 = vmatpush1.msra.mxu0 0.0
    %3568 = vmatprep.subr.mxu0 0.0
    %3569 = vmatpush1.msra.mxu0 0.0
    %3570 = vmatprep.subr.mxu0 0.0
    %3571 = vmatpush1.msra.mxu0 0.0
    %3572 = vmatprep.subr.mxu0 0.0
    %3573 = vmatpush1.msra.mxu0 0.0
    %3574 = vmatprep.subr.mxu0 0.0
    %3575 = vmatpush1.msra.mxu0 0.0
    %3576 = vmatprep.subr.mxu0 0.0
    %3577 = vmatpush1.msra.mxu0 0.0
    %3578 = vmatprep.subr.mxu0 0.0
    %3579 = vmatpush1.msra.mxu0 0.0
    %3580 = vmatprep.subr.mxu0 0.0
    %3581 = vmatpush1.msra.mxu0 0.0
    %3582 = vmatprep.subr.mxu0 0.0
    %3583 = vmatpush1.msra.mxu0 0.0
    %3584 = vmatprep.subr.mxu0 0.0
    %3585 = vmatpush1.msra.mxu0 0.0
    %3586 = vmatprep.subr.mxu0 0.0
    %3587 = vmatpush1.msra.mxu0 0.0
    %3588 = vmatprep.subr.mxu0 0.0
    %3589 = vmatpush1.msra.mxu0 0.0
    %3590 = vmatprep.subr.mxu0 0.0
    %3591 = vmatpush1.msra.mxu0 0.0
    %3592 = vmatprep.subr.mxu0 0.0
    %3593 = vmatpush1.msra.mxu0 0.0
    %3594 = vmatprep.subr.mxu0 0.0
    %3595 = vmatpush1.msra.mxu0 0.0
    %3596 = vmatprep.subr.mxu0 0.0
    %3597 = vmatpush1.msra.mxu0 0.0
    %3598 = vmatprep.subr.mxu0 0.0
    %3599 = vmatpush1.msra.mxu0 0.0
    %3600 = vmatprep.subr.mxu0 0.0
    %3601 = vmatpush1.msra.mxu0 0.0
    %3602 = vmatprep.subr.mxu0 0.0
    %3603 = vmatpush1.msra.mxu0 0.0
    %3604 = vmatprep.subr.mxu0 0.0
    %3605 = vmatpush1.msra.mxu0 0.0
    %3606 = vmatprep.subr.mxu0 0.0
    %3607 = vmatpush1.msra.mxu0 0.0
    %3608 = vmatprep.subr.mxu0 0.0
    %3609 = vmatpush1.msra.mxu0 0.0
    %3610 = vmatprep.subr.mxu0 0.0
    %3611 = vmatpush1.msra.mxu0 0.0
    %3612 = vmatprep.subr.mxu0 0.0
    %3613 = vmatpush1.msra.mxu0 0.0
    %3614 = vmatprep.subr.mxu0 0.0
    %3615 = vmatpush1.msra.mxu0 0.0
    %3616 = vmatprep.subr.mxu0 0.0
    %3617 = vmatpush1.msra.mxu0 0.0
    %3618 = vmatprep.subr.mxu0 0.0
    %3619 = vmatpush1.msra.mxu0 0.0
    %3620 = vmatprep.subr.mxu0 0.0
    %3621 = vmatpush1.msra.mxu0 0.0
    %3622 = vmatprep.mubr.f32.mxu0 0.0
    %3623 = vmatmul.mubr.f32.gmra.mrb[0].mxu0 %v3556
    %v3624 = vpop.f32.mrb[0].mxu0
    %v3625 = vadd.f32 0.0, %v3624
    %v3626 = vpop.f32.mrb[0].mxu0
    %3627 = vdwg.mxu0
    %v3629 = vsel %vm651, %v3552, 0
    %3631 = vmatprep.subr.mxu0 0.0
    %3632 = vmatpush1.msra.mxu0 %v3554
    %3633 = vmatprep.subr.mxu0 0.0
    %3634 = vmatpush1.msra.mxu0 0.0
    %3635 = vmatprep.subr.mxu0 0.0
    %3636 = vmatpush1.msra.mxu0 0.0
    %3637 = vmatprep.subr.mxu0 0.0
    %3638 = vmatpush1.msra.mxu0 0.0
    %3639 = vmatprep.subr.mxu0 0.0
    %3640 = vmatpush1.msra.mxu0 0.0
    %3641 = vmatprep.subr.mxu0 0.0
    %3642 = vmatpush1.msra.mxu0 0.0
    %3643 = vmatprep.subr.mxu0 0.0
    %3644 = vmatpush1.msra.mxu0 0.0
    %3645 = vmatprep.subr.mxu0 0.0
    %3646 = vmatpush1.msra.mxu0 0.0
    %3647 = vmatprep.subr.mxu0 0.0
    %3648 = vmatpush1.msra.mxu0 0.0
    %3649 = vmatprep.subr.mxu0 0.0
    %3650 = vmatpush1.msra.mxu0 0.0
    %3651 = vmatprep.subr.mxu0 0.0
    %3652 = vmatpush1.msra.mxu0 0.0
    %3653 = vmatprep.subr.mxu0 0.0
    %3654 = vmatpush1.msra.mxu0 0.0
    %3655 = vmatprep.subr.mxu0 0.0
    %3656 = vmatpush1.msra.mxu0 0.0
    %3657 = vmatprep.subr.mxu0 0.0
    %3658 = vmatpush1.msra.mxu0 0.0
    %3659 = vmatprep.subr.mxu0 0.0
    %3660 = vmatpush1.msra.mxu0 0.0
    %3661 = vmatprep.subr.mxu0 0.0
    %3662 = vmatpush1.msra.mxu0 0.0
    %3663 = vmatprep.subr.mxu0 0.0
    %3664 = vmatpush1.msra.mxu0 0.0
    %3665 = vmatprep.subr.mxu0 0.0
    %3666 = vmatpush1.msra.mxu0 0.0
    %3667 = vmatprep.subr.mxu0 0.0
    %3668 = vmatpush1.msra.mxu0 0.0
    %3669 = vmatprep.subr.mxu0 0.0
    %3670 = vmatpush1.msra.mxu0 0.0
    %3671 = vmatprep.subr.mxu0 0.0
    %3672 = vmatpush1.msra.mxu0 0.0
    %3673 = vmatprep.subr.mxu0 0.0
    %3674 = vmatpush1.msra.mxu0 0.0
    %3675 = vmatprep.subr.mxu0 0.0
    %3676 = vmatpush1.msra.mxu0 0.0
    %3677 = vmatprep.subr.mxu0 0.0
    %3678 = vmatpush1.msra.mxu0 0.0
    %3679 = vmatprep.subr.mxu0 0.0
    %3680 = vmatpush1.msra.mxu0 0.0
    %3681 = vmatprep.subr.mxu0 0.0
    %3682 = vmatpush1.msra.mxu0 0.0
    %3683 = vmatprep.subr.mxu0 0.0
    %3684 = vmatpush1.msra.mxu0 0.0
    %3685 = vmatprep.subr.mxu0 0.0
    %3686 = vmatpush1.msra.mxu0 0.0
    %3687 = vmatprep.subr.mxu0 0.0
    %3688 = vmatpush1.msra.mxu0 0.0
    %3689 = vmatprep.subr.mxu0 0.0
    %3690 = vmatpush1.msra.mxu0 0.0
    %3691 = vmatprep.subr.mxu0 0.0
    %3692 = vmatpush1.msra.mxu0 0.0
    %3693 = vmatprep.subr.mxu0 0.0
    %3694 = vmatpush1.msra.mxu0 0.0
    %3695 = vmatprep.mubr.f32.mxu0 0.0
    %3696 = vmatmul.mubr.f32.gmra.mrb[0].mxu0 %v3629
    %v3697 = vpop.f32.mrb[0].mxu0
    %v3698 = vadd.f32 0.0, %v3697
    %v3699 = vpop.f32.mrb[0].mxu0
    %3700 = vdwg.mxu0
    %v3701 = vadd.f32 %v3387, %v3625
    %v3702 = vadd.f32 %v3388, %v3698
    %v3703 = vpack.c.bf16 %v3702, %v3701
    %v3705 = vlaneseq
    %v3706 = vshrl.u32 %v3705, 7
    %v3707 = vsub.s32 0, %v3706
    %v3708 = vrot.slane %v2215, %v3707
    %v3726 = vunpack.c.l.b16 %v2165
    %v3727 = vunpack.c.l.b16 %v2166
    %v3728 = vunpack.c.l.b16 %v2167
    %v3729 = vunpack.c.l.b16 %v2168
    %v3730 = vunpack.c.l.b16 %v2169
    %v3731 = vunpack.c.l.b16 %v2170
    %v3732 = vunpack.c.l.b16 %v2171
    %v3733 = vunpack.c.l.b16 %v2172
    %v3734 = vunpack.c.l.b16 %v2173
    %v3735 = vunpack.c.l.b16 %v2174
    %v3736 = vunpack.c.l.b16 %v2175
    %v3737 = vunpack.c.l.b16 %v2176
    %v3738 = vunpack.c.l.b16 %v2177
    %v3739 = vunpack.c.l.b16 %v2178
    %v3740 = vunpack.c.l.b16 %v2179
    %v3741 = vunpack.c.l.b16 %v2180
    %v3742 = vpack.c.b16 %v3727, %v3726
    %v3743 = vpack.c.b16 %v3729, %v3728
    %v3744 = vpack.c.b16 %v3731, %v3730
    %v3745 = vpack.c.b16 %v3733, %v3732
    %v3746 = vpack.c.b16 %v3735, %v3734
    %v3747 = vpack.c.b16 %v3737, %v3736
    %v3748 = vpack.c.b16 %v3739, %v3738
    %v3749 = vpack.c.b16 %v3741, %v3740
    %3758 = vmatprep.subr.bf16.mxu0 0
    %3759 = vmatpush1.bf16.msra.mxu0 %v3742
    %3760 = vmatprep.subr.bf16.mxu0 0
    %3761 = vmatpush1.bf16.msra.mxu0 %v3743
    %3762 = vmatprep.subr.bf16.mxu0 0
    %3763 = vmatpush1.bf16.msra.mxu0 %v3744
    %3764 = vmatprep.subr.bf16.mxu0 0
    %3765 = vmatpush1.bf16.msra.mxu0 %v3745
    %3766 = vmatprep.subr.bf16.mxu0 0
    %3767 = vmatpush1.bf16.msra.mxu0 %v3746
    %3768 = vmatprep.subr.bf16.mxu0 0
    %3769 = vmatpush1.bf16.msra.mxu0 %v3747
    %3770 = vmatprep.subr.bf16.mxu0 0
    %3771 = vmatpush1.bf16.msra.mxu0 %v3748
    %3772 = vmatprep.subr.bf16.mxu0 0
    %3773 = vmatpush1.bf16.msra.mxu0 %v3749
    %3774 = vmatprep.subr.bf16.mxu0 0
    %3775 = vmatpush1.bf16.msra.mxu0 0
    %3776 = vmatprep.subr.bf16.mxu0 0
    %3777 = vmatpush1.bf16.msra.mxu0 0
    %3778 = vmatprep.subr.bf16.mxu0 0
    %3779 = vmatpush1.bf16.msra.mxu0 0
    %3780 = vmatprep.subr.bf16.mxu0 0
    %3781 = vmatpush1.bf16.msra.mxu0 0
    %3782 = vmatprep.subr.bf16.mxu0 0
    %3783 = vmatpush1.bf16.msra.mxu0 0
    %3784 = vmatprep.subr.bf16.mxu0 0
    %3785 = vmatpush1.bf16.msra.mxu0 0
    %3786 = vmatprep.subr.bf16.mxu0 0
    %3787 = vmatpush1.bf16.msra.mxu0 0
    %3788 = vmatprep.subr.bf16.mxu0 0
    %3789 = vmatpush1.bf16.msra.mxu0 0
    %3790 = vmatprep.mubr.bf16.mxu0 0
    %3791 = vmatmul.mubr.bf16.gmra.mrb[0].mxu0 %v3703
    %v3792 = vpop.f32.mrb[0].mxu0
    %v3793 = vadd.f32 %v3708, %v3792
    %v3794 = vpop.f32.mrb[0].mxu0
    %v3795 = vpop.f32.mrb[0].mxu0
    %v3796 = vadd.f32 %v3708, %v3795
    %v3797 = vpop.f32.mrb[0].mxu0
    %3798 = vdwg.mxu0
    %v3799 = vadd.f32 %v2130, %v3793
    %v3800 = vadd.f32 %v2131, %v3796
    %3801 = vadd.xlane.f32.xlu0 %v3799
    %v3802 = vpop.xlane.xlu0 %3801
    %3803 = vadd.xlane.f32.xlu0 %v3800
    %v3804 = vpop.xlane.xlu0 %3803
    %v3805 = vmul.f32 %v3802, 0.0078125
    %v3806 = vmul.f32 %v3804, 0.0078125
    %v3807 = vsub.f32 %v3799, %v3805
    %v3808 = vsub.f32 %v3800, %v3806
    %v3809 = vmul.f32 %v3807, %v3807
    %v3810 = vmul.f32 %v3808, %v3808
    %3811 = vadd.xlane.f32.xlu0 %v3809
    %v3812 = vpop.xlane.xlu0 %3811
    %3813 = vadd.xlane.f32.xlu0 %v3810
    %v3814 = vpop.xlane.xlu0 %3813
    %v3815 = vmul.f32 %v3812, 0.0078125
    %v3816 = vmul.f32 %v3814, 0.0078125
    %v3817 = vadd.f32 %v3815, 1e-05
    %v3818 = vadd.f32 %v3816, 1e-05
    %v3819 = vrsqrt.pop %v3817
    %v3820 = vrsqrt.pop %v3818
    %v3821 = vmul.f32 %v3807, %v3819
    %v3822 = vmul.f32 %v3808, %v3820
    %v3824 = vlaneseq
    %v3825 = vshrl.u32 %v3824, 7
    %v3826 = vsub.s32 0, %v3825
    %v3827 = vrot.slane %v2218, %v3826
    %v3829 = vmul.f32 %v3821, %v3827
    %v3830 = vmul.f32 %v3822, %v3827
    %v3832 = vlaneseq
    %v3833 = vshrl.u32 %v3832, 7
    %v3834 = vsub.s32 0, %v3833
    %v3835 = vrot.slane %v2219, %v3834
    %v3837 = vadd.f32 %v3829, %v3835
    %v3838 = vadd.f32 %v3830, %v3835
    %v3839 = vpack.c.bf16 %v3838, %v3837
    %v3841 = vlaneseq
    %v3842 = vshrl.u32 %v3841, 7
    %v3843 = vsub.s32 0, %v3842
    %v3844 = vrot.slane %v2216, %v3843
    %v3862 = vunpack.c.l.b16 %v2181
    %v3863 = vunpack.c.l.b16 %v2182
    %v3864 = vunpack.c.l.b16 %v2183
    %v3865 = vunpack.c.l.b16 %v2184
    %v3866 = vunpack.c.l.b16 %v2185
    %v3867 = vunpack.c.l.b16 %v2186
    %v3868 = vunpack.c.l.b16 %v2187
    %v3869 = vunpack.c.l.b16 %v2188
    %v3870 = vunpack.c.l.b16 %v2189
    %v3871 = vunpack.c.l.b16 %v2190
    %v3872 = vunpack.c.l.b16 %v2191
    %v3873 = vunpack.c.l.b16 %v2192
    %v3874 = vunpack.c.l.b16 %v2193
    %v3875 = vunpack.c.l.b16 %v2194
    %v3876 = vunpack.c.l.b16 %v2195
    %v3877 = vunpack.c.l.b16 %v2196
    %v3878 = vpack.c.b16 %v3863, %v3862
    %v3879 = vpack.c.b16 %v3865, %v3864
    %v3880 = vpack.c.b16 %v3867, %v3866
    %v3881 = vpack.c.b16 %v3869, %v3868
    %v3882 = vpack.c.b16 %v3871, %v3870
    %v3883 = vpack.c.b16 %v3873, %v3872
    %v3884 = vpack.c.b16 %v3875, %v3874
    %v3885 = vpack.c.b16 %v3877, %v3876
    %3894 = vmatprep.subr.bf16.mxu0 0
    %3895 = vmatpush1.bf16.msra.mxu0 %v3878
    %3896 = vmatprep.subr.bf16.mxu0 0
    %3897 = vmatpush1.bf16.msra.mxu0 %v3879
    %3898 = vmatprep.subr.bf16.mxu0 0
    %3899 = vmatpush1.bf16.msra.mxu0 %v3880
    %3900 = vmatprep.subr.bf16.mxu0 0
    %3901 = vmatpush1.bf16.msra.mxu0 %v3881
    %3902 = vmatprep.subr.bf16.mxu0 0
    %3903 = vmatpush1.bf16.msra.mxu0 %v3882
    %3904 = vmatprep.subr.bf16.mxu0 0
    %3905 = vmatpush1.bf16.msra.mxu0 %v3883
    %3906 = vmatprep.subr.bf16.mxu0 0
    %3907 = vmatpush1.bf16.msra.mxu0 %v3884
    %3908 = vmatprep.subr.bf16.mxu0 0
    %3909 = vmatpush1.bf16.msra.mxu0 %v3885
    %3910 = vmatprep.subr.bf16.mxu0 0
    %3911 = vmatpush1.bf16.msra.mxu0 0
    %3912 = vmatprep.subr.bf16.mxu0 0
    %3913 = vmatpush1.bf16.msra.mxu0 0
    %3914 = vmatprep.subr.bf16.mxu0 0
    %3915 = vmatpush1.bf16.msra.mxu0 0
    %3916 = vmatprep.subr.bf16.mxu0 0
    %3917 = vmatpush1.bf16.msra.mxu0 0
    %3918 = vmatprep.subr.bf16.mxu0 0
    %3919 = vmatpush1.bf16.msra.mxu0 0
    %3920 = vmatprep.subr.bf16.mxu0 0
    %3921 = vmatpush1.bf16.msra.mxu0 0
    %3922 = vmatprep.subr.bf16.mxu0 0
    %3923 = vmatpush1.bf16.msra.mxu0 0
    %3924 = vmatprep.subr.bf16.mxu0 0
    %3925 = vmatpush1.bf16.msra.mxu0 0
    %3926 = vmatprep.mubr.bf16.mxu0 0
    %3927 = vmatmul.mubr.bf16.gmra.mrb[0].mxu0 %v3839
    %v3928 = vpop.f32.mrb[0].mxu0
    %v3929 = vadd.f32 %v3844, %v3928
    %v3930 = vpop.f32.mrb[0].mxu0
    %v3931 = vpop.f32.mrb[0].mxu0
    %v3932 = vadd.f32 %v3844, %v3931
    %v3933 = vpop.f32.mrb[0].mxu0
    %3934 = vdwg.mxu0
    %v3935 = vmax.f32 %v3929, 0.0
    %v3936 = vmax.f32 %v3932, 0.0
    %v3937 = vpack.c.bf16 %v3936, %v3935
    %v3939 = vlaneseq
    %v3940 = vshrl.u32 %v3939, 7
    %v3941 = vsub.s32 0, %v3940
    %v3942 = vrot.slane %v2217, %v3941
    %v3960 = vunpack.c.l.b16 %v2197
    %v3961 = vunpack.c.l.b16 %v2198
    %v3962 = vunpack.c.l.b16 %v2199
    %v3963 = vunpack.c.l.b16 %v2200
    %v3964 = vunpack.c.l.b16 %v2201
    %v3965 = vunpack.c.l.b16 %v2202
    %v3966 = vunpack.c.l.b16 %v2203
    %v3967 = vunpack.c.l.b16 %v2204
    %v3968 = vunpack.c.l.b16 %v2205
    %v3969 = vunpack.c.l.b16 %v2206
    %v3970 = vunpack.c.l.b16 %v2207
    %v3971 = vunpack.c.l.b16 %v2208
    %v3972 = vunpack.c.l.b16 %v2209
    %v3973 = vunpack.c.l.b16 %v2210
    %v3974 = vunpack.c.l.b16 %v2211
    %v3975 = vunpack.c.l.b16 %v2212
    %v3976 = vpack.c.b16 %v3961, %v3960
    %v3977 = vpack.c.b16 %v3963, %v3962
    %v3978 = vpack.c.b16 %v3965, %v3964
    %v3979 = vpack.c.b16 %v3967, %v3966
    %v3980 = vpack.c.b16 %v3969, %v3968
    %v3981 = vpack.c.b16 %v3971, %v3970
    %v3982 = vpack.c.b16 %v3973, %v3972
    %v3983 = vpack.c.b16 %v3975, %v3974
    %3992 = vmatprep.subr.bf16.mxu0 0
    %3993 = vmatpush1.bf16.msra.mxu0 %v3976
    %3994 = vmatprep.subr.bf16.mxu0 0
    %3995 = vmatpush1.bf16.msra.mxu0 %v3977
    %3996 = vmatprep.subr.bf16.mxu0 0
    %3997 = vmatpush1.bf16.msra.mxu0 %v3978
    %3998 = vmatprep.subr.bf16.mxu0 0
    %3999 = vmatpush1.bf16.msra.mxu0 %v3979
    %4000 = vmatprep.subr.bf16.mxu0 0
    %4001 = vmatpush1.bf16.msra.mxu0 %v3980
    %4002 = vmatprep.subr.bf16.mxu0 0
    %4003 = vmatpush1.bf16.msra.mxu0 %v3981
    %4004 = vmatprep.subr.bf16.mxu0 0
    %4005 = vmatpush1.bf16.msra.mxu0 %v3982
    %4006 = vmatprep.subr.bf16.mxu0 0
    %4007 = vmatpush1.bf16.msra.mxu0 %v3983
    %4008 = vmatprep.subr.bf16.mxu0 0
    %4009 = vmatpush1.bf16.msra.mxu0 0
    %4010 = vmatprep.subr.bf16.mxu0 0
    %4011 = vmatpush1.bf16.msra.mxu0 0
    %4012 = vmatprep.subr.bf16.mxu0 0
    %4013 = vmatpush1.bf16.msra.mxu0 0
    %4014 = vmatprep.subr.bf16.mxu0 0
    %4015 = vmatpush1.bf16.msra.mxu0 0
    %4016 = vmatprep.subr.bf16.mxu0 0
    %4017 = vmatpush1.bf16.msra.mxu0 0
    %4018 = vmatprep.subr.bf16.mxu0 0
    %4019 = vmatpush1.bf16.msra.mxu0 0
    %4020 = vmatprep.subr.bf16.mxu0 0
    %4021 = vmatpush1.bf16.msra.mxu0 0
    %4022 = vmatprep.subr.bf16.mxu0 0
    %4023 = vmatpush1.bf16.msra.mxu0 0
    %4024 = vmatprep.mubr.bf16.mxu0 0
    %4025 = vmatmul.mubr.bf16.gmra.mrb[0].mxu0 %v3937
    %v4026 = vpop.f32.mrb[0].mxu0
    %v4027 = vadd.f32 %v3942, %v4026
    %v4028 = vpop.f32.mrb[0].mxu0
    %v4029 = vpop.f32.mrb[0].mxu0
    %v4030 = vadd.f32 %v3942, %v4029
    %v4031 = vpop.f32.mrb[0].mxu0
    %4032 = vdwg.mxu0
    %v4033 = vadd.f32 %v3837, %v4027
    %v4034 = vadd.f32 %v3838, %v4030
    %4035 = vadd.xlane.f32.xlu0 %v4033
    %v4036 = vpop.xlane.xlu0 %4035
    %4037 = vadd.xlane.f32.xlu0 %v4034
    %v4038 = vpop.xlane.xlu0 %4037
    %v4039 = vmul.f32 %v4036, 0.0078125
    %v4040 = vmul.f32 %v4038, 0.0078125
    %v4041 = vsub.f32 %v4033, %v4039
    %v4042 = vsub.f32 %v4034, %v4040
    %v4043 = vmul.f32 %v4041, %v4041
    %v4044 = vmul.f32 %v4042, %v4042
    %4045 = vadd.xlane.f32.xlu0 %v4043
    %v4046 = vpop.xlane.xlu0 %4045
    %4047 = vadd.xlane.f32.xlu0 %v4044
    %v4048 = vpop.xlane.xlu0 %4047
    %v4049 = vmul.f32 %v4046, 0.0078125
    %v4050 = vmul.f32 %v4048, 0.0078125
    %v4051 = vadd.f32 %v4049, 1e-05
    %v4052 = vadd.f32 %v4050, 1e-05
    %v4053 = vrsqrt.pop %v4051
    %v4054 = vrsqrt.pop %v4052
    %v4055 = vmul.f32 %v4041, %v4053
    %v4056 = vmul.f32 %v4042, %v4054
    %v4058 = vlaneseq
    %v4059 = vshrl.u32 %v4058, 7
    %v4060 = vsub.s32 0, %v4059
    %v4061 = vrot.slane %v2220, %v4060
    %v4063 = vmul.f32 %v4055, %v4061
    %v4064 = vmul.f32 %v4056, %v4061
    %v4066 = vlaneseq
    %v4067 = vshrl.u32 %v4066, 7
    %v4068 = vsub.s32 0, %v4067
    %v4069 = vrot.slane %v2221, %v4068
    %v4071 = vadd.f32 %v4063, %v4069
    %v4072 = vadd.f32 %v4064, %v4069
    %v4073 = vld [vmem:[%s4] sm:$0x1]
    %v4074 = vld [vmem:[%s4 + $0x1] sm:$0x1]
    %v4075 = vld [vmem:[%s4 + $0x2] sm:$0x1]
    %v4076 = vld [vmem:[%s4 + $0x3] sm:$0x1]
    %v4077 = vld [vmem:[%s4 + $0x4] sm:$0x1]
    %4078 = vadd.xlane.f32.xlu0 %v4071
    %v4079 = vpop.xlane.xlu0 %4078
    %4080 = vadd.xlane.f32.xlu0 %v4072
    %v4081 = vpop.xlane.xlu0 %4080
    %v4082 = vmul.f32 %v4079, 0.0078125
    %v4083 = vmul.f32 %v4081, 0.0078125
    %v4084 = vsub.f32 %v4071, %v4082
    %v4085 = vsub.f32 %v4072, %v4083
    %v4086 = vmul.f32 %v4084, %v4084
    %v4087 = vmul.f32 %v4085, %v4085
    %4088 = vadd.xlane.f32.xlu0 %v4086
    %v4089 = vpop.xlane.xlu0 %4088
    %4090 = vadd.xlane.f32.xlu0 %v4087
    %v4091 = vpop.xlane.xlu0 %4090
    %v4092 = vmul.f32 %v4089, 0.0078125
    %v4093 = vmul.f32 %v4091, 0.0078125
    %v4094 = vadd.f32 %v4092, 1e-05
    %v4095 = vadd.f32 %v4093, 1e-05
    %v4096 = vrsqrt.pop %v4094
    %v4097 = vrsqrt.pop %v4095
    %v4098 = vmul.f32 %v4084, %v4096
    %v4099 = vmul.f32 %v4085, %v4097
    %v4101 = vlaneseq
    %v4102 = vshrl.u32 %v4101, 7
    %v4103 = vsub.s32 0, %v4102
    %v4104 = vrot.slane %v4073, %v4103
    %v4106 = vmul.f32 %v4098, %v4104
    %v4107 = vmul.f32 %v4099, %v4104
    %v4109 = vlaneseq
    %v4110 = vshrl.u32 %v4109, 7
    %v4111 = vsub.s32 0, %v4110
    %v4112 = vrot.slane %v4074, %v4111
    %v4114 = vadd.f32 %v4106, %v4112
    %v4115 = vadd.f32 %v4107, %v4112
    %v4116 = vrot.slane %v4114, 4
    %v4117 = vadd.f32 %v4114, %v4116
    %v4118 = vrot.slane %v4117, 2
    %v4119 = vadd.f32 %v4117, %v4118
    %v4120 = vrot.slane %v4119, 1
    %v4121 = vadd.f32 %v4119, %v4120
    %v4122 = vrot.slane %v4115, 4
    %v4123 = vadd.f32 %v4115, %v4122
    %v4124 = vrot.slane %v4123, 2
    %v4125 = vadd.f32 %v4123, %v4124
    %v4126 = vrot.slane %v4125, 1
    %v4127 = vadd.f32 %v4125, %v4126
    %v4128 = vmul.f32 %v4121, 0.125
    %v4129 = vmul.f32 %v4127, 0.125
    %vm4132 = vcmask 1041409
    %v4133 = vsel %vm4132, %v4129, %v4128
    %vm4135 = vcmask 1041408
    %v4136 = vsel %vm4135, %v4133, 0.0
    %4137 = vadd.xlane.f32.xlu0 %v4136
    %v4138 = vpop.xlane.xlu0 %4137
    %v4139 = vmul.f32 %v4138, 0.0078125
    %v4141 = vrot.slane %v4139, 1
    %v4144 = vsub.f32 %v4128, %v4139
    %v4145 = vsub.f32 %v4129, %v4141
    %v4146 = vmul.f32 %v4144, %v4144
    %v4147 = vmul.f32 %v4145, %v4145
    %v4150 = vrot.slane %v4147, 7
    %v4151 = vsel %vm4132, %v4150, %v4146
    %v4153 = vsel %vm4135, %v4151, 0.0
    %4154 = vadd.xlane.f32.xlu0 %v4153
    %v4155 = vpop.xlane.xlu0 %4154
    %v4156 = vmul.f32 %v4155, 0.0078125
    %v4157 = vadd.f32 %v4156, 1e-05
    %v4158 = vrsqrt.pop %v4157
    %v4160 = vrot.slane %v4158, 1
    %v4163 = vmul.f32 %v4144, %v4158
    %v4164 = vmul.f32 %v4145, %v4160
    %v4166 = vlaneseq
    %v4167 = vshrl.u32 %v4166, 7
    %v4168 = vsub.s32 0, %v4167
    %v4169 = vrot.slane %v4075, %v4168
    %v4171 = vmul.f32 %v4163, %v4169
    %v4172 = vmul.f32 %v4164, %v4169
    %v4174 = vlaneseq
    %v4175 = vshrl.u32 %v4174, 7
    %v4176 = vsub.s32 0, %v4175
    %v4177 = vrot.slane %v4076, %v4176
    %v4179 = vadd.f32 %v4171, %v4177
    %v4180 = vadd.f32 %v4172, %v4177
    %v4181 = vpack.c.bf16 %v4179, %v4179
    %v4182 = vpack.c.bf16 %v4180, %v4180
    %s4183 = scalar_lea.vmem [#allocation5], 64
    %v4184 = vld [vmem:[%s4183] sm:$0xf]
    %v4185 = vld [vmem:[%s4183 + $0x4] sm:$0xf]
    %v4186 = vld [vmem:[%s4183 + $0x8] sm:$0xf]
    %v4187 = vld [vmem:[%s4183 + $0xc] sm:$0xf]
    %v4188 = vld [vmem:[%s4183 + $0x10] sm:$0xf]
    %v4189 = vld [vmem:[%s4183 + $0x14] sm:$0xf]
    %v4190 = vld [vmem:[%s4183 + $0x18] sm:$0xf]
    %v4191 = vld [vmem:[%s4183 + $0x1c] sm:$0xf]
    %v4192 = vld [vmem:[%s4183 + $0x20] sm:$0xf]
    %v4193 = vld [vmem:[%s4183 + $0x24] sm:$0xf]
    %v4194 = vld [vmem:[%s4183 + $0x28] sm:$0xf]
    %v4195 = vld [vmem:[%s4183 + $0x2c] sm:$0xf]
    %v4196 = vld [vmem:[%s4183 + $0x30] sm:$0xf]
    %v4197 = vld [vmem:[%s4183 + $0x34] sm:$0xf]
    %v4198 = vld [vmem:[%s4183 + $0x38] sm:$0xf]
    %v4199 = vld [vmem:[%s4183 + $0x3c] sm:$0xf]
    %v4201 = vlaneseq
    %v4202 = vshrl.u32 %v4201, 7
    %v4203 = vsub.s32 0, %v4202
    %v4204 = vrot.slane %v4077, %v4203
    %v4208 = vunpack.c.l.b16 %v4181
    %v4209 = vunpack.c.l.b16 %v4182
    %v4210 = vrot.slane %v4209, 7
    %v4211 = vsel %vm4132, %v4210, %v4208
    %v4212 = vpack.c.b16 %v4211, %v4211
    %v4230 = vunpack.c.l.b16 %v4184
    %v4231 = vunpack.c.l.b16 %v4185
    %v4232 = vunpack.c.l.b16 %v4186
    %v4233 = vunpack.c.l.b16 %v4187
    %v4234 = vunpack.c.l.b16 %v4188
    %v4235 = vunpack.c.l.b16 %v4189
    %v4236 = vunpack.c.l.b16 %v4190
    %v4237 = vunpack.c.l.b16 %v4191
    %v4238 = vunpack.c.l.b16 %v4192
    %v4239 = vunpack.c.l.b16 %v4193
    %v4240 = vunpack.c.l.b16 %v4194
    %v4241 = vunpack.c.l.b16 %v4195
    %v4242 = vunpack.c.l.b16 %v4196
    %v4243 = vunpack.c.l.b16 %v4197
    %v4244 = vunpack.c.l.b16 %v4198
    %v4245 = vunpack.c.l.b16 %v4199
    %v4246 = vpack.c.b16 %v4231, %v4230
    %v4247 = vpack.c.b16 %v4233, %v4232
    %v4248 = vpack.c.b16 %v4235, %v4234
    %v4249 = vpack.c.b16 %v4237, %v4236
    %v4250 = vpack.c.b16 %v4239, %v4238
    %v4251 = vpack.c.b16 %v4241, %v4240
    %v4252 = vpack.c.b16 %v4243, %v4242
    %v4253 = vpack.c.b16 %v4245, %v4244
    %4262 = vmatprep.subr.bf16.mxu0 0
    %4263 = vmatpush1.bf16.msra.mxu0 %v4246
    %4264 = vmatprep.subr.bf16.mxu0 0
    %4265 = vmatpush1.bf16.msra.mxu0 %v4247
    %4266 = vmatprep.subr.bf16.mxu0 0
    %4267 = vmatpush1.bf16.msra.mxu0 %v4248
    %4268 = vmatprep.subr.bf16.mxu0 0
    %4269 = vmatpush1.bf16.msra.mxu0 %v4249
    %4270 = vmatprep.subr.bf16.mxu0 0
    %4271 = vmatpush1.bf16.msra.mxu0 %v4250
    %4272 = vmatprep.subr.bf16.mxu0 0
    %4273 = vmatpush1.bf16.msra.mxu0 %v4251
    %4274 = vmatprep.subr.bf16.mxu0 0
    %4275 = vmatpush1.bf16.msra.mxu0 %v4252
    %4276 = vmatprep.subr.bf16.mxu0 0
    %4277 = vmatpush1.bf16.msra.mxu0 %v4253
    %4278 = vmatprep.subr.bf16.mxu0 0
    %4279 = vmatpush1.bf16.msra.mxu0 0
    %4280 = vmatprep.subr.bf16.mxu0 0
    %4281 = vmatpush1.bf16.msra.mxu0 0
    %4282 = vmatprep.subr.bf16.mxu0 0
    %4283 = vmatpush1.bf16.msra.mxu0 0
    %4284 = vmatprep.subr.bf16.mxu0 0
    %4285 = vmatpush1.bf16.msra.mxu0 0
    %4286 = vmatprep.subr.bf16.mxu0 0
    %4287 = vmatpush1.bf16.msra.mxu0 0
    %4288 = vmatprep.subr.bf16.mxu0 0
    %4289 = vmatpush1.bf16.msra.mxu0 0
    %4290 = vmatprep.subr.bf16.mxu0 0
    %4291 = vmatpush1.bf16.msra.mxu0 0
    %4292 = vmatprep.subr.bf16.mxu0 0
    %4293 = vmatpush1.bf16.msra.mxu0 0
    %4294 = vmatprep.mubr.bf16.mxu0 0
    %4295 = vmatmul.mubr.bf16.gmra.mrb[0].mxu0 %v4212
    %v4296 = vpop.f32.mrb[0].mxu0
    %v4297 = vadd.f32 %v4204, %v4296
    %v4298 = vpop.f32.mrb[0].mxu0
    %v4299 = vpop.f32.mrb[0].mxu0
    %v4300 = vpop.f32.mrb[0].mxu0
    %4301 = vdwg.mxu0
    %v4302 = vtanh.pop %v4297
    %4303 = vst [vmem:[#allocation7] sm:$0x3] %v4302
    // Predicated region
    $region30: #{transformer_syn_forward.1} parent=1 // pred_check
      _
    $region31: #{transformer_syn_forward.1} parent=1 // pred_check_branch
      %4305 = sbr.rel (0) target = $region33
    $region32: #{transformer_syn_forward.1} parent=1 // pred_region
      %s4307 = ssub.s32 32, 32
      %4308 = vsyncadd [#allocation4], %s4307
      %s4310 = sshll.u32 [#allocation7], 4
      %s4311 = int_to_ptr.vmem [resolvable:$true] %s4310
      %4313 = dma.vmem_to_hbm [thread:$0]  %s4311, 32, %s5, [#allocation4]
    $region33: #{transformer_syn_forward.1} parent=1 // pred_fallthru
      _
    // Predicated region
    $region34: #{transformer_syn_forward.1} parent=1 // pred_check
      _
    $region35: #{transformer_syn_forward.1} parent=1 // pred_check_branch
      %4315 = sbr.rel (0) target = $region37
    $region36: #{transformer_syn_forward.1} parent=1 // pred_region
      %4316 = dma.done [#allocation4], 32
    $region37: #{transformer_syn_forward.1} parent=1 // pred_fallthru
      _
    %4317 = vsyncpa [#allocation3], 1
    %4318 = vsyncpa [#allocation6], 1
    %4319 = vsyncpa [#allocation4], 1

</llo_original>
